<compile_context>
chip_gen: v5e
topology: v5e:2x2
jax: 0.10.0
libtpu: 0.0.40
codegen_flags: <defaults>
</compile_context>

<pallas_src>
import functools
import math

import jax
import jax.numpy as jnp
from jax.experimental import pallas as pl
from jax.experimental.pallas import tpu as pltpu


def _vmem_capacity_bytes():
    """Physical VMEM per TensorCore (64 MiB on v7x, 128 MiB on v5e/v6e)."""
    try:
        info = pltpu.get_tpu_info()
        cap = getattr(info, "vmem_capacity_bytes", None)
        if cap:
            return int(cap)
    except Exception:
        pass
    return 64 * 1024 * 1024  # conservative (v7x-sized) fallback


def _pick_tile(total, target):
    """Largest tile <= target that divides `total` and is a multiple of 8
    (TPU sublane granularity); falls back to the full extent."""
    if total <= target:
        return total
    for cand in range(min(target, total), 7, -1):
        if total % cand == 0 and cand % 8 == 0:
            return cand
    return total


# ----------------------------------------------------------------------------
# Fully fused layer kernel: NodeEdgeBlock + residual/LN/FFN/LN for X, E and y.
# grid = (bs, n // tq); the q axis is the accumulation ("arbitrary") axis.
# ----------------------------------------------------------------------------
def xey_layer_kernel(
    # data inputs
    x_ref, e_ref, y_ref, xm_ref,
    # NodeEdgeBlock weights (fused where possible)
    w_qkv, b_qkv, w_eme, b_eme, w_y4, b_y4,
    w_xo, b_xo, w_eo, b_eo, w_yy, b_yy,
    w_xy, b_xy, w_ey, b_ey, w_ya, b_ya, w_yb, b_yb,
    # FFN + LayerNorm weights for the X / E / y paths
    wx1, bx1, wx2, bx2, lnx,
    we1, be1, we2, be2, lne,
    wy1, by1, wy2, by2, lny,
    # outputs
    xout_ref, eout_ref, yout_ref,
    # scratch
    q_scr, k_scr, v_scr, y4_scr, es1m, es2m, emin, emax, ecnt,
    *, n, tq, dx, de, dy, n_head, eps,
):
    f32 = jnp.float32
    qi = pl.program_id(1)
    nq = pl.num_programs(1)
    inv_sqrt_df = f32(1.0 / math.sqrt(dx // n_head))

    E = e_ref[0]        # (tq*n, de)  original edge rows for this query tile
    y = y_ref[0]        # (1, dy)     original global features
    xm = xm_ref[0]      # (n, 1)      full node mask

    def mm(a, w_ref, b_ref):
        # TODO(synk): cast operands to bf16 (f32 accumulation) on v6e/v7x for
        # ~2x MXU throughput; kept f32 for parity with the PyTorch reference.
        return jnp.dot(a, w_ref[...], preferred_element_type=f32) + b_ref[...]

    def layer_norm(v, g, b):
        mu = jnp.mean(v, axis=-1, keepdims=True)
        var = jnp.mean((v - mu) ** 2, axis=-1, keepdims=True)
        return (v - mu) * jax.lax.rsqrt(var + eps) * g + b

    # --- once per batch element: QKV projection, FiLM cache, accum reset -----
    @pl.when(qi == 0)
    def _init():
        Xf = x_ref[0]                                   # (n, dx)
        qkv = mm(Xf, w_qkv, b_qkv) * xm                 # (n, 3dx), masked
        q_scr[...] = qkv[:, 0:dx] * inv_sqrt_df         # fold 1/sqrt(df) into Q
        k_scr[...] = qkv[:, dx:2 * dx]
        v_scr[...] = qkv[:, 2 * dx:3 * dx]
        y4_scr[...] = mm(y, w_y4, b_y4)                 # FiLM (1, 4dx) cache
        zero_de = jnp.zeros((1, de), f32)
        es1m[...] = zero_de
        es2m[...] = zero_de
        emin[...] = jnp.full((1, de), jnp.inf, f32)
        emax[...] = jnp.full((1, de), -jnp.inf, f32)
        ecnt[...] = jnp.zeros((1, 1), f32)

    q0 = qi * tq
    if tq % 8 == 0:
        q0 = pl.multiple_of(q0, 8)
    Q = q_scr[pl.ds(q0, tq), :]           # (tq, dx) pre-scaled & masked
    K = k_scr[...]                        # (n, dx)
    V = v_scr[...]                        # (n, dx)
    Xq = x_ref[0, pl.ds(q0, tq), :]       # (tq, dx) original node rows
    xm_q = xm_ref[0, pl.ds(q0, tq), :]    # (tq, 1)  query-tile node mask

    # pairwise edge mask for this tile (built in-kernel, kept flat)
    ee3 = xm_q[:, None, :] * xm[None, :, :]          # (tq, n, 1)
    ee_flat = ee3.reshape(tq * n, 1)                 # (tq*n, 1)
    im_flat = 1.0 - ee_flat

    # --- attention logits modulated by edge features --------------------------
    Y = Q[:, None, :] * K[None, :, :]                            # (tq, n, dx)
    EM3 = (mm(E, w_eme, b_eme) * ee_flat).reshape(tq, n, 2 * dx)
    Y = Y * (EM3[:, :, 0:dx] + 1.0) + EM3[:, :, dx:2 * dx]

    # --- FiLM modulation by global feature y (cached) --------------------------
    y4 = y4_scr[...]
    ye_add, ye_mul = y4[:, 0:dx], y4[:, dx:2 * dx]
    yx_add, yx_mul = y4[:, 2 * dx:3 * dx], y4[:, 3 * dx:4 * dx]

    # --- edge update + fused residual/LN/FFN/LN -> final E output -------------
    Yf = Y.reshape(tq * n, dx)
    newE = ye_add + (ye_mul + 1.0) * Yf
    newE = mm(newE, w_eo, b_eo) * ee_flat                        # (tq*n, de)

    ge1, bte1 = lne[:, 0:de], lne[:, de:2 * de]
    ge2, bte2 = lne[:, 2 * de:3 * de], lne[:, 3 * de:4 * de]
    Eh = layer_norm(E + newE, ge1, bte1)
    Eff = mm(jnp.maximum(mm(Eh, we1, be1), 0.0), we2, be2)
    eout_ref[0] = layer_norm(Eh + Eff, ge2, bte2)

    # --- masked per-channel softmax over keys, weighted V, node update --------
    # TODO(synk): PyTorch masked_softmax returns x unchanged when the global
    # mask is all-zero; here we assume >=1 valid node per batch element.
    key_mask = xm[None, :, :] > 0.0
    Ym = jnp.where(key_mask, Y, -jnp.inf)
    Ymax = jnp.max(Ym, axis=1, keepdims=True)
    p = jnp.exp(Ym - Ymax)
    attn = p * pl.reciprocal(jnp.sum(p, axis=1, keepdims=True), approx=True)
    wV = jnp.sum(attn * V[None, :, :], axis=1)                   # (tq, dx)

    newX = yx_add + (yx_mul + 1.0) * wV
    newX = mm(newX, w_xo, b_xo) * xm_q                           # (tq, dx)

    gx1, btx1 = lnx[:, 0:dx], lnx[:, dx:2 * dx]
    gx2, btx2 = lnx[:, 2 * dx:3 * dx], lnx[:, 3 * dx:4 * dx]
    Xh = layer_norm(Xq + newX, gx1, btx1)
    Xff = mm(jnp.maximum(mm(Xh, wx1, bx1), 0.0), wx2, bx2)
    xout_ref[0] = layer_norm(Xh + Xff, gx2, btx2)

    # --- accumulate masked Etoy pooling stats (single streaming pass over E) --
    Emk = E * ee_flat
    es1m[...] += jnp.sum(Emk, axis=0, keepdims=True)
    es2m[...] += jnp.sum(E * Emk, axis=0, keepdims=True)
    emin[...] = jnp.minimum(
        emin[...], jnp.min(E + 1e5 * im_flat, axis=0, keepdims=True))
    emax[...] = jnp.maximum(
        emax[...], jnp.max(E - 1e5 * im_flat, axis=0, keepdims=True))
    ecnt[...] += jnp.sum(ee_flat, keepdims=True)

    # --- finalize: global-feature update + fused y residual/LN/FFN/LN ---------
    @pl.when(qi == nq - 1)
    def _finalize():
        Xf = x_ref[0]                                            # (n, dx)
        y_upd = mm(y, w_yy, b_yy)                                # (1, dy)

        # Xtoy: masked mean / min / max / (biased) variance pooling over nodes
        cnt = jnp.sum(xm, axis=0, keepdims=True)                 # (1, 1)
        inv_cnt = pl.reciprocal(cnt, approx=False)
        ixm = 1.0 - xm
        m = jnp.sum(Xf * xm, axis=0, keepdims=True) * inv_cnt
        mi = jnp.min(Xf + 1e5 * ixm, axis=0, keepdims=True)
        ma = jnp.max(Xf - 1e5 * ixm, axis=0, keepdims=True)
        sd = jnp.sum(((Xf - m) ** 2) * xm, axis=0, keepdims=True) * inv_cnt
        x_y = mm(jnp.concatenate([m, mi, ma, sd], axis=1), w_xy, b_xy)

        # Etoy from running masked statistics.  Exact algebraic expansion:
        # sum((E-m)^2 * mask)/cnt = (s2m - 2*m*s1m)/cnt + m^2.
        inv_ce = pl.reciprocal(ecnt[...], approx=False)          # (1, 1)
        mE = es1m[...] * inv_ce
        sdE = (es2m[...] - 2.0 * mE * es1m[...]) * inv_ce + mE * mE
        e_y = mm(jnp.concatenate([mE, emin[...], emax[...], sdE], axis=1),
                 w_ey, b_ey)

        new_y = y_upd + x_y + e_y
        new_y = mm(jnp.maximum(mm(new_y, w_ya, b_ya), 0.0), w_yb, b_yb)

        gy1, bty1 = lny[:, 0:dy], lny[:, dy:2 * dy]
        gy2, bty2 = lny[:, 2 * dy:3 * dy], lny[:, 3 * dy:4 * dy]
        yh = layer_norm(y + new_y, gy1, bty1)
        yff = mm(jnp.maximum(mm(yh, wy1, by1), 0.0), wy2, by2)
        yout_ref[0] = layer_norm(yh + yff, gy2, bty2)


# ----------------------------------------------------------------------------
# Wrapper
# ----------------------------------------------------------------------------
def xey_transformer_layer(params, X, E, y, node_mask, *, n_head, eps=1e-5):
    bs, n, dx = X.shape
    de = E.shape[-1]
    dy = y.shape[-1]
    assert dx % n_head == 0

    X = X.astype(jnp.float32)
    E2d = E.astype(jnp.float32).reshape(bs, n * n, de)
    y3 = y.astype(jnp.float32).reshape(bs, 1, dy)
    xm = node_mask.astype(jnp.float32).reshape(bs, n, 1)

    # Per-generation tiling: half-sized tiles / VMEM cap on v7x (64 MiB per TC),
    # full-sized on v5e/v6e (128 MiB).
    cap = _vmem_capacity_bytes()
    vmem_limit = min(int(cap * 0.8), 110 * 1024 * 1024)
    tq_target = 16 if cap <= 64 * 1024 * 1024 else 64
    tq = _pick_tile(n, tq_target)
    nq = n // tq

    # --- fuse small projection weights (bigger MXU ops, fewer operands) ------
    aw = params["attn"]
    w_qkv = jnp.concatenate([aw["q"][0], aw["k"][0], aw["v"][0]], axis=1)
    b_qkv = jnp.concatenate([aw["q"][1], aw["k"][1], aw["v"][1]], axis=1)
    w_eme = jnp.concatenate([aw["e_mul"][0], aw["e_add"][0]], axis=1)
    b_eme = jnp.concatenate([aw["e_mul"][1], aw["e_add"][1]], axis=1)
    w_y4 = jnp.concatenate([aw["y_e_add"][0], aw["y_e_mul"][0],
                            aw["y_x_add"][0], aw["y_x_mul"][0]], axis=1)
    b_y4 = jnp.concatenate([aw["y_e_add"][1], aw["y_e_mul"][1],
                            aw["y_x_add"][1], aw["y_x_mul"][1]], axis=1)

    def _ffn_args(pset):
        (w1, b1), (w2, b2), (g1, bt1), (g2, bt2) = pset
        return [w1, b1, w2, b2, jnp.concatenate([g1, bt1, g2, bt2], axis=1)]

    weight_args = [
        w_qkv, b_qkv, w_eme, b_eme, w_y4, b_y4,
        aw["x_out"][0], aw["x_out"][1],
        aw["e_out"][0], aw["e_out"][1],
        aw["y_y"][0], aw["y_y"][1],
        aw["x_y"][0], aw["x_y"][1],
        aw["e_y"][0], aw["e_y"][1],
        aw["y_out1"][0], aw["y_out1"][1],
        aw["y_out2"][0], aw["y_out2"][1],
    ] + _ffn_args(params["ffX"]) + _ffn_args(params["ffE"]) + _ffn_args(params["ffy"])

    def _wspec(shape):
        nd = len(shape)
        return pl.BlockSpec(shape, lambda b, q, _nd=nd: (0,) * _nd)

    kernel = functools.partial(
        xey_layer_kernel, n=n, tq=tq, dx=dx, de=de, dy=dy, n_head=n_head, eps=eps)

    in_specs = [
        pl.BlockSpec((1, n, dx), lambda b, q: (b, 0, 0)),       # X (full)
        pl.BlockSpec((1, tq * n, de), lambda b, q: (b, q, 0)),  # E (q-tile)
        pl.BlockSpec((1, 1, dy), lambda b, q: (b, 0, 0)),       # y
        pl.BlockSpec((1, n, 1), lambda b, q: (b, 0, 0)),        # node mask
    ] + [_wspec(w.shape) for w in weight_args]

    out_specs = (
        pl.BlockSpec((1, tq, dx), lambda b, q: (b, q, 0)),      # final X
        pl.BlockSpec((1, tq * n, de), lambda b, q: (b, q, 0)),  # final E
        pl.BlockSpec((1, 1, dy), lambda b, q: (b, 0, 0)),       # final y
    )
    out_shape = (
        jax.ShapeDtypeStruct((bs, n, dx), jnp.float32),
        jax.ShapeDtypeStruct((bs, n * n, de), jnp.float32),
        jax.ShapeDtypeStruct((bs, 1, dy), jnp.float32),
    )
    scratch_shapes = [
        pltpu.VMEM((n, dx), jnp.float32),       # Q (scaled, masked)
        pltpu.VMEM((n, dx), jnp.float32),       # K
        pltpu.VMEM((n, dx), jnp.float32),       # V
        pltpu.VMEM((1, 4 * dx), jnp.float32),   # FiLM y-projection cache
        pltpu.VMEM((1, de), jnp.float32),       # sum(E * mask)
        pltpu.VMEM((1, de), jnp.float32),       # sum(E^2 * mask)
        pltpu.VMEM((1, de), jnp.float32),       # running min
        pltpu.VMEM((1, de), jnp.float32),       # running max
        pltpu.VMEM((1, 1), jnp.float32),        # mask count
    ]

    Xo, Eo, yo = pl.pallas_call(
        kernel,
        grid=(bs, nq),
        in_specs=in_specs,
        out_specs=out_specs,
        out_shape=out_shape,
        scratch_shapes=scratch_shapes,
        compiler_params=pltpu.CompilerParams(
            dimension_semantics=("parallel", "arbitrary"),
            vmem_limit_bytes=vmem_limit),
    )(X, E2d, y3, xm, *weight_args)

    return Xo, Eo.reshape(bs, n, n, de), yo.reshape(bs, dy)


# ----------------------------------------------------------------------------
# Deterministic parameter init (synthetic; matches module __init__ shapes)
# ----------------------------------------------------------------------------
def _make_linear(key, din, dout):
    k1, k2 = jax.random.split(key)
    bound = 1.0 / math.sqrt(din)
    w = jax.random.uniform(k1, (din, dout), jnp.float32, -bound, bound)
    b = jax.random.uniform(k2, (1, dout), jnp.float32, -bound, bound)
    return w, b


def init_params(key, dx, de, dy, dim_ffX, dim_ffE, dim_ffy):
    keys = iter(jax.random.split(key, 32))
    lin = lambda din, dout: _make_linear(next(keys), din, dout)
    attn = {
        "q": lin(dx, dx), "k": lin(dx, dx), "v": lin(dx, dx),
        "e_mul": lin(de, dx), "e_add": lin(de, dx),
        "y_e_add": lin(dy, dx), "y_e_mul": lin(dy, dx),
        "y_x_add": lin(dy, dx), "y_x_mul": lin(dy, dx),
        "x_out": lin(dx, dx), "e_out": lin(dx, de),
        "y_y": lin(dy, dy), "x_y": lin(4 * dx, dy), "e_y": lin(4 * de, dy),
        "y_out1": lin(dy, dy), "y_out2": lin(dy, dy),
    }
    ln = lambda d: (jnp.ones((1, d), jnp.float32), jnp.zeros((1, d), jnp.float32))
    ffX = (lin(dx, dim_ffX), lin(dim_ffX, dx), ln(dx), ln(dx))
    ffE = (lin(de, dim_ffE), lin(dim_ffE, de), ln(de), ln(de))
    ffy = (lin(dy, dim_ffy), lin(dim_ffy, dy), ln(dy), ln(dy))
    return {"attn": attn, "ffX": ffX, "ffE": ffE, "ffy": ffy}


# ----------------------------------------------------------------------------
if __name__ == "__main__":
    bs, n = 2, 8
    dx, de, dy, n_head = 16, 8, 8, 4
    dim_ffX, dim_ffE, dim_ffy = 32, 16, 32

    root = jax.random.PRNGKey(0)
    kp, kx, ke, ky = jax.random.split(root, 4)

    params = init_params(kp, dx, de, dy, dim_ffX, dim_ffE, dim_ffy)

    node_mask = jnp.array([[1, 1, 1, 1, 1, 1, 1, 1],
                           [1, 1, 1, 1, 1, 0, 0, 0]], dtype=jnp.float32)
    xmask = node_mask[..., None]                               # (bs, n, 1)
    emask = xmask[:, :, None, :] * xmask[:, None, :, :]        # (bs, n, n, 1)

    X = jax.random.normal(kx, (bs, n, dx), jnp.float32) * xmask
    E = jax.random.normal(ke, (bs, n, n, de), jnp.float32) * emask
    y = jax.random.normal(ky, (bs, dy), jnp.float32)

    Xo, Eo, yo = xey_transformer_layer(params, X, E, y, node_mask, n_head=n_head)
    jax.block_until_ready((Xo, Eo, yo))

    assert Xo.shape == (bs, n, dx) and Eo.shape == (bs, n, n, de) and yo.shape == (bs, dy)
    assert bool(jnp.isfinite(Xo).all()) and bool(jnp.isfinite(Eo).all()) and bool(jnp.isfinite(yo).all())
    print("KERNEL_OK")
</pallas_src>

<mosaic_0001>
module attributes {stable_mosaic.version = 11 : i64} {
  func.func @xey_layer_kernel(%arg0: i32, %arg1: i32, %arg2: memref<1x8x16xf32, #tpu.memory_space<vmem>>, %arg3: memref<1x64x8xf32, #tpu.memory_space<vmem>>, %arg4: memref<1x1x8xf32, #tpu.memory_space<vmem>>, %arg5: memref<1x8x1xf32, #tpu.memory_space<vmem>>, %arg6: memref<16x48xf32, #tpu.memory_space<vmem>>, %arg7: memref<1x48xf32, #tpu.memory_space<vmem>>, %arg8: memref<8x32xf32, #tpu.memory_space<vmem>>, %arg9: memref<1x32xf32, #tpu.memory_space<vmem>>, %arg10: memref<8x64xf32, #tpu.memory_space<vmem>>, %arg11: memref<1x64xf32, #tpu.memory_space<vmem>>, %arg12: memref<16x16xf32, #tpu.memory_space<vmem>>, %arg13: memref<1x16xf32, #tpu.memory_space<vmem>>, %arg14: memref<16x8xf32, #tpu.memory_space<vmem>>, %arg15: memref<1x8xf32, #tpu.memory_space<vmem>>, %arg16: memref<8x8xf32, #tpu.memory_space<vmem>>, %arg17: memref<1x8xf32, #tpu.memory_space<vmem>>, %arg18: memref<64x8xf32, #tpu.memory_space<vmem>>, %arg19: memref<1x8xf32, #tpu.memory_space<vmem>>, %arg20: memref<32x8xf32, #tpu.memory_space<vmem>>, %arg21: memref<1x8xf32, #tpu.memory_space<vmem>>, %arg22: memref<8x8xf32, #tpu.memory_space<vmem>>, %arg23: memref<1x8xf32, #tpu.memory_space<vmem>>, %arg24: memref<8x8xf32, #tpu.memory_space<vmem>>, %arg25: memref<1x8xf32, #tpu.memory_space<vmem>>, %arg26: memref<16x32xf32, #tpu.memory_space<vmem>>, %arg27: memref<1x32xf32, #tpu.memory_space<vmem>>, %arg28: memref<32x16xf32, #tpu.memory_space<vmem>>, %arg29: memref<1x16xf32, #tpu.memory_space<vmem>>, %arg30: memref<1x64xf32, #tpu.memory_space<vmem>>, %arg31: memref<8x16xf32, #tpu.memory_space<vmem>>, %arg32: memref<1x16xf32, #tpu.memory_space<vmem>>, %arg33: memref<16x8xf32, #tpu.memory_space<vmem>>, %arg34: memref<1x8xf32, #tpu.memory_space<vmem>>, %arg35: memref<1x32xf32, #tpu.memory_space<vmem>>, %arg36: memref<8x32xf32, #tpu.memory_space<vmem>>, %arg37: memref<1x32xf32, #tpu.memory_space<vmem>>, %arg38: memref<32x8xf32, #tpu.memory_space<vmem>>, %arg39: memref<1x8xf32, #tpu.memory_space<vmem>>, %arg40: memref<1x32xf32, #tpu.memory_space<vmem>>, %arg41: memref<1x8x16xf32, #tpu.memory_space<vmem>>, %arg42: memref<1x64x8xf32, #tpu.memory_space<vmem>>, %arg43: memref<1x1x8xf32, #tpu.memory_space<vmem>>, %arg44: memref<8x16xf32, #tpu.memory_space<vmem>>, %arg45: memref<8x16xf32, #tpu.memory_space<vmem>>, %arg46: memref<8x16xf32, #tpu.memory_space<vmem>>, %arg47: memref<1x64xf32, #tpu.memory_space<vmem>>, %arg48: memref<1x8xf32, #tpu.memory_space<vmem>>, %arg49: memref<1x8xf32, #tpu.memory_space<vmem>>, %arg50: memref<1x8xf32, #tpu.memory_space<vmem>>, %arg51: memref<1x8xf32, #tpu.memory_space<vmem>>, %arg52: memref<1x1xf32, #tpu.memory_space<vmem>>) attributes {dimension_semantics = [#tpu.dimension_semantics<parallel>, #tpu.dimension_semantics<arbitrary>], iteration_bounds = array<i64: 2, 1>, scalar_prefetch = 0 : i64, scratch_operands = 9 : i64, tpu.core_type = #tpu.core_type<tc>, window_params = [{transform_indices = @transform_0, window_bounds = array<i64: 1, 8, 16>}, {transform_indices = @transform_1, window_bounds = array<i64: 1, 64, 8>}, {transform_indices = @transform_2, window_bounds = array<i64: 1, 1, 8>}, {transform_indices = @transform_3, window_bounds = array<i64: 1, 8, 1>}, {pipeline_mode = #tpu.pipeline_mode<synchronous>, transform_indices = @transform_4, window_bounds = array<i64: 16, 48>}, {pipeline_mode = #tpu.pipeline_mode<synchronous>, transform_indices = @transform_5, window_bounds = array<i64: 1, 48>}, {pipeline_mode = #tpu.pipeline_mode<synchronous>, transform_indices = @transform_6, window_bounds = array<i64: 8, 32>}, {pipeline_mode = #tpu.pipeline_mode<synchronous>, transform_indices = @transform_7, window_bounds = array<i64: 1, 32>}, {pipeline_mode = #tpu.pipeline_mode<synchronous>, transform_indices = @transform_8, window_bounds = array<i64: 8, 64>}, {pipeline_mode = #tpu.pipeline_mode<synchronous>, transform_indices = @transform_9, window_bounds = array<i64: 1, 64>}, {pipeline_mode = #tpu.pipeline_mode<synchronous>, transform_indices = @transform_10, window_bounds = array<i64: 16, 16>}, {pipeline_mode = #tpu.pipeline_mode<synchronous>, transform_indices = @transform_11, window_bounds = array<i64: 1, 16>}, {pipeline_mode = #tpu.pipeline_mode<synchronous>, transform_indices = @transform_12, window_bounds = array<i64: 16, 8>}, {pipeline_mode = #tpu.pipeline_mode<synchronous>, transform_indices = @transform_13, window_bounds = array<i64: 1, 8>}, {pipeline_mode = #tpu.pipeline_mode<synchronous>, transform_indices = @transform_14, window_bounds = array<i64: 8, 8>}, {pipeline_mode = #tpu.pipeline_mode<synchronous>, transform_indices = @transform_15, window_bounds = array<i64: 1, 8>}, {pipeline_mode = #tpu.pipeline_mode<synchronous>, transform_indices = @transform_16, window_bounds = array<i64: 64, 8>}, {pipeline_mode = #tpu.pipeline_mode<synchronous>, transform_indices = @transform_17, window_bounds = array<i64: 1, 8>}, {pipeline_mode = #tpu.pipeline_mode<synchronous>, transform_indices = @transform_18, window_bounds = array<i64: 32, 8>}, {pipeline_mode = #tpu.pipeline_mode<synchronous>, transform_indices = @transform_19, window_bounds = array<i64: 1, 8>}, {pipeline_mode = #tpu.pipeline_mode<synchronous>, transform_indices = @transform_20, window_bounds = array<i64: 8, 8>}, {pipeline_mode = #tpu.pipeline_mode<synchronous>, transform_indices = @transform_21, window_bounds = array<i64: 1, 8>}, {pipeline_mode = #tpu.pipeline_mode<synchronous>, transform_indices = @transform_22, window_bounds = array<i64: 8, 8>}, {pipeline_mode = #tpu.pipeline_mode<synchronous>, transform_indices = @transform_23, window_bounds = array<i64: 1, 8>}, {pipeline_mode = #tpu.pipeline_mode<synchronous>, transform_indices = @transform_24, window_bounds = array<i64: 16, 32>}, {pipeline_mode = #tpu.pipeline_mode<synchronous>, transform_indices = @transform_25, window_bounds = array<i64: 1, 32>}, {pipeline_mode = #tpu.pipeline_mode<synchronous>, transform_indices = @transform_26, window_bounds = array<i64: 32, 16>}, {pipeline_mode = #tpu.pipeline_mode<synchronous>, transform_indices = @transform_27, window_bounds = array<i64: 1, 16>}, {pipeline_mode = #tpu.pipeline_mode<synchronous>, transform_indices = @transform_28, window_bounds = array<i64: 1, 64>}, {pipeline_mode = #tpu.pipeline_mode<synchronous>, transform_indices = @transform_29, window_bounds = array<i64: 8, 16>}, {pipeline_mode = #tpu.pipeline_mode<synchronous>, transform_indices = @transform_30, window_bounds = array<i64: 1, 16>}, {pipeline_mode = #tpu.pipeline_mode<synchronous>, transform_indices = @transform_31, window_bounds = array<i64: 16, 8>}, {pipeline_mode = #tpu.pipeline_mode<synchronous>, transform_indices = @transform_32, window_bounds = array<i64: 1, 8>}, {pipeline_mode = #tpu.pipeline_mode<synchronous>, transform_indices = @transform_33, window_bounds = array<i64: 1, 32>}, {pipeline_mode = #tpu.pipeline_mode<synchronous>, transform_indices = @transform_34, window_bounds = array<i64: 8, 32>}, {pipeline_mode = #tpu.pipeline_mode<synchronous>, transform_indices = @transform_35, window_bounds = array<i64: 1, 32>}, {pipeline_mode = #tpu.pipeline_mode<synchronous>, transform_indices = @transform_36, window_bounds = array<i64: 32, 8>}, {pipeline_mode = #tpu.pipeline_mode<synchronous>, transform_indices = @transform_37, window_bounds = array<i64: 1, 8>}, {pipeline_mode = #tpu.pipeline_mode<synchronous>, transform_indices = @transform_38, window_bounds = array<i64: 1, 32>}, {transform_indices = @transform_39, window_bounds = array<i64: 1, 8, 16>}, {transform_indices = @transform_40, window_bounds = array<i64: 1, 64, 8>}, {transform_indices = @transform_41, window_bounds = array<i64: 1, 1, 8>}]} {
    %c0 = arith.constant 0 : index
    %c0_0 = arith.constant 0 : index
    %c0_1 = arith.constant 0 : index
    %0 = vector.load %arg3[%c0, %c0_0, %c0_1] : memref<1x64x8xf32, #tpu.memory_space<vmem>>, vector<1x64x8xf32>
    %1 = vector.shape_cast %0 : vector<1x64x8xf32> to vector<64x8xf32>
    %c0_2 = arith.constant 0 : index
    %c0_3 = arith.constant 0 : index
    %c0_4 = arith.constant 0 : index
    %2 = vector.load %arg4[%c0_2, %c0_3, %c0_4] : memref<1x1x8xf32, #tpu.memory_space<vmem>>, vector<1x1x8xf32>
    %3 = vector.shape_cast %2 : vector<1x1x8xf32> to vector<1x8xf32>
    %c0_5 = arith.constant 0 : index
    %c0_6 = arith.constant 0 : index
    %c0_7 = arith.constant 0 : index
    %4 = vector.load %arg5[%c0_5, %c0_6, %c0_7] : memref<1x8x1xf32, #tpu.memory_space<vmem>>, vector<1x8x1xf32>
    %5 = vector.shape_cast %4 : vector<1x8x1xf32> to vector<8x1xf32>
    %c0_i32 = arith.constant 0 : i32
    %6 = arith.cmpi eq, %arg1, %c0_i32 : i32
    %7 = arith.extui %6 : i1 to i32
    %cst = arith.constant 5.000000e-01 : f32
    %c0_i32_8 = arith.constant 0 : i32
    %8 = arith.cmpi ne, %7, %c0_i32_8 : i32
    scf.if %8 {
      %c0_132 = arith.constant 0 : index
      %c0_133 = arith.constant 0 : index
      %c0_134 = arith.constant 0 : index
      %273 = vector.load %arg2[%c0_132, %c0_133, %c0_134] : memref<1x8x16xf32, #tpu.memory_space<vmem>>, vector<1x8x16xf32>
      %274 = vector.shape_cast %273 : vector<1x8x16xf32> to vector<8x16xf32>
      %c0_135 = arith.constant 0 : index
      %c0_136 = arith.constant 0 : index
      %275 = vector.load %arg6[%c0_135, %c0_136] : memref<16x48xf32, #tpu.memory_space<vmem>>, vector<16x48xf32>
      %cst_137 = arith.constant dense<0.000000e+00> : vector<8x48xf32>
      %276 = tpu.matmul %274, %275, %cst_137 {dimension_numbers = #tpu.dot_dimension_numbers<[1], [0], [0], [1], [0, 0, 1, 1], [], []>} : vector<8x16xf32>, vector<16x48xf32>, vector<8x48xf32> -> vector<8x48xf32>
      %c0_138 = arith.constant 0 : index
      %c0_139 = arith.constant 0 : index
      %277 = vector.load %arg7[%c0_138, %c0_139] : memref<1x48xf32, #tpu.memory_space<vmem>>, vector<1x48xf32>
      %278 = vector.broadcast %277 : vector<1x48xf32> to vector<8x48xf32>
      %279 = arith.addf %276, %278 : vector<8x48xf32>
      %280 = vector.broadcast %5 : vector<8x1xf32> to vector<8x48xf32>
      %281 = arith.mulf %279, %280 : vector<8x48xf32>
      %282 = vector.extract_strided_slice %281 {offsets = [0, 0], sizes = [8, 16], strides = [1, 1]} : vector<8x48xf32> to vector<8x16xf32>
      %283 = vector.broadcast %cst : f32 to vector<8x16xf32>
      %284 = arith.mulf %282, %283 : vector<8x16xf32>
      %c0_140 = arith.constant 0 : index
      %c0_141 = arith.constant 0 : index
      %285 = vector.load %arg44[%c0_140, %c0_141] : memref<8x16xf32, #tpu.memory_space<vmem>>, vector<8x16xf32>
      tpu.vector_store %arg44[%c0_140, %c0_141], %284 {strides = array<i32>} : memref<8x16xf32, #tpu.memory_space<vmem>>, vector<8x16xf32>,
      %286 = vector.extract_strided_slice %281 {offsets = [0, 16], sizes = [8, 16], strides = [1, 1]} : vector<8x48xf32> to vector<8x16xf32>
      %c0_142 = arith.constant 0 : index
      %c0_143 = arith.constant 0 : index
      %287 = vector.load %arg45[%c0_142, %c0_143] : memref<8x16xf32, #tpu.memory_space<vmem>>, vector<8x16xf32>
      tpu.vector_store %arg45[%c0_142, %c0_143], %286 {strides = array<i32>} : memref<8x16xf32, #tpu.memory_space<vmem>>, vector<8x16xf32>,
      %288 = vector.extract_strided_slice %281 {offsets = [0, 32], sizes = [8, 16], strides = [1, 1]} : vector<8x48xf32> to vector<8x16xf32>
      %c0_144 = arith.constant 0 : index
      %c0_145 = arith.constant 0 : index
      %289 = vector.load %arg46[%c0_144, %c0_145] : memref<8x16xf32, #tpu.memory_space<vmem>>, vector<8x16xf32>
      tpu.vector_store %arg46[%c0_144, %c0_145], %288 {strides = array<i32>} : memref<8x16xf32, #tpu.memory_space<vmem>>, vector<8x16xf32>,
      %c0_146 = arith.constant 0 : index
      %c0_147 = arith.constant 0 : index
      %290 = vector.load %arg10[%c0_146, %c0_147] : memref<8x64xf32, #tpu.memory_space<vmem>>, vector<8x64xf32>
      %cst_148 = arith.constant dense<0.000000e+00> : vector<1x64xf32>
      %291 = tpu.matmul %3, %290, %cst_148 {dimension_numbers = #tpu.dot_dimension_numbers<[1], [0], [0], [1], [0, 0, 1, 1], [], []>} : vector<1x8xf32>, vector<8x64xf32>, vector<1x64xf32> -> vector<1x64xf32>
      %c0_149 = arith.constant 0 : index
      %c0_150 = arith.constant 0 : index
      %292 = vector.load %arg11[%c0_149, %c0_150] : memref<1x64xf32, #tpu.memory_space<vmem>>, vector<1x64xf32>
      %293 = arith.addf %291, %292 : vector<1x64xf32>
      %c0_151 = arith.constant 0 : index
      %c0_152 = arith.constant 0 : index
      %294 = vector.load %arg47[%c0_151, %c0_152] : memref<1x64xf32, #tpu.memory_space<vmem>>, vector<1x64xf32>
      tpu.vector_store %arg47[%c0_151, %c0_152], %293 {strides = array<i32>} : memref<1x64xf32, #tpu.memory_space<vmem>>, vector<1x64xf32>,
      %cst_153 = arith.constant 0.000000e+00 : f32
      %295 = vector.broadcast %cst_153 : f32 to vector<1x8xf32>
      %c0_154 = arith.constant 0 : index
      %c0_155 = arith.constant 0 : index
      %296 = vector.load %arg48[%c0_154, %c0_155] : memref<1x8xf32, #tpu.memory_space<vmem>>, vector<1x8xf32>
      tpu.vector_store %arg48[%c0_154, %c0_155], %295 {strides = array<i32>} : memref<1x8xf32, #tpu.memory_space<vmem>>, vector<1x8xf32>,
      %c0_156 = arith.constant 0 : index
      %c0_157 = arith.constant 0 : index
      %297 = vector.load %arg49[%c0_156, %c0_157] : memref<1x8xf32, #tpu.memory_space<vmem>>, vector<1x8xf32>
      tpu.vector_store %arg49[%c0_156, %c0_157], %295 {strides = array<i32>} : memref<1x8xf32, #tpu.memory_space<vmem>>, vector<1x8xf32>,
      %cst_158 = arith.constant 0x7F800000 : f32
      %298 = vector.broadcast %cst_158 : f32 to vector<1x8xf32>
      %c0_159 = arith.constant 0 : index
      %c0_160 = arith.constant 0 : index
      %299 = vector.load %arg50[%c0_159, %c0_160] : memref<1x8xf32, #tpu.memory_space<vmem>>, vector<1x8xf32>
      tpu.vector_store %arg50[%c0_159, %c0_160], %298 {strides = array<i32>} : memref<1x8xf32, #tpu.memory_space<vmem>>, vector<1x8xf32>,
      %cst_161 = arith.constant 0xFF800000 : f32
      %300 = vector.broadcast %cst_161 : f32 to vector<1x8xf32>
      %c0_162 = arith.constant 0 : index
      %c0_163 = arith.constant 0 : index
      %301 = vector.load %arg51[%c0_162, %c0_163] : memref<1x8xf32, #tpu.memory_space<vmem>>, vector<1x8xf32>
      tpu.vector_store %arg51[%c0_162, %c0_163], %300 {strides = array<i32>} : memref<1x8xf32, #tpu.memory_space<vmem>>, vector<1x8xf32>,
      %cst_164 = arith.constant 0.000000e+00 : f32
      %302 = vector.broadcast %cst_164 : f32 to vector<1x1xf32>
      %c0_165 = arith.constant 0 : index
      %c0_166 = arith.constant 0 : index
      %303 = vector.load %arg52[%c0_165, %c0_166] : memref<1x1xf32, #tpu.memory_space<vmem>>, vector<1x1xf32>
      tpu.vector_store %arg52[%c0_165, %c0_166], %302 {strides = array<i32>} : memref<1x1xf32, #tpu.memory_space<vmem>>, vector<1x1xf32>,
    } else {
    }
    %c8_i32 = arith.constant 8 : i32
    %9 = arith.muli %arg1, %c8_i32 : i32
    %10 = tpu.assume_multiple %9, 8 : i32
    %11 = arith.index_cast %10 : i32 to index
    %c0_9 = arith.constant 0 : index
    %12 = vector.load %arg44[%11, %c0_9] : memref<8x16xf32, #tpu.memory_space<vmem>>, vector<8x16xf32>
    %c0_10 = arith.constant 0 : index
    %c0_11 = arith.constant 0 : index
    %13 = vector.load %arg45[%c0_10, %c0_11] : memref<8x16xf32, #tpu.memory_space<vmem>>, vector<8x16xf32>
    %c0_12 = arith.constant 0 : index
    %c0_13 = arith.constant 0 : index
    %14 = vector.load %arg46[%c0_12, %c0_13] : memref<8x16xf32, #tpu.memory_space<vmem>>, vector<8x16xf32>
    %c0_14 = arith.constant 0 : index
    %15 = arith.index_cast %10 : i32 to index
    %c0_15 = arith.constant 0 : index
    %16 = vector.load %arg2[%c0_14, %15, %c0_15] : memref<1x8x16xf32, #tpu.memory_space<vmem>>, vector<1x8x16xf32>
    %17 = vector.shape_cast %16 : vector<1x8x16xf32> to vector<8x16xf32>
    %c0_16 = arith.constant 0 : index
    %18 = arith.index_cast %10 : i32 to index
    %c0_17 = arith.constant 0 : index
    %19 = vector.load %arg5[%c0_16, %18, %c0_17] : memref<1x8x1xf32, #tpu.memory_space<vmem>>, vector<1x8x1xf32>
    %20 = vector.shape_cast %19 : vector<1x8x1xf32> to vector<8x1xf32>
    %21 = vector.shape_cast %20 : vector<8x1xf32> to vector<8x1x1xf32>
    %22 = vector.shape_cast %5 : vector<8x1xf32> to vector<1x8x1xf32>
    %23 = vector.broadcast %21 : vector<8x1x1xf32> to vector<8x8x1xf32>
    %24 = vector.broadcast %22 : vector<1x8x1xf32> to vector<8x8x1xf32>
    %25 = arith.mulf %23, %24 : vector<8x8x1xf32>
    %26 = vector.shape_cast %25 : vector<8x8x1xf32> to vector<64x1xf32>
    %cst_18 = arith.constant 1.000000e+00 : f32
    %27 = vector.broadcast %cst_18 : f32 to vector<64x1xf32>
    %28 = arith.subf %27, %26 : vector<64x1xf32>
    %29 = vector.shape_cast %12 : vector<8x16xf32> to vector<8x1x16xf32>
    %30 = vector.shape_cast %13 : vector<8x16xf32> to vector<1x8x16xf32>
    %31 = vector.broadcast %29 : vector<8x1x16xf32> to vector<8x8x16xf32>
    %32 = vector.broadcast %30 : vector<1x8x16xf32> to vector<8x8x16xf32>
    %33 = arith.mulf %31, %32 : vector<8x8x16xf32>
    %c0_19 = arith.constant 0 : index
    %c0_20 = arith.constant 0 : index
    %34 = vector.load %arg8[%c0_19, %c0_20] : memref<8x32xf32, #tpu.memory_space<vmem>>, vector<8x32xf32>
    %cst_21 = arith.constant dense<0.000000e+00> : vector<64x32xf32>
    %35 = tpu.matmul %1, %34, %cst_21 {dimension_numbers = #tpu.dot_dimension_numbers<[1], [0], [0], [1], [0, 0, 1, 1], [], []>} : vector<64x8xf32>, vector<8x32xf32>, vector<64x32xf32> -> vector<64x32xf32>
    %c0_22 = arith.constant 0 : index
    %c0_23 = arith.constant 0 : index
    %36 = vector.load %arg9[%c0_22, %c0_23] : memref<1x32xf32, #tpu.memory_space<vmem>>, vector<1x32xf32>
    %37 = vector.broadcast %36 : vector<1x32xf32> to vector<64x32xf32>
    %38 = arith.addf %35, %37 : vector<64x32xf32>
    %39 = vector.broadcast %26 : vector<64x1xf32> to vector<64x32xf32>
    %40 = arith.mulf %38, %39 : vector<64x32xf32>
    %41 = vector.shape_cast %40 : vector<64x32xf32> to vector<8x8x32xf32>
    %42 = vector.extract_strided_slice %41 {offsets = [0, 0, 0], sizes = [8, 8, 16], strides = [1, 1, 1]} : vector<8x8x32xf32> to vector<8x8x16xf32>
    %cst_24 = arith.constant 1.000000e+00 : f32
    %43 = vector.broadcast %cst_24 : f32 to vector<8x8x16xf32>
    %44 = arith.addf %42, %43 : vector<8x8x16xf32>
    %45 = arith.mulf %33, %44 : vector<8x8x16xf32>
    %46 = vector.extract_strided_slice %41 {offsets = [0, 0, 16], sizes = [8, 8, 16], strides = [1, 1, 1]} : vector<8x8x32xf32> to vector<8x8x16xf32>
    %47 = arith.addf %45, %46 : vector<8x8x16xf32>
    %c0_25 = arith.constant 0 : index
    %c0_26 = arith.constant 0 : index
    %48 = vector.load %arg47[%c0_25, %c0_26] : memref<1x64xf32, #tpu.memory_space<vmem>>, vector<1x64xf32>
    %49 = vector.extract_strided_slice %48 {offsets = [0, 0], sizes = [1, 16], strides = [1, 1]} : vector<1x64xf32> to vector<1x16xf32>
    %50 = vector.extract_strided_slice %48 {offsets = [0, 16], sizes = [1, 16], strides = [1, 1]} : vector<1x64xf32> to vector<1x16xf32>
    %51 = vector.extract_strided_slice %48 {offsets = [0, 32], sizes = [1, 16], strides = [1, 1]} : vector<1x64xf32> to vector<1x16xf32>
    %52 = vector.extract_strided_slice %48 {offsets = [0, 48], sizes = [1, 16], strides = [1, 1]} : vector<1x64xf32> to vector<1x16xf32>
    %53 = vector.shape_cast %47 : vector<8x8x16xf32> to vector<64x16xf32>
    %cst_27 = arith.constant 1.000000e+00 : f32
    %54 = vector.broadcast %cst_27 : f32 to vector<1x16xf32>
    %55 = arith.addf %50, %54 : vector<1x16xf32>
    %56 = vector.broadcast %55 : vector<1x16xf32> to vector<64x16xf32>
    %57 = arith.mulf %56, %53 : vector<64x16xf32>
    %58 = vector.broadcast %49 : vector<1x16xf32> to vector<64x16xf32>
    %59 = arith.addf %58, %57 : vector<64x16xf32>
    %c0_28 = arith.constant 0 : index
    %c0_29 = arith.constant 0 : index
    %60 = vector.load %arg14[%c0_28, %c0_29] : memref<16x8xf32, #tpu.memory_space<vmem>>, vector<16x8xf32>
    %cst_30 = arith.constant dense<0.000000e+00> : vector<64x8xf32>
    %61 = tpu.matmul %59, %60, %cst_30 {dimension_numbers = #tpu.dot_dimension_numbers<[1], [0], [0], [1], [0, 0, 1, 1], [], []>} : vector<64x16xf32>, vector<16x8xf32>, vector<64x8xf32> -> vector<64x8xf32>
    %c0_31 = arith.constant 0 : index
    %c0_32 = arith.constant 0 : index
    %62 = vector.load %arg15[%c0_31, %c0_32] : memref<1x8xf32, #tpu.memory_space<vmem>>, vector<1x8xf32>
    %63 = vector.broadcast %62 : vector<1x8xf32> to vector<64x8xf32>
    %64 = arith.addf %61, %63 : vector<64x8xf32>
    %65 = vector.broadcast %26 : vector<64x1xf32> to vector<64x8xf32>
    %66 = arith.mulf %64, %65 : vector<64x8xf32>
    %c0_33 = arith.constant 0 : index
    %c0_34 = arith.constant 0 : index
    %67 = vector.load %arg35[%c0_33, %c0_34] : memref<1x32xf32, #tpu.memory_space<vmem>>, vector<1x8xf32>
    %c0_35 = arith.constant 0 : index
    %c8 = arith.constant 8 : index
    %68 = vector.load %arg35[%c0_35, %c8] : memref<1x32xf32, #tpu.memory_space<vmem>>, vector<1x8xf32>
    %c0_36 = arith.constant 0 : index
    %c16 = arith.constant 16 : index
    %69 = vector.load %arg35[%c0_36, %c16] : memref<1x32xf32, #tpu.memory_space<vmem>>, vector<1x8xf32>
    %c0_37 = arith.constant 0 : index
    %c24 = arith.constant 24 : index
    %70 = vector.load %arg35[%c0_37, %c24] : memref<1x32xf32, #tpu.memory_space<vmem>>, vector<1x8xf32>
    %71 = arith.addf %1, %66 : vector<64x8xf32>
    %cst_38 = arith.constant dense<0.000000e+00> : vector<64xf32>
    %72 = vector.multi_reduction <add>, %71, %cst_38 [1] : vector<64x8xf32> to vector<64xf32>
    %73 = vector.shape_cast %72 : vector<64xf32> to vector<64x1xf32>
    %cst_39 = arith.constant 8.000000e+00 : f32
    %74 = vector.broadcast %cst_39 : f32 to vector<64x1xf32>
    %75 = arith.divf %73, %74 : vector<64x1xf32>
    %76 = vector.broadcast %75 : vector<64x1xf32> to vector<64x8xf32>
    %77 = arith.subf %71, %76 : vector<64x8xf32>
    %78 = arith.mulf %77, %77 : vector<64x8xf32>
    %cst_40 = arith.constant dense<0.000000e+00> : vector<64xf32>
    %79 = vector.multi_reduction <add>, %78, %cst_40 [1] : vector<64x8xf32> to vector<64xf32>
    %80 = vector.shape_cast %79 : vector<64xf32> to vector<64x1xf32>
    %cst_41 = arith.constant 8.000000e+00 : f32
    %81 = vector.broadcast %cst_41 : f32 to vector<64x1xf32>
    %82 = arith.divf %80, %81 : vector<64x1xf32>
    %83 = vector.broadcast %75 : vector<64x1xf32> to vector<64x8xf32>
    %84 = arith.subf %71, %83 : vector<64x8xf32>
    %cst_42 = arith.constant 9.99999974E-6 : f32
    %85 = vector.broadcast %cst_42 : f32 to vector<64x1xf32>
    %86 = arith.addf %82, %85 : vector<64x1xf32>
    %87 = math.rsqrt %86 : vector<64x1xf32>
    %88 = vector.broadcast %87 : vector<64x1xf32> to vector<64x8xf32>
    %89 = arith.mulf %84, %88 : vector<64x8xf32>
    %90 = vector.broadcast %67 : vector<1x8xf32> to vector<64x8xf32>
    %91 = arith.mulf %89, %90 : vector<64x8xf32>
    %92 = vector.broadcast %68 : vector<1x8xf32> to vector<64x8xf32>
    %93 = arith.addf %91, %92 : vector<64x8xf32>
    %c0_43 = arith.constant 0 : index
    %c0_44 = arith.constant 0 : index
    %94 = vector.load %arg31[%c0_43, %c0_44] : memref<8x16xf32, #tpu.memory_space<vmem>>, vector<8x16xf32>
    %cst_45 = arith.constant dense<0.000000e+00> : vector<64x16xf32>
    %95 = tpu.matmul %93, %94, %cst_45 {dimension_numbers = #tpu.dot_dimension_numbers<[1], [0], [0], [1], [0, 0, 1, 1], [], []>} : vector<64x8xf32>, vector<8x16xf32>, vector<64x16xf32> -> vector<64x16xf32>
    %c0_46 = arith.constant 0 : index
    %c0_47 = arith.constant 0 : index
    %96 = vector.load %arg32[%c0_46, %c0_47] : memref<1x16xf32, #tpu.memory_space<vmem>>, vector<1x16xf32>
    %97 = vector.broadcast %96 : vector<1x16xf32> to vector<64x16xf32>
    %98 = arith.addf %95, %97 : vector<64x16xf32>
    %cst_48 = arith.constant 0.000000e+00 : f32
    %99 = vector.broadcast %cst_48 : f32 to vector<64x16xf32>
    %100 = arith.maximumf %98, %99 : vector<64x16xf32>
    %c0_49 = arith.constant 0 : index
    %c0_50 = arith.constant 0 : index
    %101 = vector.load %arg33[%c0_49, %c0_50] : memref<16x8xf32, #tpu.memory_space<vmem>>, vector<16x8xf32>
    %cst_51 = arith.constant dense<0.000000e+00> : vector<64x8xf32>
    %102 = tpu.matmul %100, %101, %cst_51 {dimension_numbers = #tpu.dot_dimension_numbers<[1], [0], [0], [1], [0, 0, 1, 1], [], []>} : vector<64x16xf32>, vector<16x8xf32>, vector<64x8xf32> -> vector<64x8xf32>
    %c0_52 = arith.constant 0 : index
    %c0_53 = arith.constant 0 : index
    %103 = vector.load %arg34[%c0_52, %c0_53] : memref<1x8xf32, #tpu.memory_space<vmem>>, vector<1x8xf32>
    %104 = vector.broadcast %103 : vector<1x8xf32> to vector<64x8xf32>
    %105 = arith.addf %102, %104 : vector<64x8xf32>
    %106 = arith.addf %93, %105 : vector<64x8xf32>
    %cst_54 = arith.constant dense<0.000000e+00> : vector<64xf32>
    %107 = vector.multi_reduction <add>, %106, %cst_54 [1] : vector<64x8xf32> to vector<64xf32>
    %108 = vector.shape_cast %107 : vector<64xf32> to vector<64x1xf32>
    %cst_55 = arith.constant 8.000000e+00 : f32
    %109 = vector.broadcast %cst_55 : f32 to vector<64x1xf32>
    %110 = arith.divf %108, %109 : vector<64x1xf32>
    %111 = vector.broadcast %110 : vector<64x1xf32> to vector<64x8xf32>
    %112 = arith.subf %106, %111 : vector<64x8xf32>
    %113 = arith.mulf %112, %112 : vector<64x8xf32>
    %cst_56 = arith.constant dense<0.000000e+00> : vector<64xf32>
    %114 = vector.multi_reduction <add>, %113, %cst_56 [1] : vector<64x8xf32> to vector<64xf32>
    %115 = vector.shape_cast %114 : vector<64xf32> to vector<64x1xf32>
    %cst_57 = arith.constant 8.000000e+00 : f32
    %116 = vector.broadcast %cst_57 : f32 to vector<64x1xf32>
    %117 = arith.divf %115, %116 : vector<64x1xf32>
    %118 = vector.broadcast %110 : vector<64x1xf32> to vector<64x8xf32>
    %119 = arith.subf %106, %118 : vector<64x8xf32>
    %cst_58 = arith.constant 9.99999974E-6 : f32
    %120 = vector.broadcast %cst_58 : f32 to vector<64x1xf32>
    %121 = arith.addf %117, %120 : vector<64x1xf32>
    %122 = math.rsqrt %121 : vector<64x1xf32>
    %123 = vector.broadcast %122 : vector<64x1xf32> to vector<64x8xf32>
    %124 = arith.mulf %119, %123 : vector<64x8xf32>
    %125 = vector.broadcast %69 : vector<1x8xf32> to vector<64x8xf32>
    %126 = arith.mulf %124, %125 : vector<64x8xf32>
    %127 = vector.broadcast %70 : vector<1x8xf32> to vector<64x8xf32>
    %128 = arith.addf %126, %127 : vector<64x8xf32>
    %c0_59 = arith.constant 0 : index
    %c0_60 = arith.constant 0 : index
    %c0_61 = arith.constant 0 : index
    %129 = vector.load %arg42[%c0_59, %c0_60, %c0_61] : memref<1x64x8xf32, #tpu.memory_space<vmem>>, vector<1x64x8xf32>
    %130 = vector.shape_cast %129 : vector<1x64x8xf32> to vector<64x8xf32>
    %131 = vector.shape_cast %128 : vector<64x8xf32> to vector<1x64x8xf32>
    tpu.vector_store %arg42[%c0_59, %c0_60, %c0_61], %131 {strides = array<i32>} : memref<1x64x8xf32, #tpu.memory_space<vmem>>, vector<1x64x8xf32>,
    %132 = vector.shape_cast %5 : vector<8x1xf32> to vector<1x8x1xf32>
    %cst_62 = arith.constant 0.000000e+00 : f32
    %133 = vector.broadcast %cst_62 : f32 to vector<1x8x1xf32>
    %134 = arith.cmpf ogt, %132, %133 : vector<1x8x1xf32>
    %cst_63 = arith.constant 0xFF800000 : f32
    %135 = vector.shape_cast %134 : vector<1x8x1xi1> to vector<1x8x1xi1>
    %136 = vector.broadcast %135 : vector<1x8x1xi1> to vector<8x8x16xi1>
    %137 = vector.broadcast %cst_63 : f32 to vector<8x8x16xf32>
    %138 = arith.select %136, %47, %137 : vector<8x8x16xi1>, vector<8x8x16xf32>
    %cst_64 = arith.constant dense<0xFF800000> : vector<8x16xf32>
    %139 = vector.multi_reduction <maximumf>, %138, %cst_64 [1] : vector<8x8x16xf32> to vector<8x16xf32>
    %140 = vector.shape_cast %139 : vector<8x16xf32> to vector<8x1x16xf32>
    %141 = vector.broadcast %140 : vector<8x1x16xf32> to vector<8x8x16xf32>
    %142 = arith.subf %138, %141 : vector<8x8x16xf32>
    %143 = math.exp %142 : vector<8x8x16xf32>
    %cst_65 = arith.constant dense<0.000000e+00> : vector<8x16xf32>
    %144 = vector.multi_reduction <add>, %143, %cst_65 [1] : vector<8x8x16xf32> to vector<8x16xf32>
    %145 = vector.shape_cast %144 : vector<8x16xf32> to vector<8x1x16xf32>
    %146 = tpu.reciprocal %145 {approx = true} : vector<8x1x16xf32> -> vector<8x1x16xf32>
    %147 = vector.broadcast %146 : vector<8x1x16xf32> to vector<8x8x16xf32>
    %148 = arith.mulf %143, %147 : vector<8x8x16xf32>
    %149 = vector.shape_cast %14 : vector<8x16xf32> to vector<1x8x16xf32>
    %150 = vector.broadcast %149 : vector<1x8x16xf32> to vector<8x8x16xf32>
    %151 = arith.mulf %148, %150 : vector<8x8x16xf32>
    %cst_66 = arith.constant dense<0.000000e+00> : vector<8x16xf32>
    %152 = vector.multi_reduction <add>, %151, %cst_66 [1] : vector<8x8x16xf32> to vector<8x16xf32>
    %cst_67 = arith.constant 1.000000e+00 : f32
    %153 = vector.broadcast %cst_67 : f32 to vector<1x16xf32>
    %154 = arith.addf %52, %153 : vector<1x16xf32>
    %155 = vector.broadcast %154 : vector<1x16xf32> to vector<8x16xf32>
    %156 = arith.mulf %155, %152 : vector<8x16xf32>
    %157 = vector.broadcast %51 : vector<1x16xf32> to vector<8x16xf32>
    %158 = arith.addf %157, %156 : vector<8x16xf32>
    %c0_68 = arith.constant 0 : index
    %c0_69 = arith.constant 0 : index
    %159 = vector.load %arg12[%c0_68, %c0_69] : memref<16x16xf32, #tpu.memory_space<vmem>>, vector<16x16xf32>
    %cst_70 = arith.constant dense<0.000000e+00> : vector<8x16xf32>
    %160 = tpu.matmul %158, %159, %cst_70 {dimension_numbers = #tpu.dot_dimension_numbers<[1], [0], [0], [1], [0, 0, 1, 1], [], []>} : vector<8x16xf32>, vector<16x16xf32>, vector<8x16xf32> -> vector<8x16xf32>
    %c0_71 = arith.constant 0 : index
    %c0_72 = arith.constant 0 : index
    %161 = vector.load %arg13[%c0_71, %c0_72] : memref<1x16xf32, #tpu.memory_space<vmem>>, vector<1x16xf32>
    %162 = vector.broadcast %161 : vector<1x16xf32> to vector<8x16xf32>
    %163 = arith.addf %160, %162 : vector<8x16xf32>
    %164 = vector.broadcast %20 : vector<8x1xf32> to vector<8x16xf32>
    %165 = arith.mulf %163, %164 : vector<8x16xf32>
    %c0_73 = arith.constant 0 : index
    %c0_74 = arith.constant 0 : index
    %166 = vector.load %arg30[%c0_73, %c0_74] : memref<1x64xf32, #tpu.memory_space<vmem>>, vector<1x16xf32>
    %c0_75 = arith.constant 0 : index
    %c16_76 = arith.constant 16 : index
    %167 = vector.load %arg30[%c0_75, %c16_76] : memref<1x64xf32, #tpu.memory_space<vmem>>, vector<1x16xf32>
    %c0_77 = arith.constant 0 : index
    %c32 = arith.constant 32 : index
    %168 = vector.load %arg30[%c0_77, %c32] : memref<1x64xf32, #tpu.memory_space<vmem>>, vector<1x16xf32>
    %c0_78 = arith.constant 0 : index
    %c48 = arith.constant 48 : index
    %169 = vector.load %arg30[%c0_78, %c48] : memref<1x64xf32, #tpu.memory_space<vmem>>, vector<1x16xf32>
    %170 = arith.addf %17, %165 : vector<8x16xf32>
    %cst_79 = arith.constant dense<0.000000e+00> : vector<8xf32>
    %171 = vector.multi_reduction <add>, %170, %cst_79 [1] : vector<8x16xf32> to vector<8xf32>
    %172 = vector.shape_cast %171 : vector<8xf32> to vector<8x1xf32>
    %cst_80 = arith.constant 1.600000e+01 : f32
    %173 = vector.broadcast %cst_80 : f32 to vector<8x1xf32>
    %174 = arith.divf %172, %173 : vector<8x1xf32>
    %175 = vector.broadcast %174 : vector<8x1xf32> to vector<8x16xf32>
    %176 = arith.subf %170, %175 : vector<8x16xf32>
    %177 = arith.mulf %176, %176 : vector<8x16xf32>
    %cst_81 = arith.constant dense<0.000000e+00> : vector<8xf32>
    %178 = vector.multi_reduction <add>, %177, %cst_81 [1] : vector<8x16xf32> to vector<8xf32>
    %179 = vector.shape_cast %178 : vector<8xf32> to vector<8x1xf32>
    %cst_82 = arith.constant 1.600000e+01 : f32
    %180 = vector.broadcast %cst_82 : f32 to vector<8x1xf32>
    %181 = arith.divf %179, %180 : vector<8x1xf32>
    %182 = vector.broadcast %174 : vector<8x1xf32> to vector<8x16xf32>
    %183 = arith.subf %170, %182 : vector<8x16xf32>
    %cst_83 = arith.constant 9.99999974E-6 : f32
    %184 = vector.broadcast %cst_83 : f32 to vector<8x1xf32>
    %185 = arith.addf %181, %184 : vector<8x1xf32>
    %186 = math.rsqrt %185 : vector<8x1xf32>
    %187 = vector.broadcast %186 : vector<8x1xf32> to vector<8x16xf32>
    %188 = arith.mulf %183, %187 : vector<8x16xf32>
    %189 = vector.broadcast %166 : vector<1x16xf32> to vector<8x16xf32>
    %190 = arith.mulf %188, %189 : vector<8x16xf32>
    %191 = vector.broadcast %167 : vector<1x16xf32> to vector<8x16xf32>
    %192 = arith.addf %190, %191 : vector<8x16xf32>
    %c0_84 = arith.constant 0 : index
    %c0_85 = arith.constant 0 : index
    %193 = vector.load %arg26[%c0_84, %c0_85] : memref<16x32xf32, #tpu.memory_space<vmem>>, vector<16x32xf32>
    %cst_86 = arith.constant dense<0.000000e+00> : vector<8x32xf32>
    %194 = tpu.matmul %192, %193, %cst_86 {dimension_numbers = #tpu.dot_dimension_numbers<[1], [0], [0], [1], [0, 0, 1, 1], [], []>} : vector<8x16xf32>, vector<16x32xf32>, vector<8x32xf32> -> vector<8x32xf32>
    %c0_87 = arith.constant 0 : index
    %c0_88 = arith.constant 0 : index
    %195 = vector.load %arg27[%c0_87, %c0_88] : memref<1x32xf32, #tpu.memory_space<vmem>>, vector<1x32xf32>
    %196 = vector.broadcast %195 : vector<1x32xf32> to vector<8x32xf32>
    %197 = arith.addf %194, %196 : vector<8x32xf32>
    %cst_89 = arith.constant 0.000000e+00 : f32
    %198 = vector.broadcast %cst_89 : f32 to vector<8x32xf32>
    %199 = arith.maximumf %197, %198 : vector<8x32xf32>
    %c0_90 = arith.constant 0 : index
    %c0_91 = arith.constant 0 : index
    %200 = vector.load %arg28[%c0_90, %c0_91] : memref<32x16xf32, #tpu.memory_space<vmem>>, vector<32x16xf32>
    %cst_92 = arith.constant dense<0.000000e+00> : vector<8x16xf32>
    %201 = tpu.matmul %199, %200, %cst_92 {dimension_numbers = #tpu.dot_dimension_numbers<[1], [0], [0], [1], [0, 0, 1, 1], [], []>} : vector<8x32xf32>, vector<32x16xf32>, vector<8x16xf32> -> vector<8x16xf32>
    %c0_93 = arith.constant 0 : index
    %c0_94 = arith.constant 0 : index
    %202 = vector.load %arg29[%c0_93, %c0_94] : memref<1x16xf32, #tpu.memory_space<vmem>>, vector<1x16xf32>
    %203 = vector.broadcast %202 : vector<1x16xf32> to vector<8x16xf32>
    %204 = arith.addf %201, %203 : vector<8x16xf32>
    %205 = arith.addf %192, %204 : vector<8x16xf32>
    %cst_95 = arith.constant dense<0.000000e+00> : vector<8xf32>
    %206 = vector.multi_reduction <add>, %205, %cst_95 [1] : vector<8x16xf32> to vector<8xf32>
    %207 = vector.shape_cast %206 : vector<8xf32> to vector<8x1xf32>
    %cst_96 = arith.constant 1.600000e+01 : f32
    %208 = vector.broadcast %cst_96 : f32 to vector<8x1xf32>
    %209 = arith.divf %207, %208 : vector<8x1xf32>
    %210 = vector.broadcast %209 : vector<8x1xf32> to vector<8x16xf32>
    %211 = arith.subf %205, %210 : vector<8x16xf32>
    %212 = arith.mulf %211, %211 : vector<8x16xf32>
    %cst_97 = arith.constant dense<0.000000e+00> : vector<8xf32>
    %213 = vector.multi_reduction <add>, %212, %cst_97 [1] : vector<8x16xf32> to vector<8xf32>
    %214 = vector.shape_cast %213 : vector<8xf32> to vector<8x1xf32>
    %cst_98 = arith.constant 1.600000e+01 : f32
    %215 = vector.broadcast %cst_98 : f32 to vector<8x1xf32>
    %216 = arith.divf %214, %215 : vector<8x1xf32>
    %217 = vector.broadcast %209 : vector<8x1xf32> to vector<8x16xf32>
    %218 = arith.subf %205, %217 : vector<8x16xf32>
    %cst_99 = arith.constant 9.99999974E-6 : f32
    %219 = vector.broadcast %cst_99 : f32 to vector<8x1xf32>
    %220 = arith.addf %216, %219 : vector<8x1xf32>
    %221 = math.rsqrt %220 : vector<8x1xf32>
    %222 = vector.broadcast %221 : vector<8x1xf32> to vector<8x16xf32>
    %223 = arith.mulf %218, %222 : vector<8x16xf32>
    %224 = vector.broadcast %168 : vector<1x16xf32> to vector<8x16xf32>
    %225 = arith.mulf %223, %224 : vector<8x16xf32>
    %226 = vector.broadcast %169 : vector<1x16xf32> to vector<8x16xf32>
    %227 = arith.addf %225, %226 : vector<8x16xf32>
    %c0_100 = arith.constant 0 : index
    %c0_101 = arith.constant 0 : index
    %c0_102 = arith.constant 0 : index
    %228 = vector.load %arg41[%c0_100, %c0_101, %c0_102] : memref<1x8x16xf32, #tpu.memory_space<vmem>>, vector<1x8x16xf32>
    %229 = vector.shape_cast %228 : vector<1x8x16xf32> to vector<8x16xf32>
    %230 = vector.shape_cast %227 : vector<8x16xf32> to vector<1x8x16xf32>
    tpu.vector_store %arg41[%c0_100, %c0_101, %c0_102], %230 {strides = array<i32>} : memref<1x8x16xf32, #tpu.memory_space<vmem>>, vector<1x8x16xf32>,
    %231 = vector.broadcast %26 : vector<64x1xf32> to vector<64x8xf32>
    %232 = arith.mulf %1, %231 : vector<64x8xf32>
    %c0_103 = arith.constant 0 : index
    %c0_104 = arith.constant 0 : index
    %233 = vector.load %arg48[%c0_103, %c0_104] : memref<1x8xf32, #tpu.memory_space<vmem>>, vector<1x8xf32>
    %cst_105 = arith.constant dense<0.000000e+00> : vector<8xf32>
    %234 = vector.multi_reduction <add>, %232, %cst_105 [0] : vector<64x8xf32> to vector<8xf32>
    %235 = vector.shape_cast %234 : vector<8xf32> to vector<1x8xf32>
    %236 = arith.addf %233, %235 : vector<1x8xf32>
    %c0_106 = arith.constant 0 : index
    %c0_107 = arith.constant 0 : index
    %237 = vector.load %arg48[%c0_106, %c0_107] : memref<1x8xf32, #tpu.memory_space<vmem>>, vector<1x8xf32>
    tpu.vector_store %arg48[%c0_106, %c0_107], %236 {strides = array<i32>} : memref<1x8xf32, #tpu.memory_space<vmem>>, vector<1x8xf32>,
    %c0_108 = arith.constant 0 : index
    %c0_109 = arith.constant 0 : index
    %238 = vector.load %arg49[%c0_108, %c0_109] : memref<1x8xf32, #tpu.memory_space<vmem>>, vector<1x8xf32>
    %239 = arith.mulf %1, %232 : vector<64x8xf32>
    %cst_110 = arith.constant dense<0.000000e+00> : vector<8xf32>
    %240 = vector.multi_reduction <add>, %239, %cst_110 [0] : vector<64x8xf32> to vector<8xf32>
    %241 = vector.shape_cast %240 : vector<8xf32> to vector<1x8xf32>
    %242 = arith.addf %238, %241 : vector<1x8xf32>
    %c0_111 = arith.constant 0 : index
    %c0_112 = arith.constant 0 : index
    %243 = vector.load %arg49[%c0_111, %c0_112] : memref<1x8xf32, #tpu.memory_space<vmem>>, vector<1x8xf32>
    tpu.vector_store %arg49[%c0_111, %c0_112], %242 {strides = array<i32>} : memref<1x8xf32, #tpu.memory_space<vmem>>, vector<1x8xf32>,
    %c0_113 = arith.constant 0 : index
    %c0_114 = arith.constant 0 : index
    %244 = vector.load %arg50[%c0_113, %c0_114] : memref<1x8xf32, #tpu.memory_space<vmem>>, vector<1x8xf32>
    %cst_115 = arith.constant 1.000000e+05 : f32
    %245 = vector.broadcast %cst_115 : f32 to vector<64x1xf32>
    %246 = arith.mulf %245, %28 : vector<64x1xf32>
    %247 = vector.broadcast %246 : vector<64x1xf32> to vector<64x8xf32>
    %248 = arith.addf %1, %247 : vector<64x8xf32>
    %cst_116 = arith.constant dense<0x7F800000> : vector<8xf32>
    %249 = vector.multi_reduction <minimumf>, %248, %cst_116 [0] : vector<64x8xf32> to vector<8xf32>
    %250 = vector.shape_cast %249 : vector<8xf32> to vector<1x8xf32>
    %251 = arith.minimumf %244, %250 : vector<1x8xf32>
    %c0_117 = arith.constant 0 : index
    %c0_118 = arith.constant 0 : index
    %252 = vector.load %arg50[%c0_117, %c0_118] : memref<1x8xf32, #tpu.memory_space<vmem>>, vector<1x8xf32>
    tpu.vector_store %arg50[%c0_117, %c0_118], %251 {strides = array<i32>} : memref<1x8xf32, #tpu.memory_space<vmem>>, vector<1x8xf32>,
    %c0_119 = arith.constant 0 : index
    %c0_120 = arith.constant 0 : index
    %253 = vector.load %arg51[%c0_119, %c0_120] : memref<1x8xf32, #tpu.memory_space<vmem>>, vector<1x8xf32>
    %cst_121 = arith.constant 1.000000e+05 : f32
    %254 = vector.broadcast %cst_121 : f32 to vector<64x1xf32>
    %255 = arith.mulf %254, %28 : vector<64x1xf32>
    %256 = vector.broadcast %255 : vector<64x1xf32> to vector<64x8xf32>
    %257 = arith.subf %1, %256 : vector<64x8xf32>
    %cst_122 = arith.constant dense<0xFF800000> : vector<8xf32>
    %258 = vector.multi_reduction <maximumf>, %257, %cst_122 [0] : vector<64x8xf32> to vector<8xf32>
    %259 = vector.shape_cast %258 : vector<8xf32> to vector<1x8xf32>
    %260 = arith.maximumf %253, %259 : vector<1x8xf32>
    %c0_123 = arith.constant 0 : index
    %c0_124 = arith.constant 0 : index
    %261 = vector.load %arg51[%c0_123, %c0_124] : memref<1x8xf32, #tpu.memory_space<vmem>>, vector<1x8xf32>
    tpu.vector_store %arg51[%c0_123, %c0_124], %260 {strides = array<i32>} : memref<1x8xf32, #tpu.memory_space<vmem>>, vector<1x8xf32>,
    %c0_125 = arith.constant 0 : index
    %c0_126 = arith.constant 0 : index
    %262 = vector.load %arg52[%c0_125, %c0_126] : memref<1x1xf32, #tpu.memory_space<vmem>>, vector<1x1xf32>
    %263 = vector.shape_cast %26 : vector<64x1xf32> to vector<1x64x1xf32>
    %cst_127 = arith.constant dense<0.000000e+00> : vector<1xf32>
    %264 = vector.multi_reduction <add>, %263, %cst_127 [1, 2] : vector<1x64x1xf32> to vector<1xf32>
    %265 = vector.shape_cast %264 : vector<1xf32> to vector<1x1x1xf32>
    %266 = vector.extract %265[0, 0, 0] : f32 from vector<1x1x1xf32>
    %267 = vector.broadcast %266 : f32 to vector<1x1xf32>
    %268 = arith.addf %262, %267 : vector<1x1xf32>
    %c0_128 = arith.constant 0 : index
    %c0_129 = arith.constant 0 : index
    %269 = vector.load %arg52[%c0_128, %c0_129] : memref<1x1xf32, #tpu.memory_space<vmem>>, vector<1x1xf32>
    tpu.vector_store %arg52[%c0_128, %c0_129], %268 {strides = array<i32>} : memref<1x1xf32, #tpu.memory_space<vmem>>, vector<1x1xf32>,
    %c0_i32_130 = arith.constant 0 : i32
    %270 = arith.cmpi eq, %arg1, %c0_i32_130 : i32
    %271 = arith.extui %270 : i1 to i32
    %c0_i32_131 = arith.constant 0 : i32
    %272 = arith.cmpi ne, %271, %c0_i32_131 : i32
    scf.if %272 {
      %c0_132 = arith.constant 0 : index
      %c0_133 = arith.constant 0 : index
      %c0_134 = arith.constant 0 : index
      %273 = vector.load %arg2[%c0_132, %c0_133, %c0_134] : memref<1x8x16xf32, #tpu.memory_space<vmem>>, vector<1x8x16xf32>
      %274 = vector.shape_cast %273 : vector<1x8x16xf32> to vector<8x16xf32>
      %c0_135 = arith.constant 0 : index
      %c0_136 = arith.constant 0 : index
      %275 = vector.load %arg16[%c0_135, %c0_136] : memref<8x8xf32, #tpu.memory_space<vmem>>, vector<8x8xf32>
      %cst_137 = arith.constant dense<0.000000e+00> : vector<1x8xf32>
      %276 = tpu.matmul %3, %275, %cst_137 {dimension_numbers = #tpu.dot_dimension_numbers<[1], [0], [0], [1], [0, 0, 1, 1], [], []>} : vector<1x8xf32>, vector<8x8xf32>, vector<1x8xf32> -> vector<1x8xf32>
      %c0_138 = arith.constant 0 : index
      %c0_139 = arith.constant 0 : index
      %277 = vector.load %arg17[%c0_138, %c0_139] : memref<1x8xf32, #tpu.memory_space<vmem>>, vector<1x8xf32>
      %278 = arith.addf %276, %277 : vector<1x8xf32>
      %cst_140 = arith.constant dense<0.000000e+00> : vector<1xf32>
      %279 = vector.multi_reduction <add>, %5, %cst_140 [0] : vector<8x1xf32> to vector<1xf32>
      %280 = vector.shape_cast %279 : vector<1xf32> to vector<1x1xf32>
      %281 = tpu.reciprocal %280 : vector<1x1xf32> -> vector<1x1xf32>
      %cst_141 = arith.constant 1.000000e+00 : f32
      %282 = vector.broadcast %cst_141 : f32 to vector<8x1xf32>
      %283 = arith.subf %282, %5 : vector<8x1xf32>
      %284 = vector.broadcast %5 : vector<8x1xf32> to vector<8x16xf32>
      %285 = arith.mulf %274, %284 : vector<8x16xf32>
      %cst_142 = arith.constant dense<0.000000e+00> : vector<16xf32>
      %286 = vector.multi_reduction <add>, %285, %cst_142 [0] : vector<8x16xf32> to vector<16xf32>
      %287 = vector.shape_cast %286 : vector<16xf32> to vector<1x16xf32>
      %288 = vector.broadcast %281 : vector<1x1xf32> to vector<1x16xf32>
      %289 = arith.mulf %287, %288 : vector<1x16xf32>
      %cst_143 = arith.constant 1.000000e+05 : f32
      %290 = vector.broadcast %cst_143 : f32 to vector<8x1xf32>
      %291 = arith.mulf %290, %283 : vector<8x1xf32>
      %292 = vector.broadcast %291 : vector<8x1xf32> to vector<8x16xf32>
      %293 = arith.addf %274, %292 : vector<8x16xf32>
      %cst_144 = arith.constant dense<0x7F800000> : vector<16xf32>
      %294 = vector.multi_reduction <minimumf>, %293, %cst_144 [0] : vector<8x16xf32> to vector<16xf32>
      %295 = vector.shape_cast %294 : vector<16xf32> to vector<1x16xf32>
      %cst_145 = arith.constant 1.000000e+05 : f32
      %296 = vector.broadcast %cst_145 : f32 to vector<8x1xf32>
      %297 = arith.mulf %296, %283 : vector<8x1xf32>
      %298 = vector.broadcast %297 : vector<8x1xf32> to vector<8x16xf32>
      %299 = arith.subf %274, %298 : vector<8x16xf32>
      %cst_146 = arith.constant dense<0xFF800000> : vector<16xf32>
      %300 = vector.multi_reduction <maximumf>, %299, %cst_146 [0] : vector<8x16xf32> to vector<16xf32>
      %301 = vector.shape_cast %300 : vector<16xf32> to vector<1x16xf32>
      %302 = vector.broadcast %289 : vector<1x16xf32> to vector<8x16xf32>
      %303 = arith.subf %274, %302 : vector<8x16xf32>
      %304 = arith.mulf %303, %303 : vector<8x16xf32>
      %305 = vector.broadcast %5 : vector<8x1xf32> to vector<8x16xf32>
      %306 = arith.mulf %304, %305 : vector<8x16xf32>
      %cst_147 = arith.constant dense<0.000000e+00> : vector<16xf32>
      %307 = vector.multi_reduction <add>, %306, %cst_147 [0] : vector<8x16xf32> to vector<16xf32>
      %308 = vector.shape_cast %307 : vector<16xf32> to vector<1x16xf32>
      %309 = vector.broadcast %281 : vector<1x1xf32> to vector<1x16xf32>
      %310 = arith.mulf %308, %309 : vector<1x16xf32>
      %311 = tpu.concatenate %289, %295, %301, %310 in 1 : vector<1x16xf32>, vector<1x16xf32>, vector<1x16xf32>, vector<1x16xf32> -> vector<1x64xf32>
      %c0_148 = arith.constant 0 : index
      %c0_149 = arith.constant 0 : index
      %312 = vector.load %arg18[%c0_148, %c0_149] : memref<64x8xf32, #tpu.memory_space<vmem>>, vector<64x8xf32>
      %cst_150 = arith.constant dense<0.000000e+00> : vector<1x8xf32>
      %313 = tpu.matmul %311, %312, %cst_150 {dimension_numbers = #tpu.dot_dimension_numbers<[1], [0], [0], [1], [0, 0, 1, 1], [], []>} : vector<1x64xf32>, vector<64x8xf32>, vector<1x8xf32> -> vector<1x8xf32>
      %c0_151 = arith.constant 0 : index
      %c0_152 = arith.constant 0 : index
      %314 = vector.load %arg19[%c0_151, %c0_152] : memref<1x8xf32, #tpu.memory_space<vmem>>, vector<1x8xf32>
      %315 = arith.addf %313, %314 : vector<1x8xf32>
      %c0_153 = arith.constant 0 : index
      %c0_154 = arith.constant 0 : index
      %316 = vector.load %arg52[%c0_153, %c0_154] : memref<1x1xf32, #tpu.memory_space<vmem>>, vector<1x1xf32>
      %317 = tpu.reciprocal %316 : vector<1x1xf32> -> vector<1x1xf32>
      %c0_155 = arith.constant 0 : index
      %c0_156 = arith.constant 0 : index
      %318 = vector.load %arg48[%c0_155, %c0_156] : memref<1x8xf32, #tpu.memory_space<vmem>>, vector<1x8xf32>
      %319 = vector.broadcast %317 : vector<1x1xf32> to vector<1x8xf32>
      %320 = arith.mulf %318, %319 : vector<1x8xf32>
      %c0_157 = arith.constant 0 : index
      %c0_158 = arith.constant 0 : index
      %321 = vector.load %arg49[%c0_157, %c0_158] : memref<1x8xf32, #tpu.memory_space<vmem>>, vector<1x8xf32>
      %cst_159 = arith.constant 2.000000e+00 : f32
      %322 = vector.broadcast %cst_159 : f32 to vector<1x8xf32>
      %323 = arith.mulf %322, %320 : vector<1x8xf32>
      %c0_160 = arith.constant 0 : index
      %c0_161 = arith.constant 0 : index
      %324 = vector.load %arg48[%c0_160, %c0_161] : memref<1x8xf32, #tpu.memory_space<vmem>>, vector<1x8xf32>
      %325 = arith.mulf %323, %324 : vector<1x8xf32>
      %326 = arith.subf %321, %325 : vector<1x8xf32>
      %327 = vector.broadcast %317 : vector<1x1xf32> to vector<1x8xf32>
      %328 = arith.mulf %326, %327 : vector<1x8xf32>
      %329 = arith.mulf %320, %320 : vector<1x8xf32>
      %330 = arith.addf %328, %329 : vector<1x8xf32>
      %c0_162 = arith.constant 0 : index
      %c0_163 = arith.constant 0 : index
      %331 = vector.load %arg50[%c0_162, %c0_163] : memref<1x8xf32, #tpu.memory_space<vmem>>, vector<1x8xf32>
      %c0_164 = arith.constant 0 : index
      %c0_165 = arith.constant 0 : index
      %332 = vector.load %arg51[%c0_164, %c0_165] : memref<1x8xf32, #tpu.memory_space<vmem>>, vector<1x8xf32>
      %333 = tpu.concatenate %320, %331, %332, %330 in 1 : vector<1x8xf32>, vector<1x8xf32>, vector<1x8xf32>, vector<1x8xf32> -> vector<1x32xf32>
      %c0_166 = arith.constant 0 : index
      %c0_167 = arith.constant 0 : index
      %334 = vector.load %arg20[%c0_166, %c0_167] : memref<32x8xf32, #tpu.memory_space<vmem>>, vector<32x8xf32>
      %cst_168 = arith.constant dense<0.000000e+00> : vector<1x8xf32>
      %335 = tpu.matmul %333, %334, %cst_168 {dimension_numbers = #tpu.dot_dimension_numbers<[1], [0], [0], [1], [0, 0, 1, 1], [], []>} : vector<1x32xf32>, vector<32x8xf32>, vector<1x8xf32> -> vector<1x8xf32>
      %c0_169 = arith.constant 0 : index
      %c0_170 = arith.constant 0 : index
      %336 = vector.load %arg21[%c0_169, %c0_170] : memref<1x8xf32, #tpu.memory_space<vmem>>, vector<1x8xf32>
      %337 = arith.addf %335, %336 : vector<1x8xf32>
      %338 = arith.addf %278, %315 : vector<1x8xf32>
      %339 = arith.addf %338, %337 : vector<1x8xf32>
      %c0_171 = arith.constant 0 : index
      %c0_172 = arith.constant 0 : index
      %340 = vector.load %arg22[%c0_171, %c0_172] : memref<8x8xf32, #tpu.memory_space<vmem>>, vector<8x8xf32>
      %cst_173 = arith.constant dense<0.000000e+00> : vector<1x8xf32>
      %341 = tpu.matmul %339, %340, %cst_173 {dimension_numbers = #tpu.dot_dimension_numbers<[1], [0], [0], [1], [0, 0, 1, 1], [], []>} : vector<1x8xf32>, vector<8x8xf32>, vector<1x8xf32> -> vector<1x8xf32>
      %c0_174 = arith.constant 0 : index
      %c0_175 = arith.constant 0 : index
      %342 = vector.load %arg23[%c0_174, %c0_175] : memref<1x8xf32, #tpu.memory_space<vmem>>, vector<1x8xf32>
      %343 = arith.addf %341, %342 : vector<1x8xf32>
      %cst_176 = arith.constant 0.000000e+00 : f32
      %344 = vector.broadcast %cst_176 : f32 to vector<1x8xf32>
      %345 = arith.maximumf %343, %344 : vector<1x8xf32>
      %c0_177 = arith.constant 0 : index
      %c0_178 = arith.constant 0 : index
      %346 = vector.load %arg24[%c0_177, %c0_178] : memref<8x8xf32, #tpu.memory_space<vmem>>, vector<8x8xf32>
      %cst_179 = arith.constant dense<0.000000e+00> : vector<1x8xf32>
      %347 = tpu.matmul %345, %346, %cst_179 {dimension_numbers = #tpu.dot_dimension_numbers<[1], [0], [0], [1], [0, 0, 1, 1], [], []>} : vector<1x8xf32>, vector<8x8xf32>, vector<1x8xf32> -> vector<1x8xf32>
      %c0_180 = arith.constant 0 : index
      %c0_181 = arith.constant 0 : index
      %348 = vector.load %arg25[%c0_180, %c0_181] : memref<1x8xf32, #tpu.memory_space<vmem>>, vector<1x8xf32>
      %349 = arith.addf %347, %348 : vector<1x8xf32>
      %c0_182 = arith.constant 0 : index
      %c0_183 = arith.constant 0 : index
      %350 = vector.load %arg40[%c0_182, %c0_183] : memref<1x32xf32, #tpu.memory_space<vmem>>, vector<1x8xf32>
      %c0_184 = arith.constant 0 : index
      %c8_185 = arith.constant 8 : index
      %351 = vector.load %arg40[%c0_184, %c8_185] : memref<1x32xf32, #tpu.memory_space<vmem>>, vector<1x8xf32>
      %c0_186 = arith.constant 0 : index
      %c16_187 = arith.constant 16 : index
      %352 = vector.load %arg40[%c0_186, %c16_187] : memref<1x32xf32, #tpu.memory_space<vmem>>, vector<1x8xf32>
      %c0_188 = arith.constant 0 : index
      %c24_189 = arith.constant 24 : index
      %353 = vector.load %arg40[%c0_188, %c24_189] : memref<1x32xf32, #tpu.memory_space<vmem>>, vector<1x8xf32>
      %354 = arith.addf %3, %349 : vector<1x8xf32>
      %cst_190 = arith.constant dense<0.000000e+00> : vector<1xf32>
      %355 = vector.multi_reduction <add>, %354, %cst_190 [1] : vector<1x8xf32> to vector<1xf32>
      %356 = vector.shape_cast %355 : vector<1xf32> to vector<1x1xf32>
      %cst_191 = arith.constant 8.000000e+00 : f32
      %357 = vector.broadcast %cst_191 : f32 to vector<1x1xf32>
      %358 = arith.divf %356, %357 : vector<1x1xf32>
      %359 = vector.broadcast %358 : vector<1x1xf32> to vector<1x8xf32>
      %360 = arith.subf %354, %359 : vector<1x8xf32>
      %361 = arith.mulf %360, %360 : vector<1x8xf32>
      %cst_192 = arith.constant dense<0.000000e+00> : vector<1xf32>
      %362 = vector.multi_reduction <add>, %361, %cst_192 [1] : vector<1x8xf32> to vector<1xf32>
      %363 = vector.shape_cast %362 : vector<1xf32> to vector<1x1xf32>
      %cst_193 = arith.constant 8.000000e+00 : f32
      %364 = vector.broadcast %cst_193 : f32 to vector<1x1xf32>
      %365 = arith.divf %363, %364 : vector<1x1xf32>
      %366 = vector.broadcast %358 : vector<1x1xf32> to vector<1x8xf32>
      %367 = arith.subf %354, %366 : vector<1x8xf32>
      %cst_194 = arith.constant 9.99999974E-6 : f32
      %368 = vector.broadcast %cst_194 : f32 to vector<1x1xf32>
      %369 = arith.addf %365, %368 : vector<1x1xf32>
      %370 = math.rsqrt %369 : vector<1x1xf32>
      %371 = vector.broadcast %370 : vector<1x1xf32> to vector<1x8xf32>
      %372 = arith.mulf %367, %371 : vector<1x8xf32>
      %373 = arith.mulf %372, %350 : vector<1x8xf32>
      %374 = arith.addf %373, %351 : vector<1x8xf32>
      %c0_195 = arith.constant 0 : index
      %c0_196 = arith.constant 0 : index
      %375 = vector.load %arg36[%c0_195, %c0_196] : memref<8x32xf32, #tpu.memory_space<vmem>>, vector<8x32xf32>
      %cst_197 = arith.constant dense<0.000000e+00> : vector<1x32xf32>
      %376 = tpu.matmul %374, %375, %cst_197 {dimension_numbers = #tpu.dot_dimension_numbers<[1], [0], [0], [1], [0, 0, 1, 1], [], []>} : vector<1x8xf32>, vector<8x32xf32>, vector<1x32xf32> -> vector<1x32xf32>
      %c0_198 = arith.constant 0 : index
      %c0_199 = arith.constant 0 : index
      %377 = vector.load %arg37[%c0_198, %c0_199] : memref<1x32xf32, #tpu.memory_space<vmem>>, vector<1x32xf32>
      %378 = arith.addf %376, %377 : vector<1x32xf32>
      %cst_200 = arith.constant 0.000000e+00 : f32
      %379 = vector.broadcast %cst_200 : f32 to vector<1x32xf32>
      %380 = arith.maximumf %378, %379 : vector<1x32xf32>
      %c0_201 = arith.constant 0 : index
      %c0_202 = arith.constant 0 : index
      %381 = vector.load %arg38[%c0_201, %c0_202] : memref<32x8xf32, #tpu.memory_space<vmem>>, vector<32x8xf32>
      %cst_203 = arith.constant dense<0.000000e+00> : vector<1x8xf32>
      %382 = tpu.matmul %380, %381, %cst_203 {dimension_numbers = #tpu.dot_dimension_numbers<[1], [0], [0], [1], [0, 0, 1, 1], [], []>} : vector<1x32xf32>, vector<32x8xf32>, vector<1x8xf32> -> vector<1x8xf32>
      %c0_204 = arith.constant 0 : index
      %c0_205 = arith.constant 0 : index
      %383 = vector.load %arg39[%c0_204, %c0_205] : memref<1x8xf32, #tpu.memory_space<vmem>>, vector<1x8xf32>
      %384 = arith.addf %382, %383 : vector<1x8xf32>
      %385 = arith.addf %374, %384 : vector<1x8xf32>
      %cst_206 = arith.constant dense<0.000000e+00> : vector<1xf32>
      %386 = vector.multi_reduction <add>, %385, %cst_206 [1] : vector<1x8xf32> to vector<1xf32>
      %387 = vector.shape_cast %386 : vector<1xf32> to vector<1x1xf32>
      %cst_207 = arith.constant 8.000000e+00 : f32
      %388 = vector.broadcast %cst_207 : f32 to vector<1x1xf32>
      %389 = arith.divf %387, %388 : vector<1x1xf32>
      %390 = vector.broadcast %389 : vector<1x1xf32> to vector<1x8xf32>
      %391 = arith.subf %385, %390 : vector<1x8xf32>
      %392 = arith.mulf %391, %391 : vector<1x8xf32>
      %cst_208 = arith.constant dense<0.000000e+00> : vector<1xf32>
      %393 = vector.multi_reduction <add>, %392, %cst_208 [1] : vector<1x8xf32> to vector<1xf32>
      %394 = vector.shape_cast %393 : vector<1xf32> to vector<1x1xf32>
      %cst_209 = arith.constant 8.000000e+00 : f32
      %395 = vector.broadcast %cst_209 : f32 to vector<1x1xf32>
      %396 = arith.divf %394, %395 : vector<1x1xf32>
      %397 = vector.broadcast %389 : vector<1x1xf32> to vector<1x8xf32>
      %398 = arith.subf %385, %397 : vector<1x8xf32>
      %cst_210 = arith.constant 9.99999974E-6 : f32
      %399 = vector.broadcast %cst_210 : f32 to vector<1x1xf32>
      %400 = arith.addf %396, %399 : vector<1x1xf32>
      %401 = math.rsqrt %400 : vector<1x1xf32>
      %402 = vector.broadcast %401 : vector<1x1xf32> to vector<1x8xf32>
      %403 = arith.mulf %398, %402 : vector<1x8xf32>
      %404 = arith.mulf %403, %352 : vector<1x8xf32>
      %405 = arith.addf %404, %353 : vector<1x8xf32>
      %c0_211 = arith.constant 0 : index
      %c0_212 = arith.constant 0 : index
      %c0_213 = arith.constant 0 : index
      %406 = vector.load %arg43[%c0_211, %c0_212, %c0_213] : memref<1x1x8xf32, #tpu.memory_space<vmem>>, vector<1x1x8xf32>
      %407 = vector.shape_cast %406 : vector<1x1x8xf32> to vector<1x8xf32>
      %408 = vector.shape_cast %405 : vector<1x8xf32> to vector<1x1x8xf32>
      tpu.vector_store %arg43[%c0_211, %c0_212, %c0_213], %408 {strides = array<i32>} : memref<1x1x8xf32, #tpu.memory_space<vmem>>, vector<1x1x8xf32>,
    } else {
    }
    return
  }
  func.func @transform_0(%arg0: i32, %arg1: i32) -> (i32, i32, i32) {
    %c0_i32 = arith.constant 0 : i32
    %c0_i32_0 = arith.constant 0 : i32
    %c0_i32_1 = arith.constant 0 : i32
    return %arg0, %c0_i32, %c0_i32_0 : i32, i32, i32
  }
  func.func @transform_1(%arg0: i32, %arg1: i32) -> (i32, i32, i32) {
    %c0_i32 = arith.constant 0 : i32
    %c0_i32_0 = arith.constant 0 : i32
    return %arg0, %arg1, %c0_i32 : i32, i32, i32
  }
  func.func @transform_2(%arg0: i32, %arg1: i32) -> (i32, i32, i32) {
    %c0_i32 = arith.constant 0 : i32
    %c0_i32_0 = arith.constant 0 : i32
    %c0_i32_1 = arith.constant 0 : i32
    return %arg0, %c0_i32, %c0_i32_0 : i32, i32, i32
  }
  func.func @transform_3(%arg0: i32, %arg1: i32) -> (i32, i32, i32) {
    %c0_i32 = arith.constant 0 : i32
    %c0_i32_0 = arith.constant 0 : i32
    %c0_i32_1 = arith.constant 0 : i32
    return %arg0, %c0_i32, %c0_i32_0 : i32, i32, i32
  }
  func.func @transform_4(%arg0: i32, %arg1: i32) -> (i32, i32) {
    %c0_i32 = arith.constant 0 : i32
    %c0_i32_0 = arith.constant 0 : i32
    %c0_i32_1 = arith.constant 0 : i32
    return %c0_i32, %c0_i32_0 : i32, i32
  }
  func.func @transform_5(%arg0: i32, %arg1: i32) -> (i32, i32) {
    %c0_i32 = arith.constant 0 : i32
    %c0_i32_0 = arith.constant 0 : i32
    %c0_i32_1 = arith.constant 0 : i32
    return %c0_i32, %c0_i32_0 : i32, i32
  }
  func.func @transform_6(%arg0: i32, %arg1: i32) -> (i32, i32) {
    %c0_i32 = arith.constant 0 : i32
    %c0_i32_0 = arith.constant 0 : i32
    %c0_i32_1 = arith.constant 0 : i32
    return %c0_i32, %c0_i32_0 : i32, i32
  }
  func.func @transform_7(%arg0: i32, %arg1: i32) -> (i32, i32) {
    %c0_i32 = arith.constant 0 : i32
    %c0_i32_0 = arith.constant 0 : i32
    %c0_i32_1 = arith.constant 0 : i32
    return %c0_i32, %c0_i32_0 : i32, i32
  }
  func.func @transform_8(%arg0: i32, %arg1: i32) -> (i32, i32) {
    %c0_i32 = arith.constant 0 : i32
    %c0_i32_0 = arith.constant 0 : i32
    %c0_i32_1 = arith.constant 0 : i32
    return %c0_i32, %c0_i32_0 : i32, i32
  }
  func.func @transform_9(%arg0: i32, %arg1: i32) -> (i32, i32) {
    %c0_i32 = arith.constant 0 : i32
    %c0_i32_0 = arith.constant 0 : i32
    %c0_i32_1 = arith.constant 0 : i32
    return %c0_i32, %c0_i32_0 : i32, i32
  }
  func.func @transform_10(%arg0: i32, %arg1: i32) -> (i32, i32) {
    %c0_i32 = arith.constant 0 : i32
    %c0_i32_0 = arith.constant 0 : i32
    %c0_i32_1 = arith.constant 0 : i32
    return %c0_i32, %c0_i32_0 : i32, i32
  }
  func.func @transform_11(%arg0: i32, %arg1: i32) -> (i32, i32) {
    %c0_i32 = arith.constant 0 : i32
    %c0_i32_0 = arith.constant 0 : i32
    %c0_i32_1 = arith.constant 0 : i32
    return %c0_i32, %c0_i32_0 : i32, i32
  }
  func.func @transform_12(%arg0: i32, %arg1: i32) -> (i32, i32) {
    %c0_i32 = arith.constant 0 : i32
    %c0_i32_0 = arith.constant 0 : i32
    %c0_i32_1 = arith.constant 0 : i32
    return %c0_i32, %c0_i32_0 : i32, i32
  }
  func.func @transform_13(%arg0: i32, %arg1: i32) -> (i32, i32) {
    %c0_i32 = arith.constant 0 : i32
    %c0_i32_0 = arith.constant 0 : i32
    %c0_i32_1 = arith.constant 0 : i32
    return %c0_i32, %c0_i32_0 : i32, i32
  }
  func.func @transform_14(%arg0: i32, %arg1: i32) -> (i32, i32) {
    %c0_i32 = arith.constant 0 : i32
    %c0_i32_0 = arith.constant 0 : i32
    %c0_i32_1 = arith.constant 0 : i32
    return %c0_i32, %c0_i32_0 : i32, i32
  }
  func.func @transform_15(%arg0: i32, %arg1: i32) -> (i32, i32) {
    %c0_i32 = arith.constant 0 : i32
    %c0_i32_0 = arith.constant 0 : i32
    %c0_i32_1 = arith.constant 0 : i32
    return %c0_i32, %c0_i32_0 : i32, i32
  }
  func.func @transform_16(%arg0: i32, %arg1: i32) -> (i32, i32) {
    %c0_i32 = arith.constant 0 : i32
    %c0_i32_0 = arith.constant 0 : i32
    %c0_i32_1 = arith.constant 0 : i32
    return %c0_i32, %c0_i32_0 : i32, i32
  }
  func.func @transform_17(%arg0: i32, %arg1: i32) -> (i32, i32) {
    %c0_i32 = arith.constant 0 : i32
    %c0_i32_0 = arith.constant 0 : i32
    %c0_i32_1 = arith.constant 0 : i32
    return %c0_i32, %c0_i32_0 : i32, i32
  }
  func.func @transform_18(%arg0: i32, %arg1: i32) -> (i32, i32) {
    %c0_i32 = arith.constant 0 : i32
    %c0_i32_0 = arith.constant 0 : i32
    %c0_i32_1 = arith.constant 0 : i32
    return %c0_i32, %c0_i32_0 : i32, i32
  }
  func.func @transform_19(%arg0: i32, %arg1: i32) -> (i32, i32) {
    %c0_i32 = arith.constant 0 : i32
    %c0_i32_0 = arith.constant 0 : i32
    %c0_i32_1 = arith.constant 0 : i32
    return %c0_i32, %c0_i32_0 : i32, i32
  }
  func.func @transform_20(%arg0: i32, %arg1: i32) -> (i32, i32) {
    %c0_i32 = arith.constant 0 : i32
    %c0_i32_0 = arith.constant 0 : i32
    %c0_i32_1 = arith.constant 0 : i32
    return %c0_i32, %c0_i32_0 : i32, i32
  }
  func.func @transform_21(%arg0: i32, %arg1: i32) -> (i32, i32) {
    %c0_i32 = arith.constant 0 : i32
    %c0_i32_0 = arith.constant 0 : i32
    %c0_i32_1 = arith.constant 0 : i32
    return %c0_i32, %c0_i32_0 : i32, i32
  }
  func.func @transform_22(%arg0: i32, %arg1: i32) -> (i32, i32) {
    %c0_i32 = arith.constant 0 : i32
    %c0_i32_0 = arith.constant 0 : i32
    %c0_i32_1 = arith.constant 0 : i32
    return %c0_i32, %c0_i32_0 : i32, i32
  }
  func.func @transform_23(%arg0: i32, %arg1: i32) -> (i32, i32) {
    %c0_i32 = arith.constant 0 : i32
    %c0_i32_0 = arith.constant 0 : i32
    %c0_i32_1 = arith.constant 0 : i32
    return %c0_i32, %c0_i32_0 : i32, i32
  }
  func.func @transform_24(%arg0: i32, %arg1: i32) -> (i32, i32) {
    %c0_i32 = arith.constant 0 : i32
    %c0_i32_0 = arith.constant 0 : i32
    %c0_i32_1 = arith.constant 0 : i32
    return %c0_i32, %c0_i32_0 : i32, i32
  }
  func.func @transform_25(%arg0: i32, %arg1: i32) -> (i32, i32) {
    %c0_i32 = arith.constant 0 : i32
    %c0_i32_0 = arith.constant 0 : i32
    %c0_i32_1 = arith.constant 0 : i32
    return %c0_i32, %c0_i32_0 : i32, i32
  }
  func.func @transform_26(%arg0: i32, %arg1: i32) -> (i32, i32) {
    %c0_i32 = arith.constant 0 : i32
    %c0_i32_0 = arith.constant 0 : i32
    %c0_i32_1 = arith.constant 0 : i32
    return %c0_i32, %c0_i32_0 : i32, i32
  }
  func.func @transform_27(%arg0: i32, %arg1: i32) -> (i32, i32) {
    %c0_i32 = arith.constant 0 : i32
    %c0_i32_0 = arith.constant 0 : i32
    %c0_i32_1 = arith.constant 0 : i32
    return %c0_i32, %c0_i32_0 : i32, i32
  }
  func.func @transform_28(%arg0: i32, %arg1: i32) -> (i32, i32) {
    %c0_i32 = arith.constant 0 : i32
    %c0_i32_0 = arith.constant 0 : i32
    %c0_i32_1 = arith.constant 0 : i32
    return %c0_i32, %c0_i32_0 : i32, i32
  }
  func.func @transform_29(%arg0: i32, %arg1: i32) -> (i32, i32) {
    %c0_i32 = arith.constant 0 : i32
    %c0_i32_0 = arith.constant 0 : i32
    %c0_i32_1 = arith.constant 0 : i32
    return %c0_i32, %c0_i32_0 : i32, i32
  }
  func.func @transform_30(%arg0: i32, %arg1: i32) -> (i32, i32) {
    %c0_i32 = arith.constant 0 : i32
    %c0_i32_0 = arith.constant 0 : i32
    %c0_i32_1 = arith.constant 0 : i32
    return %c0_i32, %c0_i32_0 : i32, i32
  }
  func.func @transform_31(%arg0: i32, %arg1: i32) -> (i32, i32) {
    %c0_i32 = arith.constant 0 : i32
    %c0_i32_0 = arith.constant 0 : i32
    %c0_i32_1 = arith.constant 0 : i32
    return %c0_i32, %c0_i32_0 : i32, i32
  }
  func.func @transform_32(%arg0: i32, %arg1: i32) -> (i32, i32) {
    %c0_i32 = arith.constant 0 : i32
    %c0_i32_0 = arith.constant 0 : i32
    %c0_i32_1 = arith.constant 0 : i32
    return %c0_i32, %c0_i32_0 : i32, i32
  }
  func.func @transform_33(%arg0: i32, %arg1: i32) -> (i32, i32) {
    %c0_i32 = arith.constant 0 : i32
    %c0_i32_0 = arith.constant 0 : i32
    %c0_i32_1 = arith.constant 0 : i32
    return %c0_i32, %c0_i32_0 : i32, i32
  }
  func.func @transform_34(%arg0: i32, %arg1: i32) -> (i32, i32) {
    %c0_i32 = arith.constant 0 : i32
    %c0_i32_0 = arith.constant 0 : i32
    %c0_i32_1 = arith.constant 0 : i32
    return %c0_i32, %c0_i32_0 : i32, i32
  }
  func.func @transform_35(%arg0: i32, %arg1: i32) -> (i32, i32) {
    %c0_i32 = arith.constant 0 : i32
    %c0_i32_0 = arith.constant 0 : i32
    %c0_i32_1 = arith.constant 0 : i32
    return %c0_i32, %c0_i32_0 : i32, i32
  }
  func.func @transform_36(%arg0: i32, %arg1: i32) -> (i32, i32) {
    %c0_i32 = arith.constant 0 : i32
    %c0_i32_0 = arith.constant 0 : i32
    %c0_i32_1 = arith.constant 0 : i32
    return %c0_i32, %c0_i32_0 : i32, i32
  }
  func.func @transform_37(%arg0: i32, %arg1: i32) -> (i32, i32) {
    %c0_i32 = arith.constant 0 : i32
    %c0_i32_0 = arith.constant 0 : i32
    %c0_i32_1 = arith.constant 0 : i32
    return %c0_i32, %c0_i32_0 : i32, i32
  }
  func.func @transform_38(%arg0: i32, %arg1: i32) -> (i32, i32) {
    %c0_i32 = arith.constant 0 : i32
    %c0_i32_0 = arith.constant 0 : i32
    %c0_i32_1 = arith.constant 0 : i32
    return %c0_i32, %c0_i32_0 : i32, i32
  }
  func.func @transform_39(%arg0: i32, %arg1: i32) -> (i32, i32, i32) {
    %c0_i32 = arith.constant 0 : i32
    %c0_i32_0 = arith.constant 0 : i32
    return %arg0, %arg1, %c0_i32 : i32, i32, i32
  }
  func.func @transform_40(%arg0: i32, %arg1: i32) -> (i32, i32, i32) {
    %c0_i32 = arith.constant 0 : i32
    %c0_i32_0 = arith.constant 0 : i32
    return %arg0, %arg1, %c0_i32 : i32, i32, i32
  }
  func.func @transform_41(%arg0: i32, %arg1: i32) -> (i32, i32, i32) {
    %c0_i32 = arith.constant 0 : i32
    %c0_i32_0 = arith.constant 0 : i32
    %c0_i32_1 = arith.constant 0 : i32
    return %arg0, %c0_i32, %c0_i32_0 : i32, i32, i32
  }
}

</mosaic_0001>

<llo_original>
// kernel: tpu_custom_call.1
$region0: #{tpu_custom_call.1}
  #allocation0 [shape = 'u32[]', space=smem, size = 0x4, offset = 0x4, fixed_abs, tag = 'smem constant byte address 0x4 - core index']
  #allocation1 [shape = 'u32[72,128]{1,0:T(1,128)}', space=vmem, size = 0x9000, scoped, tag = 'internal scratch']
  #allocation2 [shape = 'f32[8,16]{1,0:T(8,128)}', space=vmem, size = 0x1000, scoped, tag = 'scratch operand']
  #allocation3 [shape = 'f32[8,16]{1,0:T(8,128)}', space=vmem, size = 0x1000, scoped, tag = 'scratch operand']
  #allocation4 [shape = 'f32[8,16]{1,0:T(8,128)}', space=vmem, size = 0x1000, scoped, tag = 'scratch operand']
  #allocation5 [shape = 'f32[1,64]{1,0:T(1,128)}', space=vmem, size = 0x200, scoped, tag = 'scratch operand']
  #allocation6 [shape = 'f32[1,8]{1,0:T(1,128)}', space=vmem, size = 0x200, scoped, tag = 'scratch operand']
  #allocation7 [shape = 'f32[1,8]{1,0:T(1,128)}', space=vmem, size = 0x200, scoped, tag = 'scratch operand']
  #allocation8 [shape = 'f32[1,8]{1,0:T(1,128)}', space=vmem, size = 0x200, scoped, tag = 'scratch operand']
  #allocation9 [shape = 'f32[1,8]{1,0:T(1,128)}', space=vmem, size = 0x200, scoped, tag = 'scratch operand']
  #allocation10 [shape = 'f32[1,1]{1,0:T(1,128)}', space=vmem, size = 0x200, scoped, tag = 'scratch operand']
  %s0 = inlined_call_operand.smem [shape: u32[42], index: -1, kind: input, shape index: {}]
  %s1 = sld [smem:[%s0]]
  %s2 = scalar_lea.smem %s0, 1
  %s3 = sld [smem:[%s2]]
  %s4 = scalar_lea.smem %s0, 2
  %s5 = sld [smem:[%s4]]
  %s6 = scalar_lea.smem %s0, 3
  %s7 = sld [smem:[%s6]]
  %s8 = scalar_lea.smem %s0, 4
  %s9 = sld [smem:[%s8]]
  %s10 = scalar_lea.smem %s0, 5
  %s11 = sld [smem:[%s10]]
  %s12 = scalar_lea.smem %s0, 6
  %s13 = sld [smem:[%s12]]
  %s14 = scalar_lea.smem %s0, 7
  %s15 = sld [smem:[%s14]]
  %s16 = scalar_lea.smem %s0, 8
  %s17 = sld [smem:[%s16]]
  %s18 = scalar_lea.smem %s0, 9
  %s19 = sld [smem:[%s18]]
  %s20 = scalar_lea.smem %s0, 10
  %s21 = sld [smem:[%s20]]
  %s22 = scalar_lea.smem %s0, 11
  %s23 = sld [smem:[%s22]]
  %s24 = scalar_lea.smem %s0, 12
  %s25 = sld [smem:[%s24]]
  %s26 = scalar_lea.smem %s0, 13
  %s27 = sld [smem:[%s26]]
  %s28 = scalar_lea.smem %s0, 14
  %s29 = sld [smem:[%s28]]
  %s30 = scalar_lea.smem %s0, 15
  %s31 = sld [smem:[%s30]]
  %s32 = scalar_lea.smem %s0, 16
  %s33 = sld [smem:[%s32]]
  %s34 = scalar_lea.smem %s0, 17
  %s35 = sld [smem:[%s34]]
  %s36 = scalar_lea.smem %s0, 18
  %s37 = sld [smem:[%s36]]
  %s38 = scalar_lea.smem %s0, 19
  %s39 = sld [smem:[%s38]]
  %s40 = scalar_lea.smem %s0, 20
  %s41 = sld [smem:[%s40]]
  %s42 = scalar_lea.smem %s0, 21
  %s43 = sld [smem:[%s42]]
  %s44 = scalar_lea.smem %s0, 22
  %s45 = sld [smem:[%s44]]
  %s46 = scalar_lea.smem %s0, 23
  %s47 = sld [smem:[%s46]]
  %s48 = scalar_lea.smem %s0, 24
  %s49 = sld [smem:[%s48]]
  %s50 = scalar_lea.smem %s0, 25
  %s51 = sld [smem:[%s50]]
  %s52 = scalar_lea.smem %s0, 26
  %s53 = sld [smem:[%s52]]
  %s54 = scalar_lea.smem %s0, 27
  %s55 = sld [smem:[%s54]]
  %s56 = scalar_lea.smem %s0, 28
  %s57 = sld [smem:[%s56]]
  %s58 = scalar_lea.smem %s0, 29
  %s59 = sld [smem:[%s58]]
  %s60 = scalar_lea.smem %s0, 30
  %s61 = sld [smem:[%s60]]
  %s62 = scalar_lea.smem %s0, 31
  %s63 = sld [smem:[%s62]]
  %s64 = scalar_lea.smem %s0, 32
  %s65 = sld [smem:[%s64]]
  %s66 = scalar_lea.smem %s0, 33
  %s67 = sld [smem:[%s66]]
  %s68 = scalar_lea.smem %s0, 34
  %s69 = sld [smem:[%s68]]
  %s70 = scalar_lea.smem %s0, 35
  %s71 = sld [smem:[%s70]]
  %s72 = scalar_lea.smem %s0, 36
  %s73 = sld [smem:[%s72]]
  %s74 = scalar_lea.smem %s0, 37
  %s75 = sld [smem:[%s74]]
  %s76 = scalar_lea.smem %s0, 38
  %s77 = sld [smem:[%s76]]
  %s78 = scalar_lea.smem %s0, 39
  %s79 = sld [smem:[%s78]]
  %s80 = scalar_lea.smem %s0, 40
  %s81 = sld [smem:[%s80]]
  %s82 = scalar_lea.smem %s0, 41
  %s83 = sld [smem:[%s82]]
  %84 = xla_tuple %s79, %s81, %s83
  %s85 = sld [smem:[#allocation0]]
  $region213: #{tpu_custom_call.1} parent=0
    _
  %s87 = ssub.s32 1, %s85
  %s88 = scalar_select 0, %s87, %s85
  $region1: #{tpu_custom_call.1} parent=0
    #allocation11 [shape = 'u8[8192]{0}', space=vmem, size = 0x2000, scoped, tag = 'output window, operand 0']
    #allocation12 [shape = 's32[2]{0}', space=sflag, size = 0x8, scoped, tag = 'scoped memory for tpu_custom_call.1']
    #allocation13 [shape = 'u8[1024]{0}', space=vmem, size = 0x400, scoped, tag = 'output window, operand 2']
    #allocation14 [shape = 's32[2]{0}', space=sflag, size = 0x8, scoped, tag = 'scoped memory for tpu_custom_call.1']
    %89 = vsyncpa [#allocation12], 0
    %s90 = scalar_lea.sflag [#allocation12], 1
    %91 = vsyncpa %s90, 0
    %92 = vsyncpa [#allocation14], 0
    %s93 = scalar_lea.sflag [#allocation14], 1
    %94 = vsyncpa %s93, 0
    loop: start=0, step=1, limit=4
    $region2: #{tpu_custom_call.1} parent=1 // loop_pre_header
      _
    $region3: #{tpu_custom_call.1} parent=1 // loop_header
      %s96 = sphi 0, %s100
      %p97 = scmp.ge.s32.totalorder %s96, 4
      %s103 = sphi 0, %s115
      %s104 = sphi 0, %s111
      %s105 = sphi 0, %s103
      %s106 = sphi 0, %s104
      %s107 = sphi 0, %s105
      %s108 = sphi 0, %s106
      %s118 = sphi 0, %s120
      %s121 = sphi 0, %s118
      %s122 = sphi 0, %s121
      %s138 = sphi 0, %s122
      %s146 = sphi 0, %s148
      %s149 = sphi 0, %s146
      %s150 = sphi 0, %s149
      %s166 = sphi 0, %s150
      %s172 = sphi 0, %s174
      %s175 = sphi 0, %s172
      %s176 = sphi 0, %s175
      %s192 = sphi 0, %s176
      %s198 = sphi 0, %s200
      %s201 = sphi 0, %s198
      %s202 = sphi 0, %s201
      %s218 = sphi 0, %s202
      %s222 = sphi 0, %s222
      %s224 = sphi 0, %s222
      %s225 = sphi 0, %s224
      %s239 = sphi 0, %s225
      %s243 = sphi 0, %s243
      %s245 = sphi 0, %s243
      %s246 = sphi 0, %s245
      %s260 = sphi 0, %s246
      %s264 = sphi 0, %s264
      %s266 = sphi 0, %s264
      %s267 = sphi 0, %s266
      %s281 = sphi 0, %s267
      %s285 = sphi 0, %s285
      %s287 = sphi 0, %s285
      %s288 = sphi 0, %s287
      %s302 = sphi 0, %s288
      %s306 = sphi 0, %s306
      %s308 = sphi 0, %s306
      %s309 = sphi 0, %s308
      %s323 = sphi 0, %s309
      %s327 = sphi 0, %s327
      %s329 = sphi 0, %s327
      %s330 = sphi 0, %s329
      %s344 = sphi 0, %s330
      %s348 = sphi 0, %s348
      %s350 = sphi 0, %s348
      %s351 = sphi 0, %s350
      %s365 = sphi 0, %s351
      %s369 = sphi 0, %s369
      %s371 = sphi 0, %s369
      %s372 = sphi 0, %s371
      %s386 = sphi 0, %s372
      %s390 = sphi 0, %s390
      %s392 = sphi 0, %s390
      %s393 = sphi 0, %s392
      %s407 = sphi 0, %s393
      %s411 = sphi 0, %s411
      %s413 = sphi 0, %s411
      %s414 = sphi 0, %s413
      %s428 = sphi 0, %s414
      %s432 = sphi 0, %s432
      %s434 = sphi 0, %s432
      %s435 = sphi 0, %s434
      %s449 = sphi 0, %s435
      %s453 = sphi 0, %s453
      %s455 = sphi 0, %s453
      %s456 = sphi 0, %s455
      %s470 = sphi 0, %s456
      %s474 = sphi 0, %s474
      %s476 = sphi 0, %s474
      %s477 = sphi 0, %s476
      %s491 = sphi 0, %s477
      %s495 = sphi 0, %s495
      %s497 = sphi 0, %s495
      %s498 = sphi 0, %s497
      %s512 = sphi 0, %s498
      %s516 = sphi 0, %s516
      %s518 = sphi 0, %s516
      %s519 = sphi 0, %s518
      %s533 = sphi 0, %s519
      %s537 = sphi 0, %s537
      %s539 = sphi 0, %s537
      %s540 = sphi 0, %s539
      %s554 = sphi 0, %s540
      %s558 = sphi 0, %s558
      %s560 = sphi 0, %s558
      %s561 = sphi 0, %s560
      %s575 = sphi 0, %s561
      %s579 = sphi 0, %s579
      %s581 = sphi 0, %s579
      %s582 = sphi 0, %s581
      %s596 = sphi 0, %s582
      %s600 = sphi 0, %s600
      %s602 = sphi 0, %s600
      %s603 = sphi 0, %s602
      %s617 = sphi 0, %s603
      %s621 = sphi 0, %s621
      %s623 = sphi 0, %s621
      %s624 = sphi 0, %s623
      %s638 = sphi 0, %s624
      %s642 = sphi 0, %s642
      %s644 = sphi 0, %s642
      %s645 = sphi 0, %s644
      %s659 = sphi 0, %s645
      %s663 = sphi 0, %s663
      %s665 = sphi 0, %s663
      %s666 = sphi 0, %s665
      %s680 = sphi 0, %s666
      %s684 = sphi 0, %s684
      %s686 = sphi 0, %s684
      %s687 = sphi 0, %s686
      %s701 = sphi 0, %s687
      %s705 = sphi 0, %s705
      %s707 = sphi 0, %s705
      %s708 = sphi 0, %s707
      %s722 = sphi 0, %s708
      %s726 = sphi 0, %s726
      %s728 = sphi 0, %s726
      %s729 = sphi 0, %s728
      %s743 = sphi 0, %s729
      %s747 = sphi 0, %s747
      %s749 = sphi 0, %s747
      %s750 = sphi 0, %s749
      %s764 = sphi 0, %s750
      %s768 = sphi 0, %s768
      %s770 = sphi 0, %s768
      %s771 = sphi 0, %s770
      %s785 = sphi 0, %s771
      %s789 = sphi 0, %s789
      %s791 = sphi 0, %s789
      %s792 = sphi 0, %s791
      %s806 = sphi 0, %s792
      %s810 = sphi 0, %s810
      %s812 = sphi 0, %s810
      %s813 = sphi 0, %s812
      %s827 = sphi 0, %s813
      %s831 = sphi 0, %s831
      %s833 = sphi 0, %s831
      %s834 = sphi 0, %s833
      %s848 = sphi 0, %s834
      %s852 = sphi 0, %s852
      %s854 = sphi 0, %s852
      %s855 = sphi 0, %s854
      %s869 = sphi 0, %s855
      %s873 = sphi 0, %s873
      %s875 = sphi 0, %s873
      %s876 = sphi 0, %s875
      %s890 = sphi 0, %s876
      %s894 = sphi 0, %s894
      %s896 = sphi 0, %s894
      %s897 = sphi 0, %s896
      %s911 = sphi 0, %s897
      %s915 = sphi 0, %s915
      %s917 = sphi 0, %s915
      %s918 = sphi 0, %s917
      %s932 = sphi 0, %s918
      %s936 = sphi 0, %s936
      %s938 = sphi 0, %s936
      %s939 = sphi 0, %s938
      %s953 = sphi 0, %s939
      %s961 = sphi 0, %s963
      %s964 = sphi 0, %s961
      %s965 = sphi 0, %s964
      %s981 = sphi 0, %s965
      %s989 = sphi 0, %s991
      %s992 = sphi 0, %s989
      %s993 = sphi 0, %s992
      %s1009 = sphi 0, %s993
      %s1015 = sphi 0, %s1017
      %s1018 = sphi 0, %s1015
      %s1019 = sphi 0, %s1018
      %s1035 = sphi 0, %s1019
    $region4: #{tpu_custom_call.1} parent=1 // loop_header_branch
      %99 = sbr.rel (%p97) target = $region8
    $region5: #{tpu_custom_call.1} parent=1 // loop_body
      %s101 = ssub.s32 %s96, 1
      %s102 = ssub.s32 %s96, 2
      %s109 = sadd.s32 1, %s104
      %p110 = scmp.ge.s32.totalorder %s109, 1
      %s111 = scalar_select %p110, 0, %s109
      %s112 = sadd.s32 1, %s103
      %s113 = scalar_select %p110, %s112, %s103
      %p114 = scmp.ge.s32.totalorder %s113, 2
      %s115 = scalar_select %p114, 0, %s113
      %s116 = ssub.s32 %s103, %s115
      %p117 = scmp.eq.s32.totalorder %s116, 0
      %s119 = sadd.s32 %s118, 1
      %s120 = scalar_select %p117, %s118, %s119
      %p123 = pneg %p117
      %p124 = scmp.eq.s32.totalorder %s96, 1
      %p125 = por %p123, %p124
      %p126 = scmp.ne.s32.totalorder %s118, %s121
      %p127 = scmp.eq.s32.totalorder %s96, 0
      %p128 = por %p126, %p127
      %p129 = scmp.ne.s32.totalorder %s118, %s121
      %p130 = scmp.eq.s32.totalorder %s101, 1
      %p131 = por %p129, %p130
      %p132 = scmp.ne.s32.totalorder %s121, %s122
      %p133 = scmp.eq.s32.totalorder %s101, 0
      %p134 = por %p132, %p133
      %p135 = scmp.ne.s32.totalorder %s121, %s122
      %p136 = scmp.eq.s32.totalorder %s102, 1
      %p137 = por %p135, %p136
      %p139 = scmp.ne.s32.totalorder %s122, %s138
      %p140 = scmp.eq.s32.totalorder %s102, 0
      %p141 = por %p139, %p140
      %s142 = ssub.s32 %s103, %s115
      %s143 = ssub.s32 %s104, %s111
      %s144 = sor.u32 %s142, %s143
      %p145 = scmp.eq.s32.totalorder %s144, 0
      %s147 = sadd.s32 %s146, 1
      %s148 = scalar_select %p145, %s146, %s147
      %p151 = pneg %p145
      %p152 = scmp.eq.s32.totalorder %s96, 1
      %p153 = por %p151, %p152
      %p154 = scmp.ne.s32.totalorder %s146, %s149
      %p155 = scmp.eq.s32.totalorder %s96, 0
      %p156 = por %p154, %p155
      %p157 = scmp.ne.s32.totalorder %s146, %s149
      %p158 = scmp.eq.s32.totalorder %s101, 1
      %p159 = por %p157, %p158
      %p160 = scmp.ne.s32.totalorder %s149, %s150
      %p161 = scmp.eq.s32.totalorder %s101, 0
      %p162 = por %p160, %p161
      %p163 = scmp.ne.s32.totalorder %s149, %s150
      %p164 = scmp.eq.s32.totalorder %s102, 1
      %p165 = por %p163, %p164
      %p167 = scmp.ne.s32.totalorder %s150, %s166
      %p168 = scmp.eq.s32.totalorder %s102, 0
      %p169 = por %p167, %p168
      %s170 = ssub.s32 %s103, %s115
      %p171 = scmp.eq.s32.totalorder %s170, 0
      %s173 = sadd.s32 %s172, 1
      %s174 = scalar_select %p171, %s172, %s173
      %p177 = pneg %p171
      %p178 = scmp.eq.s32.totalorder %s96, 1
      %p179 = por %p177, %p178
      %p180 = scmp.ne.s32.totalorder %s172, %s175
      %p181 = scmp.eq.s32.totalorder %s96, 0
      %p182 = por %p180, %p181
      %p183 = scmp.ne.s32.totalorder %s172, %s175
      %p184 = scmp.eq.s32.totalorder %s101, 1
      %p185 = por %p183, %p184
      %p186 = scmp.ne.s32.totalorder %s175, %s176
      %p187 = scmp.eq.s32.totalorder %s101, 0
      %p188 = por %p186, %p187
      %p189 = scmp.ne.s32.totalorder %s175, %s176
      %p190 = scmp.eq.s32.totalorder %s102, 1
      %p191 = por %p189, %p190
      %p193 = scmp.ne.s32.totalorder %s176, %s192
      %p194 = scmp.eq.s32.totalorder %s102, 0
      %p195 = por %p193, %p194
      %s196 = ssub.s32 %s103, %s115
      %p197 = scmp.eq.s32.totalorder %s196, 0
      %s199 = sadd.s32 %s198, 1
      %s200 = scalar_select %p197, %s198, %s199
      %p203 = pneg %p197
      %p204 = scmp.eq.s32.totalorder %s96, 1
      %p205 = por %p203, %p204
      %p206 = scmp.ne.s32.totalorder %s198, %s201
      %p207 = scmp.eq.s32.totalorder %s96, 0
      %p208 = por %p206, %p207
      %p209 = scmp.ne.s32.totalorder %s198, %s201
      %p210 = scmp.eq.s32.totalorder %s101, 1
      %p211 = por %p209, %p210
      %p212 = scmp.ne.s32.totalorder %s201, %s202
      %p213 = scmp.eq.s32.totalorder %s101, 0
      %p214 = por %p212, %p213
      %p215 = scmp.ne.s32.totalorder %s201, %s202
      %p216 = scmp.eq.s32.totalorder %s102, 1
      %p217 = por %p215, %p216
      %p219 = scmp.ne.s32.totalorder %s202, %s218
      %p220 = scmp.eq.s32.totalorder %s102, 0
      %p221 = por %p219, %p220
      %s223 = sadd.s32 %s222, 1
      %p226 = scmp.eq.s32.totalorder %s96, 1
      %p227 = scmp.ne.s32.totalorder %s222, %s224
      %p228 = scmp.eq.s32.totalorder %s96, 0
      %p229 = por %p227, %p228
      %p230 = scmp.ne.s32.totalorder %s222, %s224
      %p231 = scmp.eq.s32.totalorder %s101, 1
      %p232 = por %p230, %p231
      %p233 = scmp.ne.s32.totalorder %s224, %s225
      %p234 = scmp.eq.s32.totalorder %s101, 0
      %p235 = por %p233, %p234
      %p236 = scmp.ne.s32.totalorder %s224, %s225
      %p237 = scmp.eq.s32.totalorder %s102, 1
      %p238 = por %p236, %p237
      %p240 = scmp.ne.s32.totalorder %s225, %s239
      %p241 = scmp.eq.s32.totalorder %s102, 0
      %p242 = por %p240, %p241
      %s244 = sadd.s32 %s243, 1
      %p247 = scmp.eq.s32.totalorder %s96, 1
      %p248 = scmp.ne.s32.totalorder %s243, %s245
      %p249 = scmp.eq.s32.totalorder %s96, 0
      %p250 = por %p248, %p249
      %p251 = scmp.ne.s32.totalorder %s243, %s245
      %p252 = scmp.eq.s32.totalorder %s101, 1
      %p253 = por %p251, %p252
      %p254 = scmp.ne.s32.totalorder %s245, %s246
      %p255 = scmp.eq.s32.totalorder %s101, 0
      %p256 = por %p254, %p255
      %p257 = scmp.ne.s32.totalorder %s245, %s246
      %p258 = scmp.eq.s32.totalorder %s102, 1
      %p259 = por %p257, %p258
      %p261 = scmp.ne.s32.totalorder %s246, %s260
      %p262 = scmp.eq.s32.totalorder %s102, 0
      %p263 = por %p261, %p262
      %s265 = sadd.s32 %s264, 1
      %p268 = scmp.eq.s32.totalorder %s96, 1
      %p269 = scmp.ne.s32.totalorder %s264, %s266
      %p270 = scmp.eq.s32.totalorder %s96, 0
      %p271 = por %p269, %p270
      %p272 = scmp.ne.s32.totalorder %s264, %s266
      %p273 = scmp.eq.s32.totalorder %s101, 1
      %p274 = por %p272, %p273
      %p275 = scmp.ne.s32.totalorder %s266, %s267
      %p276 = scmp.eq.s32.totalorder %s101, 0
      %p277 = por %p275, %p276
      %p278 = scmp.ne.s32.totalorder %s266, %s267
      %p279 = scmp.eq.s32.totalorder %s102, 1
      %p280 = por %p278, %p279
      %p282 = scmp.ne.s32.totalorder %s267, %s281
      %p283 = scmp.eq.s32.totalorder %s102, 0
      %p284 = por %p282, %p283
      %s286 = sadd.s32 %s285, 1
      %p289 = scmp.eq.s32.totalorder %s96, 1
      %p290 = scmp.ne.s32.totalorder %s285, %s287
      %p291 = scmp.eq.s32.totalorder %s96, 0
      %p292 = por %p290, %p291
      %p293 = scmp.ne.s32.totalorder %s285, %s287
      %p294 = scmp.eq.s32.totalorder %s101, 1
      %p295 = por %p293, %p294
      %p296 = scmp.ne.s32.totalorder %s287, %s288
      %p297 = scmp.eq.s32.totalorder %s101, 0
      %p298 = por %p296, %p297
      %p299 = scmp.ne.s32.totalorder %s287, %s288
      %p300 = scmp.eq.s32.totalorder %s102, 1
      %p301 = por %p299, %p300
      %p303 = scmp.ne.s32.totalorder %s288, %s302
      %p304 = scmp.eq.s32.totalorder %s102, 0
      %p305 = por %p303, %p304
      %s307 = sadd.s32 %s306, 1
      %p310 = scmp.eq.s32.totalorder %s96, 1
      %p311 = scmp.ne.s32.totalorder %s306, %s308
      %p312 = scmp.eq.s32.totalorder %s96, 0
      %p313 = por %p311, %p312
      %p314 = scmp.ne.s32.totalorder %s306, %s308
      %p315 = scmp.eq.s32.totalorder %s101, 1
      %p316 = por %p314, %p315
      %p317 = scmp.ne.s32.totalorder %s308, %s309
      %p318 = scmp.eq.s32.totalorder %s101, 0
      %p319 = por %p317, %p318
      %p320 = scmp.ne.s32.totalorder %s308, %s309
      %p321 = scmp.eq.s32.totalorder %s102, 1
      %p322 = por %p320, %p321
      %p324 = scmp.ne.s32.totalorder %s309, %s323
      %p325 = scmp.eq.s32.totalorder %s102, 0
      %p326 = por %p324, %p325
      %s328 = sadd.s32 %s327, 1
      %p331 = scmp.eq.s32.totalorder %s96, 1
      %p332 = scmp.ne.s32.totalorder %s327, %s329
      %p333 = scmp.eq.s32.totalorder %s96, 0
      %p334 = por %p332, %p333
      %p335 = scmp.ne.s32.totalorder %s327, %s329
      %p336 = scmp.eq.s32.totalorder %s101, 1
      %p337 = por %p335, %p336
      %p338 = scmp.ne.s32.totalorder %s329, %s330
      %p339 = scmp.eq.s32.totalorder %s101, 0
      %p340 = por %p338, %p339
      %p341 = scmp.ne.s32.totalorder %s329, %s330
      %p342 = scmp.eq.s32.totalorder %s102, 1
      %p343 = por %p341, %p342
      %p345 = scmp.ne.s32.totalorder %s330, %s344
      %p346 = scmp.eq.s32.totalorder %s102, 0
      %p347 = por %p345, %p346
      %s349 = sadd.s32 %s348, 1
      %p352 = scmp.eq.s32.totalorder %s96, 1
      %p353 = scmp.ne.s32.totalorder %s348, %s350
      %p354 = scmp.eq.s32.totalorder %s96, 0
      %p355 = por %p353, %p354
      %p356 = scmp.ne.s32.totalorder %s348, %s350
      %p357 = scmp.eq.s32.totalorder %s101, 1
      %p358 = por %p356, %p357
      %p359 = scmp.ne.s32.totalorder %s350, %s351
      %p360 = scmp.eq.s32.totalorder %s101, 0
      %p361 = por %p359, %p360
      %p362 = scmp.ne.s32.totalorder %s350, %s351
      %p363 = scmp.eq.s32.totalorder %s102, 1
      %p364 = por %p362, %p363
      %p366 = scmp.ne.s32.totalorder %s351, %s365
      %p367 = scmp.eq.s32.totalorder %s102, 0
      %p368 = por %p366, %p367
      %s370 = sadd.s32 %s369, 1
      %p373 = scmp.eq.s32.totalorder %s96, 1
      %p374 = scmp.ne.s32.totalorder %s369, %s371
      %p375 = scmp.eq.s32.totalorder %s96, 0
      %p376 = por %p374, %p375
      %p377 = scmp.ne.s32.totalorder %s369, %s371
      %p378 = scmp.eq.s32.totalorder %s101, 1
      %p379 = por %p377, %p378
      %p380 = scmp.ne.s32.totalorder %s371, %s372
      %p381 = scmp.eq.s32.totalorder %s101, 0
      %p382 = por %p380, %p381
      %p383 = scmp.ne.s32.totalorder %s371, %s372
      %p384 = scmp.eq.s32.totalorder %s102, 1
      %p385 = por %p383, %p384
      %p387 = scmp.ne.s32.totalorder %s372, %s386
      %p388 = scmp.eq.s32.totalorder %s102, 0
      %p389 = por %p387, %p388
      %s391 = sadd.s32 %s390, 1
      %p394 = scmp.eq.s32.totalorder %s96, 1
      %p395 = scmp.ne.s32.totalorder %s390, %s392
      %p396 = scmp.eq.s32.totalorder %s96, 0
      %p397 = por %p395, %p396
      %p398 = scmp.ne.s32.totalorder %s390, %s392
      %p399 = scmp.eq.s32.totalorder %s101, 1
      %p400 = por %p398, %p399
      %p401 = scmp.ne.s32.totalorder %s392, %s393
      %p402 = scmp.eq.s32.totalorder %s101, 0
      %p403 = por %p401, %p402
      %p404 = scmp.ne.s32.totalorder %s392, %s393
      %p405 = scmp.eq.s32.totalorder %s102, 1
      %p406 = por %p404, %p405
      %p408 = scmp.ne.s32.totalorder %s393, %s407
      %p409 = scmp.eq.s32.totalorder %s102, 0
      %p410 = por %p408, %p409
      %s412 = sadd.s32 %s411, 1
      %p415 = scmp.eq.s32.totalorder %s96, 1
      %p416 = scmp.ne.s32.totalorder %s411, %s413
      %p417 = scmp.eq.s32.totalorder %s96, 0
      %p418 = por %p416, %p417
      %p419 = scmp.ne.s32.totalorder %s411, %s413
      %p420 = scmp.eq.s32.totalorder %s101, 1
      %p421 = por %p419, %p420
      %p422 = scmp.ne.s32.totalorder %s413, %s414
      %p423 = scmp.eq.s32.totalorder %s101, 0
      %p424 = por %p422, %p423
      %p425 = scmp.ne.s32.totalorder %s413, %s414
      %p426 = scmp.eq.s32.totalorder %s102, 1
      %p427 = por %p425, %p426
      %p429 = scmp.ne.s32.totalorder %s414, %s428
      %p430 = scmp.eq.s32.totalorder %s102, 0
      %p431 = por %p429, %p430
      %s433 = sadd.s32 %s432, 1
      %p436 = scmp.eq.s32.totalorder %s96, 1
      %p437 = scmp.ne.s32.totalorder %s432, %s434
      %p438 = scmp.eq.s32.totalorder %s96, 0
      %p439 = por %p437, %p438
      %p440 = scmp.ne.s32.totalorder %s432, %s434
      %p441 = scmp.eq.s32.totalorder %s101, 1
      %p442 = por %p440, %p441
      %p443 = scmp.ne.s32.totalorder %s434, %s435
      %p444 = scmp.eq.s32.totalorder %s101, 0
      %p445 = por %p443, %p444
      %p446 = scmp.ne.s32.totalorder %s434, %s435
      %p447 = scmp.eq.s32.totalorder %s102, 1
      %p448 = por %p446, %p447
      %p450 = scmp.ne.s32.totalorder %s435, %s449
      %p451 = scmp.eq.s32.totalorder %s102, 0
      %p452 = por %p450, %p451
      %s454 = sadd.s32 %s453, 1
      %p457 = scmp.eq.s32.totalorder %s96, 1
      %p458 = scmp.ne.s32.totalorder %s453, %s455
      %p459 = scmp.eq.s32.totalorder %s96, 0
      %p460 = por %p458, %p459
      %p461 = scmp.ne.s32.totalorder %s453, %s455
      %p462 = scmp.eq.s32.totalorder %s101, 1
      %p463 = por %p461, %p462
      %p464 = scmp.ne.s32.totalorder %s455, %s456
      %p465 = scmp.eq.s32.totalorder %s101, 0
      %p466 = por %p464, %p465
      %p467 = scmp.ne.s32.totalorder %s455, %s456
      %p468 = scmp.eq.s32.totalorder %s102, 1
      %p469 = por %p467, %p468
      %p471 = scmp.ne.s32.totalorder %s456, %s470
      %p472 = scmp.eq.s32.totalorder %s102, 0
      %p473 = por %p471, %p472
      %s475 = sadd.s32 %s474, 1
      %p478 = scmp.eq.s32.totalorder %s96, 1
      %p479 = scmp.ne.s32.totalorder %s474, %s476
      %p480 = scmp.eq.s32.totalorder %s96, 0
      %p481 = por %p479, %p480
      %p482 = scmp.ne.s32.totalorder %s474, %s476
      %p483 = scmp.eq.s32.totalorder %s101, 1
      %p484 = por %p482, %p483
      %p485 = scmp.ne.s32.totalorder %s476, %s477
      %p486 = scmp.eq.s32.totalorder %s101, 0
      %p487 = por %p485, %p486
      %p488 = scmp.ne.s32.totalorder %s476, %s477
      %p489 = scmp.eq.s32.totalorder %s102, 1
      %p490 = por %p488, %p489
      %p492 = scmp.ne.s32.totalorder %s477, %s491
      %p493 = scmp.eq.s32.totalorder %s102, 0
      %p494 = por %p492, %p493
      %s496 = sadd.s32 %s495, 1
      %p499 = scmp.eq.s32.totalorder %s96, 1
      %p500 = scmp.ne.s32.totalorder %s495, %s497
      %p501 = scmp.eq.s32.totalorder %s96, 0
      %p502 = por %p500, %p501
      %p503 = scmp.ne.s32.totalorder %s495, %s497
      %p504 = scmp.eq.s32.totalorder %s101, 1
      %p505 = por %p503, %p504
      %p506 = scmp.ne.s32.totalorder %s497, %s498
      %p507 = scmp.eq.s32.totalorder %s101, 0
      %p508 = por %p506, %p507
      %p509 = scmp.ne.s32.totalorder %s497, %s498
      %p510 = scmp.eq.s32.totalorder %s102, 1
      %p511 = por %p509, %p510
      %p513 = scmp.ne.s32.totalorder %s498, %s512
      %p514 = scmp.eq.s32.totalorder %s102, 0
      %p515 = por %p513, %p514
      %s517 = sadd.s32 %s516, 1
      %p520 = scmp.eq.s32.totalorder %s96, 1
      %p521 = scmp.ne.s32.totalorder %s516, %s518
      %p522 = scmp.eq.s32.totalorder %s96, 0
      %p523 = por %p521, %p522
      %p524 = scmp.ne.s32.totalorder %s516, %s518
      %p525 = scmp.eq.s32.totalorder %s101, 1
      %p526 = por %p524, %p525
      %p527 = scmp.ne.s32.totalorder %s518, %s519
      %p528 = scmp.eq.s32.totalorder %s101, 0
      %p529 = por %p527, %p528
      %p530 = scmp.ne.s32.totalorder %s518, %s519
      %p531 = scmp.eq.s32.totalorder %s102, 1
      %p532 = por %p530, %p531
      %p534 = scmp.ne.s32.totalorder %s519, %s533
      %p535 = scmp.eq.s32.totalorder %s102, 0
      %p536 = por %p534, %p535
      %s538 = sadd.s32 %s537, 1
      %p541 = scmp.eq.s32.totalorder %s96, 1
      %p542 = scmp.ne.s32.totalorder %s537, %s539
      %p543 = scmp.eq.s32.totalorder %s96, 0
      %p544 = por %p542, %p543
      %p545 = scmp.ne.s32.totalorder %s537, %s539
      %p546 = scmp.eq.s32.totalorder %s101, 1
      %p547 = por %p545, %p546
      %p548 = scmp.ne.s32.totalorder %s539, %s540
      %p549 = scmp.eq.s32.totalorder %s101, 0
      %p550 = por %p548, %p549
      %p551 = scmp.ne.s32.totalorder %s539, %s540
      %p552 = scmp.eq.s32.totalorder %s102, 1
      %p553 = por %p551, %p552
      %p555 = scmp.ne.s32.totalorder %s540, %s554
      %p556 = scmp.eq.s32.totalorder %s102, 0
      %p557 = por %p555, %p556
      %s559 = sadd.s32 %s558, 1
      %p562 = scmp.eq.s32.totalorder %s96, 1
      %p563 = scmp.ne.s32.totalorder %s558, %s560
      %p564 = scmp.eq.s32.totalorder %s96, 0
      %p565 = por %p563, %p564
      %p566 = scmp.ne.s32.totalorder %s558, %s560
      %p567 = scmp.eq.s32.totalorder %s101, 1
      %p568 = por %p566, %p567
      %p569 = scmp.ne.s32.totalorder %s560, %s561
      %p570 = scmp.eq.s32.totalorder %s101, 0
      %p571 = por %p569, %p570
      %p572 = scmp.ne.s32.totalorder %s560, %s561
      %p573 = scmp.eq.s32.totalorder %s102, 1
      %p574 = por %p572, %p573
      %p576 = scmp.ne.s32.totalorder %s561, %s575
      %p577 = scmp.eq.s32.totalorder %s102, 0
      %p578 = por %p576, %p577
      %s580 = sadd.s32 %s579, 1
      %p583 = scmp.eq.s32.totalorder %s96, 1
      %p584 = scmp.ne.s32.totalorder %s579, %s581
      %p585 = scmp.eq.s32.totalorder %s96, 0
      %p586 = por %p584, %p585
      %p587 = scmp.ne.s32.totalorder %s579, %s581
      %p588 = scmp.eq.s32.totalorder %s101, 1
      %p589 = por %p587, %p588
      %p590 = scmp.ne.s32.totalorder %s581, %s582
      %p591 = scmp.eq.s32.totalorder %s101, 0
      %p592 = por %p590, %p591
      %p593 = scmp.ne.s32.totalorder %s581, %s582
      %p594 = scmp.eq.s32.totalorder %s102, 1
      %p595 = por %p593, %p594
      %p597 = scmp.ne.s32.totalorder %s582, %s596
      %p598 = scmp.eq.s32.totalorder %s102, 0
      %p599 = por %p597, %p598
      %s601 = sadd.s32 %s600, 1
      %p604 = scmp.eq.s32.totalorder %s96, 1
      %p605 = scmp.ne.s32.totalorder %s600, %s602
      %p606 = scmp.eq.s32.totalorder %s96, 0
      %p607 = por %p605, %p606
      %p608 = scmp.ne.s32.totalorder %s600, %s602
      %p609 = scmp.eq.s32.totalorder %s101, 1
      %p610 = por %p608, %p609
      %p611 = scmp.ne.s32.totalorder %s602, %s603
      %p612 = scmp.eq.s32.totalorder %s101, 0
      %p613 = por %p611, %p612
      %p614 = scmp.ne.s32.totalorder %s602, %s603
      %p615 = scmp.eq.s32.totalorder %s102, 1
      %p616 = por %p614, %p615
      %p618 = scmp.ne.s32.totalorder %s603, %s617
      %p619 = scmp.eq.s32.totalorder %s102, 0
      %p620 = por %p618, %p619
      %s622 = sadd.s32 %s621, 1
      %p625 = scmp.eq.s32.totalorder %s96, 1
      %p626 = scmp.ne.s32.totalorder %s621, %s623
      %p627 = scmp.eq.s32.totalorder %s96, 0
      %p628 = por %p626, %p627
      %p629 = scmp.ne.s32.totalorder %s621, %s623
      %p630 = scmp.eq.s32.totalorder %s101, 1
      %p631 = por %p629, %p630
      %p632 = scmp.ne.s32.totalorder %s623, %s624
      %p633 = scmp.eq.s32.totalorder %s101, 0
      %p634 = por %p632, %p633
      %p635 = scmp.ne.s32.totalorder %s623, %s624
      %p636 = scmp.eq.s32.totalorder %s102, 1
      %p637 = por %p635, %p636
      %p639 = scmp.ne.s32.totalorder %s624, %s638
      %p640 = scmp.eq.s32.totalorder %s102, 0
      %p641 = por %p639, %p640
      %s643 = sadd.s32 %s642, 1
      %p646 = scmp.eq.s32.totalorder %s96, 1
      %p647 = scmp.ne.s32.totalorder %s642, %s644
      %p648 = scmp.eq.s32.totalorder %s96, 0
      %p649 = por %p647, %p648
      %p650 = scmp.ne.s32.totalorder %s642, %s644
      %p651 = scmp.eq.s32.totalorder %s101, 1
      %p652 = por %p650, %p651
      %p653 = scmp.ne.s32.totalorder %s644, %s645
      %p654 = scmp.eq.s32.totalorder %s101, 0
      %p655 = por %p653, %p654
      %p656 = scmp.ne.s32.totalorder %s644, %s645
      %p657 = scmp.eq.s32.totalorder %s102, 1
      %p658 = por %p656, %p657
      %p660 = scmp.ne.s32.totalorder %s645, %s659
      %p661 = scmp.eq.s32.totalorder %s102, 0
      %p662 = por %p660, %p661
      %s664 = sadd.s32 %s663, 1
      %p667 = scmp.eq.s32.totalorder %s96, 1
      %p668 = scmp.ne.s32.totalorder %s663, %s665
      %p669 = scmp.eq.s32.totalorder %s96, 0
      %p670 = por %p668, %p669
      %p671 = scmp.ne.s32.totalorder %s663, %s665
      %p672 = scmp.eq.s32.totalorder %s101, 1
      %p673 = por %p671, %p672
      %p674 = scmp.ne.s32.totalorder %s665, %s666
      %p675 = scmp.eq.s32.totalorder %s101, 0
      %p676 = por %p674, %p675
      %p677 = scmp.ne.s32.totalorder %s665, %s666
      %p678 = scmp.eq.s32.totalorder %s102, 1
      %p679 = por %p677, %p678
      %p681 = scmp.ne.s32.totalorder %s666, %s680
      %p682 = scmp.eq.s32.totalorder %s102, 0
      %p683 = por %p681, %p682
      %s685 = sadd.s32 %s684, 1
      %p688 = scmp.eq.s32.totalorder %s96, 1
      %p689 = scmp.ne.s32.totalorder %s684, %s686
      %p690 = scmp.eq.s32.totalorder %s96, 0
      %p691 = por %p689, %p690
      %p692 = scmp.ne.s32.totalorder %s684, %s686
      %p693 = scmp.eq.s32.totalorder %s101, 1
      %p694 = por %p692, %p693
      %p695 = scmp.ne.s32.totalorder %s686, %s687
      %p696 = scmp.eq.s32.totalorder %s101, 0
      %p697 = por %p695, %p696
      %p698 = scmp.ne.s32.totalorder %s686, %s687
      %p699 = scmp.eq.s32.totalorder %s102, 1
      %p700 = por %p698, %p699
      %p702 = scmp.ne.s32.totalorder %s687, %s701
      %p703 = scmp.eq.s32.totalorder %s102, 0
      %p704 = por %p702, %p703
      %s706 = sadd.s32 %s705, 1
      %p709 = scmp.eq.s32.totalorder %s96, 1
      %p710 = scmp.ne.s32.totalorder %s705, %s707
      %p711 = scmp.eq.s32.totalorder %s96, 0
      %p712 = por %p710, %p711
      %p713 = scmp.ne.s32.totalorder %s705, %s707
      %p714 = scmp.eq.s32.totalorder %s101, 1
      %p715 = por %p713, %p714
      %p716 = scmp.ne.s32.totalorder %s707, %s708
      %p717 = scmp.eq.s32.totalorder %s101, 0
      %p718 = por %p716, %p717
      %p719 = scmp.ne.s32.totalorder %s707, %s708
      %p720 = scmp.eq.s32.totalorder %s102, 1
      %p721 = por %p719, %p720
      %p723 = scmp.ne.s32.totalorder %s708, %s722
      %p724 = scmp.eq.s32.totalorder %s102, 0
      %p725 = por %p723, %p724
      %s727 = sadd.s32 %s726, 1
      %p730 = scmp.eq.s32.totalorder %s96, 1
      %p731 = scmp.ne.s32.totalorder %s726, %s728
      %p732 = scmp.eq.s32.totalorder %s96, 0
      %p733 = por %p731, %p732
      %p734 = scmp.ne.s32.totalorder %s726, %s728
      %p735 = scmp.eq.s32.totalorder %s101, 1
      %p736 = por %p734, %p735
      %p737 = scmp.ne.s32.totalorder %s728, %s729
      %p738 = scmp.eq.s32.totalorder %s101, 0
      %p739 = por %p737, %p738
      %p740 = scmp.ne.s32.totalorder %s728, %s729
      %p741 = scmp.eq.s32.totalorder %s102, 1
      %p742 = por %p740, %p741
      %p744 = scmp.ne.s32.totalorder %s729, %s743
      %p745 = scmp.eq.s32.totalorder %s102, 0
      %p746 = por %p744, %p745
      %s748 = sadd.s32 %s747, 1
      %p751 = scmp.eq.s32.totalorder %s96, 1
      %p752 = scmp.ne.s32.totalorder %s747, %s749
      %p753 = scmp.eq.s32.totalorder %s96, 0
      %p754 = por %p752, %p753
      %p755 = scmp.ne.s32.totalorder %s747, %s749
      %p756 = scmp.eq.s32.totalorder %s101, 1
      %p757 = por %p755, %p756
      %p758 = scmp.ne.s32.totalorder %s749, %s750
      %p759 = scmp.eq.s32.totalorder %s101, 0
      %p760 = por %p758, %p759
      %p761 = scmp.ne.s32.totalorder %s749, %s750
      %p762 = scmp.eq.s32.totalorder %s102, 1
      %p763 = por %p761, %p762
      %p765 = scmp.ne.s32.totalorder %s750, %s764
      %p766 = scmp.eq.s32.totalorder %s102, 0
      %p767 = por %p765, %p766
      %s769 = sadd.s32 %s768, 1
      %p772 = scmp.eq.s32.totalorder %s96, 1
      %p773 = scmp.ne.s32.totalorder %s768, %s770
      %p774 = scmp.eq.s32.totalorder %s96, 0
      %p775 = por %p773, %p774
      %p776 = scmp.ne.s32.totalorder %s768, %s770
      %p777 = scmp.eq.s32.totalorder %s101, 1
      %p778 = por %p776, %p777
      %p779 = scmp.ne.s32.totalorder %s770, %s771
      %p780 = scmp.eq.s32.totalorder %s101, 0
      %p781 = por %p779, %p780
      %p782 = scmp.ne.s32.totalorder %s770, %s771
      %p783 = scmp.eq.s32.totalorder %s102, 1
      %p784 = por %p782, %p783
      %p786 = scmp.ne.s32.totalorder %s771, %s785
      %p787 = scmp.eq.s32.totalorder %s102, 0
      %p788 = por %p786, %p787
      %s790 = sadd.s32 %s789, 1
      %p793 = scmp.eq.s32.totalorder %s96, 1
      %p794 = scmp.ne.s32.totalorder %s789, %s791
      %p795 = scmp.eq.s32.totalorder %s96, 0
      %p796 = por %p794, %p795
      %p797 = scmp.ne.s32.totalorder %s789, %s791
      %p798 = scmp.eq.s32.totalorder %s101, 1
      %p799 = por %p797, %p798
      %p800 = scmp.ne.s32.totalorder %s791, %s792
      %p801 = scmp.eq.s32.totalorder %s101, 0
      %p802 = por %p800, %p801
      %p803 = scmp.ne.s32.totalorder %s791, %s792
      %p804 = scmp.eq.s32.totalorder %s102, 1
      %p805 = por %p803, %p804
      %p807 = scmp.ne.s32.totalorder %s792, %s806
      %p808 = scmp.eq.s32.totalorder %s102, 0
      %p809 = por %p807, %p808
      %s811 = sadd.s32 %s810, 1
      %p814 = scmp.eq.s32.totalorder %s96, 1
      %p815 = scmp.ne.s32.totalorder %s810, %s812
      %p816 = scmp.eq.s32.totalorder %s96, 0
      %p817 = por %p815, %p816
      %p818 = scmp.ne.s32.totalorder %s810, %s812
      %p819 = scmp.eq.s32.totalorder %s101, 1
      %p820 = por %p818, %p819
      %p821 = scmp.ne.s32.totalorder %s812, %s813
      %p822 = scmp.eq.s32.totalorder %s101, 0
      %p823 = por %p821, %p822
      %p824 = scmp.ne.s32.totalorder %s812, %s813
      %p825 = scmp.eq.s32.totalorder %s102, 1
      %p826 = por %p824, %p825
      %p828 = scmp.ne.s32.totalorder %s813, %s827
      %p829 = scmp.eq.s32.totalorder %s102, 0
      %p830 = por %p828, %p829
      %s832 = sadd.s32 %s831, 1
      %p835 = scmp.eq.s32.totalorder %s96, 1
      %p836 = scmp.ne.s32.totalorder %s831, %s833
      %p837 = scmp.eq.s32.totalorder %s96, 0
      %p838 = por %p836, %p837
      %p839 = scmp.ne.s32.totalorder %s831, %s833
      %p840 = scmp.eq.s32.totalorder %s101, 1
      %p841 = por %p839, %p840
      %p842 = scmp.ne.s32.totalorder %s833, %s834
      %p843 = scmp.eq.s32.totalorder %s101, 0
      %p844 = por %p842, %p843
      %p845 = scmp.ne.s32.totalorder %s833, %s834
      %p846 = scmp.eq.s32.totalorder %s102, 1
      %p847 = por %p845, %p846
      %p849 = scmp.ne.s32.totalorder %s834, %s848
      %p850 = scmp.eq.s32.totalorder %s102, 0
      %p851 = por %p849, %p850
      %s853 = sadd.s32 %s852, 1
      %p856 = scmp.eq.s32.totalorder %s96, 1
      %p857 = scmp.ne.s32.totalorder %s852, %s854
      %p858 = scmp.eq.s32.totalorder %s96, 0
      %p859 = por %p857, %p858
      %p860 = scmp.ne.s32.totalorder %s852, %s854
      %p861 = scmp.eq.s32.totalorder %s101, 1
      %p862 = por %p860, %p861
      %p863 = scmp.ne.s32.totalorder %s854, %s855
      %p864 = scmp.eq.s32.totalorder %s101, 0
      %p865 = por %p863, %p864
      %p866 = scmp.ne.s32.totalorder %s854, %s855
      %p867 = scmp.eq.s32.totalorder %s102, 1
      %p868 = por %p866, %p867
      %p870 = scmp.ne.s32.totalorder %s855, %s869
      %p871 = scmp.eq.s32.totalorder %s102, 0
      %p872 = por %p870, %p871
      %s874 = sadd.s32 %s873, 1
      %p877 = scmp.eq.s32.totalorder %s96, 1
      %p878 = scmp.ne.s32.totalorder %s873, %s875
      %p879 = scmp.eq.s32.totalorder %s96, 0
      %p880 = por %p878, %p879
      %p881 = scmp.ne.s32.totalorder %s873, %s875
      %p882 = scmp.eq.s32.totalorder %s101, 1
      %p883 = por %p881, %p882
      %p884 = scmp.ne.s32.totalorder %s875, %s876
      %p885 = scmp.eq.s32.totalorder %s101, 0
      %p886 = por %p884, %p885
      %p887 = scmp.ne.s32.totalorder %s875, %s876
      %p888 = scmp.eq.s32.totalorder %s102, 1
      %p889 = por %p887, %p888
      %p891 = scmp.ne.s32.totalorder %s876, %s890
      %p892 = scmp.eq.s32.totalorder %s102, 0
      %p893 = por %p891, %p892
      %s895 = sadd.s32 %s894, 1
      %p898 = scmp.eq.s32.totalorder %s96, 1
      %p899 = scmp.ne.s32.totalorder %s894, %s896
      %p900 = scmp.eq.s32.totalorder %s96, 0
      %p901 = por %p899, %p900
      %p902 = scmp.ne.s32.totalorder %s894, %s896
      %p903 = scmp.eq.s32.totalorder %s101, 1
      %p904 = por %p902, %p903
      %p905 = scmp.ne.s32.totalorder %s896, %s897
      %p906 = scmp.eq.s32.totalorder %s101, 0
      %p907 = por %p905, %p906
      %p908 = scmp.ne.s32.totalorder %s896, %s897
      %p909 = scmp.eq.s32.totalorder %s102, 1
      %p910 = por %p908, %p909
      %p912 = scmp.ne.s32.totalorder %s897, %s911
      %p913 = scmp.eq.s32.totalorder %s102, 0
      %p914 = por %p912, %p913
      %s916 = sadd.s32 %s915, 1
      %p919 = scmp.eq.s32.totalorder %s96, 1
      %p920 = scmp.ne.s32.totalorder %s915, %s917
      %p921 = scmp.eq.s32.totalorder %s96, 0
      %p922 = por %p920, %p921
      %p923 = scmp.ne.s32.totalorder %s915, %s917
      %p924 = scmp.eq.s32.totalorder %s101, 1
      %p925 = por %p923, %p924
      %p926 = scmp.ne.s32.totalorder %s917, %s918
      %p927 = scmp.eq.s32.totalorder %s101, 0
      %p928 = por %p926, %p927
      %p929 = scmp.ne.s32.totalorder %s917, %s918
      %p930 = scmp.eq.s32.totalorder %s102, 1
      %p931 = por %p929, %p930
      %p933 = scmp.ne.s32.totalorder %s918, %s932
      %p934 = scmp.eq.s32.totalorder %s102, 0
      %p935 = por %p933, %p934
      %s937 = sadd.s32 %s936, 1
      %p940 = scmp.eq.s32.totalorder %s96, 1
      %p941 = scmp.ne.s32.totalorder %s936, %s938
      %p942 = scmp.eq.s32.totalorder %s96, 0
      %p943 = por %p941, %p942
      %p944 = scmp.ne.s32.totalorder %s936, %s938
      %p945 = scmp.eq.s32.totalorder %s101, 1
      %p946 = por %p944, %p945
      %p947 = scmp.ne.s32.totalorder %s938, %s939
      %p948 = scmp.eq.s32.totalorder %s101, 0
      %p949 = por %p947, %p948
      %p950 = scmp.ne.s32.totalorder %s938, %s939
      %p951 = scmp.eq.s32.totalorder %s102, 1
      %p952 = por %p950, %p951
      %p954 = scmp.ne.s32.totalorder %s939, %s953
      %p955 = scmp.eq.s32.totalorder %s102, 0
      %p956 = por %p954, %p955
      %s957 = ssub.s32 %s103, %s115
      %s958 = ssub.s32 %s104, %s111
      %s959 = sor.u32 %s957, %s958
      %p960 = scmp.eq.s32.totalorder %s959, 0
      %s962 = sadd.s32 %s961, 1
      %s963 = scalar_select %p960, %s961, %s962
      %p966 = pneg %p960
      %p967 = scmp.eq.s32.totalorder %s96, 1
      %p968 = por %p966, %p967
      %p969 = scmp.ne.s32.totalorder %s961, %s964
      %p970 = scmp.eq.s32.totalorder %s96, 0
      %p971 = por %p969, %p970
      %p972 = scmp.ne.s32.totalorder %s961, %s964
      %p973 = scmp.eq.s32.totalorder %s101, 1
      %p974 = por %p972, %p973
      %p975 = scmp.ne.s32.totalorder %s964, %s965
      %p976 = scmp.eq.s32.totalorder %s101, 0
      %p977 = por %p975, %p976
      %p978 = scmp.ne.s32.totalorder %s964, %s965
      %p979 = scmp.eq.s32.totalorder %s102, 1
      %p980 = por %p978, %p979
      %p982 = scmp.ne.s32.totalorder %s965, %s981
      %p983 = scmp.eq.s32.totalorder %s102, 0
      %p984 = por %p982, %p983
      %s985 = ssub.s32 %s103, %s115
      %s986 = ssub.s32 %s104, %s111
      %s987 = sor.u32 %s985, %s986
      %p988 = scmp.eq.s32.totalorder %s987, 0
      %s990 = sadd.s32 %s989, 1
      %s991 = scalar_select %p988, %s989, %s990
      %p994 = pneg %p988
      %p995 = scmp.eq.s32.totalorder %s96, 1
      %p996 = por %p994, %p995
      %p997 = scmp.ne.s32.totalorder %s989, %s992
      %p998 = scmp.eq.s32.totalorder %s96, 0
      %p999 = por %p997, %p998
      %p1000 = scmp.ne.s32.totalorder %s989, %s992
      %p1001 = scmp.eq.s32.totalorder %s101, 1
      %p1002 = por %p1000, %p1001
      %p1003 = scmp.ne.s32.totalorder %s992, %s993
      %p1004 = scmp.eq.s32.totalorder %s101, 0
      %p1005 = por %p1003, %p1004
      %p1006 = scmp.ne.s32.totalorder %s992, %s993
      %p1007 = scmp.eq.s32.totalorder %s102, 1
      %p1008 = por %p1006, %p1007
      %p1010 = scmp.ne.s32.totalorder %s993, %s1009
      %p1011 = scmp.eq.s32.totalorder %s102, 0
      %p1012 = por %p1010, %p1011
      %s1013 = ssub.s32 %s103, %s115
      %p1014 = scmp.eq.s32.totalorder %s1013, 0
      %s1016 = sadd.s32 %s1015, 1
      %s1017 = scalar_select %p1014, %s1015, %s1016
      %p1020 = pneg %p1014
      %p1021 = scmp.eq.s32.totalorder %s96, 1
      %p1022 = por %p1020, %p1021
      %p1023 = scmp.ne.s32.totalorder %s1015, %s1018
      %p1024 = scmp.eq.s32.totalorder %s96, 0
      %p1025 = por %p1023, %p1024
      %p1026 = scmp.ne.s32.totalorder %s1015, %s1018
      %p1027 = scmp.eq.s32.totalorder %s101, 1
      %p1028 = por %p1026, %p1027
      %p1029 = scmp.ne.s32.totalorder %s1018, %s1019
      %p1030 = scmp.eq.s32.totalorder %s101, 0
      %p1031 = por %p1029, %p1030
      %p1032 = scmp.ne.s32.totalorder %s1018, %s1019
      %p1033 = scmp.eq.s32.totalorder %s102, 1
      %p1034 = por %p1032, %p1033
      %p1036 = scmp.ne.s32.totalorder %s1019, %s1035
      %p1037 = scmp.eq.s32.totalorder %s102, 0
      %p1038 = por %p1036, %p1037
      %p1039 = scmp.le.s32.totalorder 1, %s96
      %p1040 = scmp.lt.s32.totalorder %s96, 3
      %p1041 = pnand %p1039, %p1040
      %p1042 = pneg %p1041
      // Predicated region
      $region9: #{tpu_custom_call.1} parent=5 // pred_check
        _
      $region10: #{tpu_custom_call.1} parent=5 // pred_check_branch
        %1044 = sbr.rel (%p1041) target = $region12
      $region11: #{tpu_custom_call.1} parent=5 // pred_region
        %s1045 = ssub.s32 %s96, 1
        // Predicated region
        $region13: #{tpu_custom_call.1} parent=11 // pred_check
          %p1046 = pneg %p235
        $region14: #{tpu_custom_call.1} parent=11 // pred_check_branch
          %1048 = sbr.rel (%p1046) target = $region16
        $region15: #{tpu_custom_call.1} parent=11 // pred_region
          _
        $region16: #{tpu_custom_call.1} parent=11 // pred_fallthru
          _
        // Predicated region
        $region17: #{tpu_custom_call.1} parent=11 // pred_check
          %p1049 = pneg %p256
        $region18: #{tpu_custom_call.1} parent=11 // pred_check_branch
          %1051 = sbr.rel (%p1049) target = $region20
        $region19: #{tpu_custom_call.1} parent=11 // pred_region
          _
        $region20: #{tpu_custom_call.1} parent=11 // pred_fallthru
          _
        // Predicated region
        $region21: #{tpu_custom_call.1} parent=11 // pred_check
          %p1052 = pneg %p277
        $region22: #{tpu_custom_call.1} parent=11 // pred_check_branch
          %1054 = sbr.rel (%p1052) target = $region24
        $region23: #{tpu_custom_call.1} parent=11 // pred_region
          _
        $region24: #{tpu_custom_call.1} parent=11 // pred_fallthru
          _
        // Predicated region
        $region25: #{tpu_custom_call.1} parent=11 // pred_check
          %p1055 = pneg %p298
        $region26: #{tpu_custom_call.1} parent=11 // pred_check_branch
          %1057 = sbr.rel (%p1055) target = $region28
        $region27: #{tpu_custom_call.1} parent=11 // pred_region
          _
        $region28: #{tpu_custom_call.1} parent=11 // pred_fallthru
          _
        // Predicated region
        $region29: #{tpu_custom_call.1} parent=11 // pred_check
          %p1058 = pneg %p319
        $region30: #{tpu_custom_call.1} parent=11 // pred_check_branch
          %1060 = sbr.rel (%p1058) target = $region32
        $region31: #{tpu_custom_call.1} parent=11 // pred_region
          _
        $region32: #{tpu_custom_call.1} parent=11 // pred_fallthru
          _
        // Predicated region
        $region33: #{tpu_custom_call.1} parent=11 // pred_check
          %p1061 = pneg %p340
        $region34: #{tpu_custom_call.1} parent=11 // pred_check_branch
          %1063 = sbr.rel (%p1061) target = $region36
        $region35: #{tpu_custom_call.1} parent=11 // pred_region
          _
        $region36: #{tpu_custom_call.1} parent=11 // pred_fallthru
          _
        // Predicated region
        $region37: #{tpu_custom_call.1} parent=11 // pred_check
          %p1064 = pneg %p361
        $region38: #{tpu_custom_call.1} parent=11 // pred_check_branch
          %1066 = sbr.rel (%p1064) target = $region40
        $region39: #{tpu_custom_call.1} parent=11 // pred_region
          _
        $region40: #{tpu_custom_call.1} parent=11 // pred_fallthru
          _
        // Predicated region
        $region41: #{tpu_custom_call.1} parent=11 // pred_check
          %p1067 = pneg %p382
        $region42: #{tpu_custom_call.1} parent=11 // pred_check_branch
          %1069 = sbr.rel (%p1067) target = $region44
        $region43: #{tpu_custom_call.1} parent=11 // pred_region
          _
        $region44: #{tpu_custom_call.1} parent=11 // pred_fallthru
          _
        // Predicated region
        $region45: #{tpu_custom_call.1} parent=11 // pred_check
          %p1070 = pneg %p403
        $region46: #{tpu_custom_call.1} parent=11 // pred_check_branch
          %1072 = sbr.rel (%p1070) target = $region48
        $region47: #{tpu_custom_call.1} parent=11 // pred_region
          _
        $region48: #{tpu_custom_call.1} parent=11 // pred_fallthru
          _
        // Predicated region
        $region49: #{tpu_custom_call.1} parent=11 // pred_check
          %p1073 = pneg %p424
        $region50: #{tpu_custom_call.1} parent=11 // pred_check_branch
          %1075 = sbr.rel (%p1073) target = $region52
        $region51: #{tpu_custom_call.1} parent=11 // pred_region
          _
        $region52: #{tpu_custom_call.1} parent=11 // pred_fallthru
          _
        // Predicated region
        $region53: #{tpu_custom_call.1} parent=11 // pred_check
          %p1076 = pneg %p445
        $region54: #{tpu_custom_call.1} parent=11 // pred_check_branch
          %1078 = sbr.rel (%p1076) target = $region56
        $region55: #{tpu_custom_call.1} parent=11 // pred_region
          _
        $region56: #{tpu_custom_call.1} parent=11 // pred_fallthru
          _
        // Predicated region
        $region57: #{tpu_custom_call.1} parent=11 // pred_check
          %p1079 = pneg %p466
        $region58: #{tpu_custom_call.1} parent=11 // pred_check_branch
          %1081 = sbr.rel (%p1079) target = $region60
        $region59: #{tpu_custom_call.1} parent=11 // pred_region
          _
        $region60: #{tpu_custom_call.1} parent=11 // pred_fallthru
          _
        // Predicated region
        $region61: #{tpu_custom_call.1} parent=11 // pred_check
          %p1082 = pneg %p487
        $region62: #{tpu_custom_call.1} parent=11 // pred_check_branch
          %1084 = sbr.rel (%p1082) target = $region64
        $region63: #{tpu_custom_call.1} parent=11 // pred_region
          _
        $region64: #{tpu_custom_call.1} parent=11 // pred_fallthru
          _
        // Predicated region
        $region65: #{tpu_custom_call.1} parent=11 // pred_check
          %p1085 = pneg %p508
        $region66: #{tpu_custom_call.1} parent=11 // pred_check_branch
          %1087 = sbr.rel (%p1085) target = $region68
        $region67: #{tpu_custom_call.1} parent=11 // pred_region
          _
        $region68: #{tpu_custom_call.1} parent=11 // pred_fallthru
          _
        // Predicated region
        $region69: #{tpu_custom_call.1} parent=11 // pred_check
          %p1088 = pneg %p529
        $region70: #{tpu_custom_call.1} parent=11 // pred_check_branch
          %1090 = sbr.rel (%p1088) target = $region72
        $region71: #{tpu_custom_call.1} parent=11 // pred_region
          _
        $region72: #{tpu_custom_call.1} parent=11 // pred_fallthru
          _
        // Predicated region
        $region73: #{tpu_custom_call.1} parent=11 // pred_check
          %p1091 = pneg %p550
        $region74: #{tpu_custom_call.1} parent=11 // pred_check_branch
          %1093 = sbr.rel (%p1091) target = $region76
        $region75: #{tpu_custom_call.1} parent=11 // pred_region
          _
        $region76: #{tpu_custom_call.1} parent=11 // pred_fallthru
          _
        // Predicated region
        $region77: #{tpu_custom_call.1} parent=11 // pred_check
          %p1094 = pneg %p571
        $region78: #{tpu_custom_call.1} parent=11 // pred_check_branch
          %1096 = sbr.rel (%p1094) target = $region80
        $region79: #{tpu_custom_call.1} parent=11 // pred_region
          _
        $region80: #{tpu_custom_call.1} parent=11 // pred_fallthru
          _
        // Predicated region
        $region81: #{tpu_custom_call.1} parent=11 // pred_check
          %p1097 = pneg %p592
        $region82: #{tpu_custom_call.1} parent=11 // pred_check_branch
          %1099 = sbr.rel (%p1097) target = $region84
        $region83: #{tpu_custom_call.1} parent=11 // pred_region
          _
        $region84: #{tpu_custom_call.1} parent=11 // pred_fallthru
          _
        // Predicated region
        $region85: #{tpu_custom_call.1} parent=11 // pred_check
          %p1100 = pneg %p613
        $region86: #{tpu_custom_call.1} parent=11 // pred_check_branch
          %1102 = sbr.rel (%p1100) target = $region88
        $region87: #{tpu_custom_call.1} parent=11 // pred_region
          _
        $region88: #{tpu_custom_call.1} parent=11 // pred_fallthru
          _
        // Predicated region
        $region89: #{tpu_custom_call.1} parent=11 // pred_check
          %p1103 = pneg %p634
        $region90: #{tpu_custom_call.1} parent=11 // pred_check_branch
          %1105 = sbr.rel (%p1103) target = $region92
        $region91: #{tpu_custom_call.1} parent=11 // pred_region
          _
        $region92: #{tpu_custom_call.1} parent=11 // pred_fallthru
          _
        // Predicated region
        $region93: #{tpu_custom_call.1} parent=11 // pred_check
          %p1106 = pneg %p655
        $region94: #{tpu_custom_call.1} parent=11 // pred_check_branch
          %1108 = sbr.rel (%p1106) target = $region96
        $region95: #{tpu_custom_call.1} parent=11 // pred_region
          _
        $region96: #{tpu_custom_call.1} parent=11 // pred_fallthru
          _
        // Predicated region
        $region97: #{tpu_custom_call.1} parent=11 // pred_check
          %p1109 = pneg %p676
        $region98: #{tpu_custom_call.1} parent=11 // pred_check_branch
          %1111 = sbr.rel (%p1109) target = $region100
        $region99: #{tpu_custom_call.1} parent=11 // pred_region
          _
        $region100: #{tpu_custom_call.1} parent=11 // pred_fallthru
          _
        // Predicated region
        $region101: #{tpu_custom_call.1} parent=11 // pred_check
          %p1112 = pneg %p697
        $region102: #{tpu_custom_call.1} parent=11 // pred_check_branch
          %1114 = sbr.rel (%p1112) target = $region104
        $region103: #{tpu_custom_call.1} parent=11 // pred_region
          _
        $region104: #{tpu_custom_call.1} parent=11 // pred_fallthru
          _
        // Predicated region
        $region105: #{tpu_custom_call.1} parent=11 // pred_check
          %p1115 = pneg %p718
        $region106: #{tpu_custom_call.1} parent=11 // pred_check_branch
          %1117 = sbr.rel (%p1115) target = $region108
        $region107: #{tpu_custom_call.1} parent=11 // pred_region
          _
        $region108: #{tpu_custom_call.1} parent=11 // pred_fallthru
          _
        // Predicated region
        $region109: #{tpu_custom_call.1} parent=11 // pred_check
          %p1118 = pneg %p739
        $region110: #{tpu_custom_call.1} parent=11 // pred_check_branch
          %1120 = sbr.rel (%p1118) target = $region112
        $region111: #{tpu_custom_call.1} parent=11 // pred_region
          _
        $region112: #{tpu_custom_call.1} parent=11 // pred_fallthru
          _
        // Predicated region
        $region113: #{tpu_custom_call.1} parent=11 // pred_check
          %p1121 = pneg %p760
        $region114: #{tpu_custom_call.1} parent=11 // pred_check_branch
          %1123 = sbr.rel (%p1121) target = $region116
        $region115: #{tpu_custom_call.1} parent=11 // pred_region
          _
        $region116: #{tpu_custom_call.1} parent=11 // pred_fallthru
          _
        // Predicated region
        $region117: #{tpu_custom_call.1} parent=11 // pred_check
          %p1124 = pneg %p781
        $region118: #{tpu_custom_call.1} parent=11 // pred_check_branch
          %1126 = sbr.rel (%p1124) target = $region120
        $region119: #{tpu_custom_call.1} parent=11 // pred_region
          _
        $region120: #{tpu_custom_call.1} parent=11 // pred_fallthru
          _
        // Predicated region
        $region121: #{tpu_custom_call.1} parent=11 // pred_check
          %p1127 = pneg %p802
        $region122: #{tpu_custom_call.1} parent=11 // pred_check_branch
          %1129 = sbr.rel (%p1127) target = $region124
        $region123: #{tpu_custom_call.1} parent=11 // pred_region
          _
        $region124: #{tpu_custom_call.1} parent=11 // pred_fallthru
          _
        // Predicated region
        $region125: #{tpu_custom_call.1} parent=11 // pred_check
          %p1130 = pneg %p823
        $region126: #{tpu_custom_call.1} parent=11 // pred_check_branch
          %1132 = sbr.rel (%p1130) target = $region128
        $region127: #{tpu_custom_call.1} parent=11 // pred_region
          _
        $region128: #{tpu_custom_call.1} parent=11 // pred_fallthru
          _
        // Predicated region
        $region129: #{tpu_custom_call.1} parent=11 // pred_check
          %p1133 = pneg %p844
        $region130: #{tpu_custom_call.1} parent=11 // pred_check_branch
          %1135 = sbr.rel (%p1133) target = $region132
        $region131: #{tpu_custom_call.1} parent=11 // pred_region
          _
        $region132: #{tpu_custom_call.1} parent=11 // pred_fallthru
          _
        // Predicated region
        $region133: #{tpu_custom_call.1} parent=11 // pred_check
          %p1136 = pneg %p865
        $region134: #{tpu_custom_call.1} parent=11 // pred_check_branch
          %1138 = sbr.rel (%p1136) target = $region136
        $region135: #{tpu_custom_call.1} parent=11 // pred_region
          _
        $region136: #{tpu_custom_call.1} parent=11 // pred_fallthru
          _
        // Predicated region
        $region137: #{tpu_custom_call.1} parent=11 // pred_check
          %p1139 = pneg %p886
        $region138: #{tpu_custom_call.1} parent=11 // pred_check_branch
          %1141 = sbr.rel (%p1139) target = $region140
        $region139: #{tpu_custom_call.1} parent=11 // pred_region
          _
        $region140: #{tpu_custom_call.1} parent=11 // pred_fallthru
          _
        // Predicated region
        $region141: #{tpu_custom_call.1} parent=11 // pred_check
          %p1142 = pneg %p907
        $region142: #{tpu_custom_call.1} parent=11 // pred_check_branch
          %1144 = sbr.rel (%p1142) target = $region144
        $region143: #{tpu_custom_call.1} parent=11 // pred_region
          _
        $region144: #{tpu_custom_call.1} parent=11 // pred_fallthru
          _
        // Predicated region
        $region145: #{tpu_custom_call.1} parent=11 // pred_check
          %p1145 = pneg %p928
        $region146: #{tpu_custom_call.1} parent=11 // pred_check_branch
          %1147 = sbr.rel (%p1145) target = $region148
        $region147: #{tpu_custom_call.1} parent=11 // pred_region
          _
        $region148: #{tpu_custom_call.1} parent=11 // pred_fallthru
          _
        // Predicated region
        $region149: #{tpu_custom_call.1} parent=11 // pred_check
          %p1148 = pneg %p949
        $region150: #{tpu_custom_call.1} parent=11 // pred_check_branch
          %1150 = sbr.rel (%p1148) target = $region152
        $region151: #{tpu_custom_call.1} parent=11 // pred_region
          _
        $region152: #{tpu_custom_call.1} parent=11 // pred_fallthru
          _
      $region12: #{tpu_custom_call.1} parent=5 // pred_fallthru
        _
      %p1151 = scmp.lt.s32.totalorder %s96, 2
      // Predicated region
      $region153: #{tpu_custom_call.1} parent=5 // pred_check
        %p1152 = pneg %p1151
      $region154: #{tpu_custom_call.1} parent=5 // pred_check_branch
        %1154 = sbr.rel (%p1152) target = $region156
      $region155: #{tpu_custom_call.1} parent=5 // pred_region
        // Predicated region
        $region157: #{tpu_custom_call.1} parent=155 // pred_check
          %p1155 = pneg %p128
        $region158: #{tpu_custom_call.1} parent=155 // pred_check_branch
          %1157 = sbr.rel (%p1155) target = $region160
        $region159: #{tpu_custom_call.1} parent=155 // pred_region
          %p1158 = scmp.lt.s32.totalorder %s103, 1
          %s1159 = scalar_select %p1158, %s103, 1
          %s1160 = smul.addr %s1159, 8
          %s1161 = scalar_lea.vmem %s1, %s1160
        $region160: #{tpu_custom_call.1} parent=155 // pred_fallthru
          _
        // Predicated region
        $region161: #{tpu_custom_call.1} parent=155 // pred_check
          %p1162 = pneg %p156
        $region162: #{tpu_custom_call.1} parent=155 // pred_check_branch
          %1164 = sbr.rel (%p1162) target = $region164
        $region163: #{tpu_custom_call.1} parent=155 // pred_region
          %s1165 = smul.u32 8, %s104
          %p1166 = scmp.lt.s32.totalorder %s103, 1
          %s1167 = scalar_select %p1166, %s103, 1
          %p1168 = scmp.lt.s32.totalorder %s1165, 7
          %s1169 = scalar_select %p1168, %s1165, 7
          %s1170 = smul.addr %s1167, 8
          %s1171 = sadd.s32 %s1169, %s1170
          %s1172 = smul.addr %s1171, 8
          %s1173 = scalar_lea.vmem %s3, %s1172
          %s1174 = smul.u32 8, %s104
        $region164: #{tpu_custom_call.1} parent=155 // pred_fallthru
          _
        // Predicated region
        $region165: #{tpu_custom_call.1} parent=155 // pred_check
          %p1175 = pneg %p182
        $region166: #{tpu_custom_call.1} parent=155 // pred_check_branch
          %1177 = sbr.rel (%p1175) target = $region168
        $region167: #{tpu_custom_call.1} parent=155 // pred_region
          %p1178 = scmp.lt.s32.totalorder %s103, 1
          %s1179 = scalar_select %p1178, %s103, 1
          %s1180 = scalar_lea.vmem %s5, %s1179
        $region168: #{tpu_custom_call.1} parent=155 // pred_fallthru
          _
        // Predicated region
        $region169: #{tpu_custom_call.1} parent=155 // pred_check
          %p1181 = pneg %p208
        $region170: #{tpu_custom_call.1} parent=155 // pred_check_branch
          %1183 = sbr.rel (%p1181) target = $region172
        $region171: #{tpu_custom_call.1} parent=155 // pred_region
          %p1184 = scmp.lt.s32.totalorder %s103, 1
          %s1185 = scalar_select %p1184, %s103, 1
          %s1186 = smul.addr %s1185, 8
          %s1187 = scalar_lea.vmem %s7, %s1186
        $region172: #{tpu_custom_call.1} parent=155 // pred_fallthru
          _
      $region156: #{tpu_custom_call.1} parent=5 // pred_fallthru
        _
      %p1188 = scmp.le.s32.totalorder 1, %s96
      %p1189 = scmp.lt.s32.totalorder %s96, 3
      %p1190 = pnand %p1188, %p1189
      %p1191 = pneg %p1190
      // Predicated region
      $region173: #{tpu_custom_call.1} parent=5 // pred_check
        _
      $region174: #{tpu_custom_call.1} parent=5 // pred_check_branch
        %1193 = sbr.rel (%p1190) target = $region176
      $region175: #{tpu_custom_call.1} parent=5 // pred_region
        %s1194 = ssub.s32 %s96, 1
        %p1195 = scmp.lt.s32.totalorder %s105, 1
        %s1196 = scalar_select %p1195, %s105, 1
        %s1197 = smul.addr %s1196, 8
        %s1198 = scalar_lea.vmem %s1, %s1197
        %p1199 = pneg %p134
        %p1200 = pneg %p131
        %s1201 = smul.u32 8, %s106
        %p1202 = scmp.lt.s32.totalorder %s105, 1
        %s1203 = scalar_select %p1202, %s105, 1
        %p1204 = scmp.lt.s32.totalorder %s1201, 7
        %s1205 = scalar_select %p1204, %s1201, 7
        %s1206 = smul.addr %s1203, 8
        %s1207 = sadd.s32 %s1205, %s1206
        %s1208 = smul.addr %s1207, 8
        %s1209 = scalar_lea.vmem %s3, %s1208
        %p1210 = pneg %p162
        %p1211 = pneg %p159
        %p1212 = scmp.lt.s32.totalorder %s105, 1
        %s1213 = scalar_select %p1212, %s105, 1
        %s1214 = scalar_lea.vmem %s5, %s1213
        %p1215 = pneg %p188
        %p1216 = pneg %p185
        %p1217 = scmp.lt.s32.totalorder %s105, 1
        %s1218 = scalar_select %p1217, %s105, 1
        %s1219 = smul.addr %s1218, 8
        %s1220 = scalar_lea.vmem %s7, %s1219
        %p1221 = pneg %p214
        %p1222 = pneg %p211
        %p1223 = pneg %p235
        %p1224 = pneg %p232
        %p1225 = pneg %p256
        %p1226 = pneg %p253
        %p1227 = pneg %p277
        %p1228 = pneg %p274
        %p1229 = pneg %p298
        %p1230 = pneg %p295
        %p1231 = pneg %p319
        %p1232 = pneg %p316
        %p1233 = pneg %p340
        %p1234 = pneg %p337
        %p1235 = pneg %p361
        %p1236 = pneg %p358
        %p1237 = pneg %p382
        %p1238 = pneg %p379
        %p1239 = pneg %p403
        %p1240 = pneg %p400
        %p1241 = pneg %p424
        %p1242 = pneg %p421
        %p1243 = pneg %p445
        %p1244 = pneg %p442
        %p1245 = pneg %p466
        %p1246 = pneg %p463
        %p1247 = pneg %p487
        %p1248 = pneg %p484
        %p1249 = pneg %p508
        %p1250 = pneg %p505
        %p1251 = pneg %p529
        %p1252 = pneg %p526
        %p1253 = pneg %p550
        %p1254 = pneg %p547
        %p1255 = pneg %p571
        %p1256 = pneg %p568
        %p1257 = pneg %p592
        %p1258 = pneg %p589
        %p1259 = pneg %p613
        %p1260 = pneg %p610
        %p1261 = pneg %p634
        %p1262 = pneg %p631
        %p1263 = pneg %p655
        %p1264 = pneg %p652
        %p1265 = pneg %p676
        %p1266 = pneg %p673
        %p1267 = pneg %p697
        %p1268 = pneg %p694
        %p1269 = pneg %p718
        %p1270 = pneg %p715
        %p1271 = pneg %p739
        %p1272 = pneg %p736
        %p1273 = pneg %p760
        %p1274 = pneg %p757
        %p1275 = pneg %p781
        %p1276 = pneg %p778
        %p1277 = pneg %p802
        %p1278 = pneg %p799
        %p1279 = pneg %p823
        %p1280 = pneg %p820
        %p1281 = pneg %p844
        %p1282 = pneg %p841
        %p1283 = pneg %p865
        %p1284 = pneg %p862
        %p1285 = pneg %p886
        %p1286 = pneg %p883
        %p1287 = pneg %p907
        %p1288 = pneg %p904
        %p1289 = pneg %p928
        %p1290 = pneg %p925
        %p1291 = pneg %p949
        %p1292 = pneg %p946
        %p1293 = pneg %p977
        %p1294 = pneg %p974
        %s1295 = sand.u32 %s964, 1
        %s1296 = scalar_lea.sflag [#allocation12], %s1295
        %s1297 = sand.u32 %s964, 1
        %s1298 = smul.addr %s1297, 8
        %s1299 = scalar_lea.vmem [#allocation11], %s1298
        %p1300 = pneg %p1005
        %p1301 = pneg %p1002
        %s1302 = smul.u32 8, %s106
        %p1303 = scmp.lt.s32.totalorder %s105, 1
        %s1304 = scalar_select %p1303, %s105, 1
        %p1305 = scmp.lt.s32.totalorder %s1302, 7
        %s1306 = scalar_select %p1305, %s1302, 7
        %s1307 = smul.addr %s1304, 8
        %s1308 = sadd.s32 %s1306, %s1307
        %s1309 = smul.addr %s1308, 8
        %s1310 = scalar_lea.vmem %s81, %s1309
        %p1311 = pneg %p1031
        %p1312 = pneg %p1028
        %s1313 = sand.u32 %s1018, 1
        %s1314 = scalar_lea.sflag [#allocation14], %s1313
        %s1315 = sand.u32 %s1018, 1
        %s1316 = scalar_lea.vmem [#allocation13], %s1315
        %p1317 = scmp.lt.s32.totalorder %s105, 1
        %s1318 = scalar_select %p1317, %s105, 1
        %s1319 = smul.addr %s1318, 8
        %s1320 = scalar_lea.vmem %s1, %s1319
        %s1321 = smul.u32 8, %s106
        %p1322 = scmp.lt.s32.totalorder %s105, 1
        %s1323 = scalar_select %p1322, %s105, 1
        %p1324 = scmp.lt.s32.totalorder %s1321, 7
        %s1325 = scalar_select %p1324, %s1321, 7
        %s1326 = smul.addr %s1323, 8
        %s1327 = sadd.s32 %s1325, %s1326
        %s1328 = smul.addr %s1327, 8
        %s1329 = scalar_lea.vmem %s3, %s1328
        %s1330 = smul.u32 8, %s106
        %p1331 = scmp.lt.s32.totalorder %s105, 1
        %s1332 = scalar_select %p1331, %s105, 1
        %s1333 = scalar_lea.vmem %s5, %s1332
        %p1334 = scmp.lt.s32.totalorder %s105, 1
        %s1335 = scalar_select %p1334, %s105, 1
        %s1336 = smul.addr %s1335, 8
        %s1337 = scalar_lea.vmem %s7, %s1336
        %s1338 = smul.u32 8, %s106
        %p1339 = scmp.lt.s32.totalorder %s105, 1
        %s1340 = scalar_select %p1339, %s105, 1
        %p1341 = scmp.lt.s32.totalorder %s1338, 7
        %s1342 = scalar_select %p1341, %s1338, 7
        %s1343 = smul.addr %s1340, 8
        %s1344 = sadd.s32 %s1342, %s1343
        %s1345 = smul.addr %s1344, 8
        %s1346 = scalar_lea.vmem %s81, %s1345
        %s1347 = smul.u32 8, %s106
        %v1348 = vld [vmem:[%s1329] sm:$0xff]
        %v1349 = vld [vmem:[%s1329 + $0x8] sm:$0xff]
        %v1350 = vld [vmem:[%s1329 + $0x10] sm:$0xff]
        %v1351 = vld [vmem:[%s1329 + $0x18] sm:$0xff]
        %v1352 = vld [vmem:[%s1329 + $0x20] sm:$0xff]
        %v1353 = vld [vmem:[%s1329 + $0x28] sm:$0xff]
        %v1354 = vld [vmem:[%s1329 + $0x30] sm:$0xff]
        %v1355 = vld [vmem:[%s1329 + $0x38] sm:$0xff]
        %v1356 = vld [vmem:[%s1333] sm:$0x1]
        %v1357 = vld [vmem:[%s1337] sm:$0xff]
        %p1358 = scmp.eq.s32.totalorder %s106, 0
        // Predicated region
        $region177: #{tpu_custom_call.1} parent=175 // pred_check
          %p1359 = pneg %p1358
        $region178: #{tpu_custom_call.1} parent=175 // pred_check_branch
          %1361 = sbr.rel (%p1359) target = $region180
        $region179: #{tpu_custom_call.1} parent=175 // pred_region
          %v1362 = vld [vmem:[%s1320] sm:$0xff]
          %v1363 = vld [vmem:[%s9] sm:$0xff]
          %v1364 = vld [vmem:[%s9 + $0x8] sm:$0xff]
          %v1365 = vld [vmem:[%s11] sm:$0x1]
          %v1367 = vperm.slane %v1365, 0
          %vm1369 = vcmask 130048
          %v1371 = vsel %vm1369, %v1362, 0
          %1373 = vmatpush.msra.mxu0 0.0
          %1374 = vmatpush.msra.mxu0 0.0
          %1375 = vmatpush.msra.mxu0 0.0
          %1376 = vmatpush.msra.mxu0 0.0
          %1377 = vmatpush.msra.mxu0 0.0
          %1378 = vmatpush.msra.mxu0 0.0
          %1379 = vmatpush.msra.mxu0 0.0
          %1380 = vmatpush.msra.mxu0 0.0
          %1381 = vmatpush.msra.mxu0 0.0
          %1382 = vmatpush.msra.mxu0 0.0
          %1383 = vmatpush.msra.mxu0 0.0
          %1384 = vmatpush.msra.mxu0 0.0
          %1385 = vmatpush.msra.mxu0 0.0
          %1386 = vmatpush.msra.mxu0 0.0
          %1387 = vmatpush.msra.mxu0 %v1364
          %1388 = vmatpush.msra.mxu0 %v1363
          %1389 = vmatmul.f32.gmra.mxu0 %v1371
          %v1390 = vpop.f32.mrf.mxu0
          %v1391 = vadd.f32 %v1367, %v1390
          %1392 = vdwg.mxu0
          %1394 = vset.pattern.permute.xlu0 0
          %1395 = vperm.xlu0 %1394, %v1357
          %v1396 = vpop.permute.xlu0 %1395
          %v1398 = vmul.f32 %v1391, %v1396
          %v1399 = vmul.f32 %v1398, 0.5
          %1400 = vst.msk [vmem:[#allocation2] sm:$0xff] %vm1369, %v1399
          %1402 = vrot.lane.b32.xlu0 %v1398, 112
          %v1403 = vpop.permute.xlu0 %1402
          %1405 = vst.msk [vmem:[#allocation3] sm:$0xff] %vm1369, %v1403
          %1406 = vrot.lane.b32.xlu0 %v1398, 96
          %v1407 = vpop.permute.xlu0 %1406
          %1409 = vst.msk [vmem:[#allocation4] sm:$0xff] %vm1369, %v1407
          %v1410 = vld [vmem:[%s17] sm:$0xff]
          %v1411 = vld [vmem:[%s19] sm:$0x1]
          %vm1412 = vcmask 64512
          %v1414 = vsel %vm1412, %v1356, 0
          %1416 = vmatpush.msra.mxu0 0.0
          %1417 = vmatpush.msra.mxu0 0.0
          %1418 = vmatpush.msra.mxu0 0.0
          %1419 = vmatpush.msra.mxu0 0.0
          %1420 = vmatpush.msra.mxu0 0.0
          %1421 = vmatpush.msra.mxu0 0.0
          %1422 = vmatpush.msra.mxu0 0.0
          %1423 = vmatpush.msra.mxu0 0.0
          %1424 = vmatpush.msra.mxu0 0.0
          %1425 = vmatpush.msra.mxu0 0.0
          %1426 = vmatpush.msra.mxu0 0.0
          %1427 = vmatpush.msra.mxu0 0.0
          %1428 = vmatpush.msra.mxu0 0.0
          %1429 = vmatpush.msra.mxu0 0.0
          %1430 = vmatpush.msra.mxu0 0.0
          %1431 = vmatpush.msra.mxu0 %v1410
          %1432 = vmatmul.f32.gmra.mxu0 %v1414
          %v1433 = vpop.f32.mrf.mxu0
          %v1434 = vadd.f32 %v1411, %v1433
          %1435 = vdwg.mxu0
          %vm1436 = vcmask 516096
          %1437 = vst.msk [vmem:[#allocation5] sm:$0x1] %vm1436, %v1434
          %vm1438 = vcmask 57344
          %1439 = vst.msk [vmem:[#allocation6] sm:$0x1] %vm1438, 0.0
          %1440 = vst.msk [vmem:[#allocation7] sm:$0x1] %vm1438, 0.0
          %1441 = vst.msk [vmem:[#allocation8] sm:$0x1] %vm1438, inf
          %1442 = vst.msk [vmem:[#allocation9] sm:$0x1] %vm1438, -inf
          %vm1443 = vcmask 0
          %1444 = vst.msk [vmem:[#allocation10] sm:$0x1] %vm1443, 0.0
        $region180: #{tpu_custom_call.1} parent=175 // pred_fallthru
          _
        %s1445 = smul.u32 %s106, 8
        %s1446 = scalar_lea.vmem [#allocation2], %s1445
        %v1447 = vld [vmem:[%s1446] sm:$0xff]
        %v1448 = vld [vmem:[#allocation3] sm:$0xff]
        %v1449 = vld [vmem:[#allocation4] sm:$0xff]
        %s1450 = scalar_lea.vmem %s1320, %s1445
        %v1451 = vld [vmem:[%s1450] sm:$0xff]
        %s1452 = scalar_lea.vmem %s1337, %s1445
        %v1453 = vld [vmem:[%s1452] sm:$0xff]
        %v1455 = vrot.slane %v1453, 1
        %v1456 = vrot.slane %v1453, 2
        %v1457 = vrot.slane %v1453, 3
        %v1458 = vrot.slane %v1453, 4
        %v1459 = vrot.slane %v1453, 5
        %v1460 = vrot.slane %v1453, 6
        %v1461 = vrot.slane %v1453, 7
        %v1462 = vperm.slane %v1453, 0
        %v1463 = vperm.slane %v1455, 0
        %v1464 = vperm.slane %v1456, 0
        %v1465 = vperm.slane %v1457, 0
        %v1466 = vperm.slane %v1458, 0
        %v1467 = vperm.slane %v1459, 0
        %v1468 = vperm.slane %v1460, 0
        %v1469 = vperm.slane %v1461, 0
        %v1478 = vmul.f32 %v1462, %v1357
        %v1479 = vmul.f32 %v1463, %v1357
        %v1480 = vmul.f32 %v1464, %v1357
        %v1481 = vmul.f32 %v1465, %v1357
        %v1482 = vmul.f32 %v1466, %v1357
        %v1483 = vmul.f32 %v1467, %v1357
        %v1484 = vmul.f32 %v1468, %v1357
        %v1485 = vmul.f32 %v1469, %v1357
        %v1486 = vsub.f32 1.0, %v1478
        %v1487 = vsub.f32 1.0, %v1479
        %v1488 = vsub.f32 1.0, %v1480
        %v1489 = vsub.f32 1.0, %v1481
        %v1490 = vsub.f32 1.0, %v1482
        %v1491 = vsub.f32 1.0, %v1483
        %v1492 = vsub.f32 1.0, %v1484
        %v1493 = vsub.f32 1.0, %v1485
        %v1495 = vrot.slane %v1447, 1
        %v1496 = vrot.slane %v1447, 2
        %v1497 = vrot.slane %v1447, 3
        %v1498 = vrot.slane %v1447, 4
        %v1499 = vrot.slane %v1447, 5
        %v1500 = vrot.slane %v1447, 6
        %v1501 = vrot.slane %v1447, 7
        %v1502 = vperm.slane %v1447, 0
        %v1503 = vperm.slane %v1495, 0
        %v1504 = vperm.slane %v1496, 0
        %v1505 = vperm.slane %v1497, 0
        %v1506 = vperm.slane %v1498, 0
        %v1507 = vperm.slane %v1499, 0
        %v1508 = vperm.slane %v1500, 0
        %v1509 = vperm.slane %v1501, 0
        %v1518 = vmul.f32 %v1502, %v1448
        %v1519 = vmul.f32 %v1503, %v1448
        %v1520 = vmul.f32 %v1504, %v1448
        %v1521 = vmul.f32 %v1505, %v1448
        %v1522 = vmul.f32 %v1506, %v1448
        %v1523 = vmul.f32 %v1507, %v1448
        %v1524 = vmul.f32 %v1508, %v1448
        %v1525 = vmul.f32 %v1509, %v1448
        %v1526 = vld [vmem:[%s13] sm:$0xff]
        %v1527 = vld [vmem:[%s15] sm:$0x1]
        %v1529 = vperm.slane %v1527, 0
        %vm1531 = vcmask 64512
        %v1533 = vsel %vm1531, %v1348, 0
        %v1536 = vsel %vm1531, %v1349, 0
        %v1539 = vsel %vm1531, %v1350, 0
        %v1542 = vsel %vm1531, %v1351, 0
        %v1545 = vsel %vm1531, %v1352, 0
        %v1548 = vsel %vm1531, %v1353, 0
        %v1551 = vsel %vm1531, %v1354, 0
        %v1554 = vsel %vm1531, %v1355, 0
        %1556 = vmatpush.msra.mxu0 0.0
        %1557 = vmatpush.msra.mxu0 0.0
        %1558 = vmatpush.msra.mxu0 0.0
        %1559 = vmatpush.msra.mxu0 0.0
        %1560 = vmatpush.msra.mxu0 0.0
        %1561 = vmatpush.msra.mxu0 0.0
        %1562 = vmatpush.msra.mxu0 0.0
        %1563 = vmatpush.msra.mxu0 0.0
        %1564 = vmatpush.msra.mxu0 0.0
        %1565 = vmatpush.msra.mxu0 0.0
        %1566 = vmatpush.msra.mxu0 0.0
        %1567 = vmatpush.msra.mxu0 0.0
        %1568 = vmatpush.msra.mxu0 0.0
        %1569 = vmatpush.msra.mxu0 0.0
        %1570 = vmatpush.msra.mxu0 0.0
        %1571 = vmatpush.msra.mxu0 %v1526
        %1572 = vmatmul.f32.gmra.mxu0 %v1533
        %v1573 = vpop.f32.mrf.mxu0
        %v1574 = vadd.f32 %v1529, %v1573
        %1575 = vmatmul.f32.gmra.mxu0 %v1536
        %v1576 = vpop.f32.mrf.mxu0
        %v1577 = vadd.f32 %v1529, %v1576
        %1578 = vmatmul.f32.gmra.mxu0 %v1539
        %v1579 = vpop.f32.mrf.mxu0
        %v1580 = vadd.f32 %v1529, %v1579
        %1581 = vmatmul.f32.gmra.mxu0 %v1542
        %v1582 = vpop.f32.mrf.mxu0
        %v1583 = vadd.f32 %v1529, %v1582
        %1584 = vmatmul.f32.gmra.mxu0 %v1545
        %v1585 = vpop.f32.mrf.mxu0
        %v1586 = vadd.f32 %v1529, %v1585
        %1587 = vmatmul.f32.gmra.mxu0 %v1548
        %v1588 = vpop.f32.mrf.mxu0
        %v1589 = vadd.f32 %v1529, %v1588
        %1590 = vmatmul.f32.gmra.mxu0 %v1551
        %v1591 = vpop.f32.mrf.mxu0
        %v1592 = vadd.f32 %v1529, %v1591
        %1593 = vmatmul.f32.gmra.mxu0 %v1554
        %v1594 = vpop.f32.mrf.mxu0
        %v1595 = vadd.f32 %v1529, %v1594
        %1596 = vdwg.mxu0
        %1598 = vset.pattern.permute.xlu0 0
        %1599 = vperm.xlu0 %1598, %v1478
        %v1600 = vpop.permute.xlu0 %1599
        %1603 = vset.pattern.permute.xlu0 0
        %1604 = vperm.xlu0 %1603, %v1479
        %v1605 = vpop.permute.xlu0 %1604
        %1608 = vset.pattern.permute.xlu0 0
        %1609 = vperm.xlu0 %1608, %v1480
        %v1610 = vpop.permute.xlu0 %1609
        %1613 = vset.pattern.permute.xlu0 0
        %1614 = vperm.xlu0 %1613, %v1481
        %v1615 = vpop.permute.xlu0 %1614
        %1618 = vset.pattern.permute.xlu0 0
        %1619 = vperm.xlu0 %1618, %v1482
        %v1620 = vpop.permute.xlu0 %1619
        %1623 = vset.pattern.permute.xlu0 0
        %1624 = vperm.xlu0 %1623, %v1483
        %v1625 = vpop.permute.xlu0 %1624
        %1628 = vset.pattern.permute.xlu0 0
        %1629 = vperm.xlu0 %1628, %v1484
        %v1630 = vpop.permute.xlu0 %1629
        %1633 = vset.pattern.permute.xlu0 0
        %1634 = vperm.xlu0 %1633, %v1485
        %v1635 = vpop.permute.xlu0 %1634
        %v1637 = vmul.f32 %v1574, %v1600
        %v1638 = vmul.f32 %v1577, %v1605
        %v1639 = vmul.f32 %v1580, %v1610
        %v1640 = vmul.f32 %v1583, %v1615
        %v1641 = vmul.f32 %v1586, %v1620
        %v1642 = vmul.f32 %v1589, %v1625
        %v1643 = vmul.f32 %v1592, %v1630
        %v1644 = vmul.f32 %v1595, %v1635
        %v1645 = vadd.f32 %v1637, 1.0
        %v1646 = vadd.f32 %v1638, 1.0
        %v1647 = vadd.f32 %v1639, 1.0
        %v1648 = vadd.f32 %v1640, 1.0
        %v1649 = vadd.f32 %v1641, 1.0
        %v1650 = vadd.f32 %v1642, 1.0
        %v1651 = vadd.f32 %v1643, 1.0
        %v1652 = vadd.f32 %v1644, 1.0
        %v1653 = vmul.f32 %v1518, %v1645
        %v1654 = vmul.f32 %v1519, %v1646
        %v1655 = vmul.f32 %v1520, %v1647
        %v1656 = vmul.f32 %v1521, %v1648
        %v1657 = vmul.f32 %v1522, %v1649
        %v1658 = vmul.f32 %v1523, %v1650
        %v1659 = vmul.f32 %v1524, %v1651
        %v1660 = vmul.f32 %v1525, %v1652
        %1669 = vrot.lane.b32.xlu0 %v1637, 112
        %v1670 = vpop.permute.xlu0 %1669
        %1671 = vrot.lane.b32.xlu0 %v1638, 112
        %v1672 = vpop.permute.xlu0 %1671
        %1673 = vrot.lane.b32.xlu0 %v1639, 112
        %v1674 = vpop.permute.xlu0 %1673
        %1675 = vrot.lane.b32.xlu0 %v1640, 112
        %v1676 = vpop.permute.xlu0 %1675
        %1677 = vrot.lane.b32.xlu0 %v1641, 112
        %v1678 = vpop.permute.xlu0 %1677
        %1679 = vrot.lane.b32.xlu0 %v1642, 112
        %v1680 = vpop.permute.xlu0 %1679
        %1681 = vrot.lane.b32.xlu0 %v1643, 112
        %v1682 = vpop.permute.xlu0 %1681
        %1683 = vrot.lane.b32.xlu0 %v1644, 112
        %v1684 = vpop.permute.xlu0 %1683
        %v1693 = vadd.f32 %v1653, %v1670
        %v1694 = vadd.f32 %v1654, %v1672
        %v1695 = vadd.f32 %v1655, %v1674
        %v1696 = vadd.f32 %v1656, %v1676
        %v1697 = vadd.f32 %v1657, %v1678
        %v1698 = vadd.f32 %v1658, %v1680
        %v1699 = vadd.f32 %v1659, %v1682
        %v1700 = vadd.f32 %v1660, %v1684
        %v1701 = vld [vmem:[#allocation5] sm:$0x1]
        %v1702 = vadd.f32 %v1701, 1.0
        %v1704 = vperm.slane %v1702, 0
        %1714 = vrot.lane.b32.xlu0 %v1693, 16
        %v1715 = vpop.permute.xlu0 %1714
        %1716 = vrot.lane.b32.xlu0 %v1694, 16
        %v1717 = vpop.permute.xlu0 %1716
        %1718 = vrot.lane.b32.xlu0 %v1695, 16
        %v1719 = vpop.permute.xlu0 %1718
        %1720 = vrot.lane.b32.xlu0 %v1696, 16
        %v1721 = vpop.permute.xlu0 %1720
        %1722 = vrot.lane.b32.xlu0 %v1697, 16
        %v1723 = vpop.permute.xlu0 %1722
        %1724 = vrot.lane.b32.xlu0 %v1698, 16
        %v1725 = vpop.permute.xlu0 %1724
        %1726 = vrot.lane.b32.xlu0 %v1699, 16
        %v1727 = vpop.permute.xlu0 %1726
        %1728 = vrot.lane.b32.xlu0 %v1700, 16
        %v1729 = vpop.permute.xlu0 %1728
        %v1738 = vmul.f32 %v1704, %v1715
        %v1739 = vmul.f32 %v1704, %v1717
        %v1740 = vmul.f32 %v1704, %v1719
        %v1741 = vmul.f32 %v1704, %v1721
        %v1742 = vmul.f32 %v1704, %v1723
        %v1743 = vmul.f32 %v1704, %v1725
        %v1744 = vmul.f32 %v1704, %v1727
        %v1745 = vmul.f32 %v1704, %v1729
        %v1747 = vperm.slane %v1701, 0
        %1757 = vrot.lane.b32.xlu0 %v1738, 112
        %v1758 = vpop.permute.xlu0 %1757
        %1759 = vrot.lane.b32.xlu0 %v1739, 112
        %v1760 = vpop.permute.xlu0 %1759
        %1761 = vrot.lane.b32.xlu0 %v1740, 112
        %v1762 = vpop.permute.xlu0 %1761
        %1763 = vrot.lane.b32.xlu0 %v1741, 112
        %v1764 = vpop.permute.xlu0 %1763
        %1765 = vrot.lane.b32.xlu0 %v1742, 112
        %v1766 = vpop.permute.xlu0 %1765
        %1767 = vrot.lane.b32.xlu0 %v1743, 112
        %v1768 = vpop.permute.xlu0 %1767
        %1769 = vrot.lane.b32.xlu0 %v1744, 112
        %v1770 = vpop.permute.xlu0 %1769
        %1771 = vrot.lane.b32.xlu0 %v1745, 112
        %v1772 = vpop.permute.xlu0 %1771
        %v1781 = vadd.f32 %v1747, %v1758
        %v1782 = vadd.f32 %v1747, %v1760
        %v1783 = vadd.f32 %v1747, %v1762
        %v1784 = vadd.f32 %v1747, %v1764
        %v1785 = vadd.f32 %v1747, %v1766
        %v1786 = vadd.f32 %v1747, %v1768
        %v1787 = vadd.f32 %v1747, %v1770
        %v1788 = vadd.f32 %v1747, %v1772
        %v1789 = vld [vmem:[%s25] sm:$0xff]
        %v1790 = vld [vmem:[%s25 + $0x8] sm:$0xff]
        %v1791 = vld [vmem:[%s27] sm:$0x1]
        %v1793 = vperm.slane %v1791, 0
        %vm1795 = vcmask 130048
        %v1797 = vsel %vm1795, %v1781, 0
        %v1800 = vsel %vm1795, %v1782, 0
        %v1803 = vsel %vm1795, %v1783, 0
        %v1806 = vsel %vm1795, %v1784, 0
        %v1809 = vsel %vm1795, %v1785, 0
        %v1812 = vsel %vm1795, %v1786, 0
        %v1815 = vsel %vm1795, %v1787, 0
        %v1818 = vsel %vm1795, %v1788, 0
        %1820 = vmatpush.msra.mxu0 0.0
        %1821 = vmatpush.msra.mxu0 0.0
        %1822 = vmatpush.msra.mxu0 0.0
        %1823 = vmatpush.msra.mxu0 0.0
        %1824 = vmatpush.msra.mxu0 0.0
        %1825 = vmatpush.msra.mxu0 0.0
        %1826 = vmatpush.msra.mxu0 0.0
        %1827 = vmatpush.msra.mxu0 0.0
        %1828 = vmatpush.msra.mxu0 0.0
        %1829 = vmatpush.msra.mxu0 0.0
        %1830 = vmatpush.msra.mxu0 0.0
        %1831 = vmatpush.msra.mxu0 0.0
        %1832 = vmatpush.msra.mxu0 0.0
        %1833 = vmatpush.msra.mxu0 0.0
        %1834 = vmatpush.msra.mxu0 %v1790
        %1835 = vmatpush.msra.mxu0 %v1789
        %1836 = vmatmul.f32.gmra.mxu0 %v1797
        %v1837 = vpop.f32.mrf.mxu0
        %v1838 = vadd.f32 %v1793, %v1837
        %1839 = vmatmul.f32.gmra.mxu0 %v1800
        %v1840 = vpop.f32.mrf.mxu0
        %v1841 = vadd.f32 %v1793, %v1840
        %1842 = vmatmul.f32.gmra.mxu0 %v1803
        %v1843 = vpop.f32.mrf.mxu0
        %v1844 = vadd.f32 %v1793, %v1843
        %1845 = vmatmul.f32.gmra.mxu0 %v1806
        %v1846 = vpop.f32.mrf.mxu0
        %v1847 = vadd.f32 %v1793, %v1846
        %1848 = vmatmul.f32.gmra.mxu0 %v1809
        %v1849 = vpop.f32.mrf.mxu0
        %v1850 = vadd.f32 %v1793, %v1849
        %1851 = vmatmul.f32.gmra.mxu0 %v1812
        %v1852 = vpop.f32.mrf.mxu0
        %v1853 = vadd.f32 %v1793, %v1852
        %1854 = vmatmul.f32.gmra.mxu0 %v1815
        %v1855 = vpop.f32.mrf.mxu0
        %v1856 = vadd.f32 %v1793, %v1855
        %1857 = vmatmul.f32.gmra.mxu0 %v1818
        %v1858 = vpop.f32.mrf.mxu0
        %v1859 = vadd.f32 %v1793, %v1858
        %1860 = vdwg.mxu0
        %v1861 = vmul.f32 %v1838, %v1600
        %v1862 = vmul.f32 %v1841, %v1605
        %v1863 = vmul.f32 %v1844, %v1610
        %v1864 = vmul.f32 %v1847, %v1615
        %v1865 = vmul.f32 %v1850, %v1620
        %v1866 = vmul.f32 %v1853, %v1625
        %v1867 = vmul.f32 %v1856, %v1630
        %v1868 = vmul.f32 %v1859, %v1635
        %v1869 = vld [vmem:[%s67] sm:$0x1]
        %v1870 = vadd.f32 %v1348, %v1861
        %v1871 = vadd.f32 %v1349, %v1862
        %v1872 = vadd.f32 %v1350, %v1863
        %v1873 = vadd.f32 %v1351, %v1864
        %v1874 = vadd.f32 %v1352, %v1865
        %v1875 = vadd.f32 %v1353, %v1866
        %v1876 = vadd.f32 %v1354, %v1867
        %v1877 = vadd.f32 %v1355, %v1868
        %v1878 = vsel %vm1531, %v1870, 0.0
        %1879 = vadd.xlane.f32.xlu0 %v1878
        %v1880 = vpop.xlane.xlu0 %1879
        %v1881 = vsel %vm1531, %v1871, 0.0
        %1882 = vadd.xlane.f32.xlu0 %v1881
        %v1883 = vpop.xlane.xlu0 %1882
        %v1884 = vsel %vm1531, %v1872, 0.0
        %1885 = vadd.xlane.f32.xlu0 %v1884
        %v1886 = vpop.xlane.xlu0 %1885
        %v1887 = vsel %vm1531, %v1873, 0.0
        %1888 = vadd.xlane.f32.xlu0 %v1887
        %v1889 = vpop.xlane.xlu0 %1888
        %v1890 = vsel %vm1531, %v1874, 0.0
        %1891 = vadd.xlane.f32.xlu0 %v1890
        %v1892 = vpop.xlane.xlu0 %1891
        %v1893 = vsel %vm1531, %v1875, 0.0
        %1894 = vadd.xlane.f32.xlu0 %v1893
        %v1895 = vpop.xlane.xlu0 %1894
        %v1896 = vsel %vm1531, %v1876, 0.0
        %1897 = vadd.xlane.f32.xlu0 %v1896
        %v1898 = vpop.xlane.xlu0 %1897
        %v1899 = vsel %vm1531, %v1877, 0.0
        %1900 = vadd.xlane.f32.xlu0 %v1899
        %v1901 = vpop.xlane.xlu0 %1900
        %v1902 = vrcp.pop 8.0
        %v1903 = vmul.f32 8.0, %v1902
        %v1904 = vsub.f32 1.0, %v1903
        %v1905 = vmul.f32 %v1902, %v1904
        %v1906 = vadd.f32 %v1902, %v1905
        %vm1907 = vweird.f32 %v1902
        %v1908 = vsel %vm1907, %v1902, %v1906
        %v1909 = vmul.f32 %v1880, %v1908
        %v1910 = vmul.f32 %v1883, %v1908
        %v1911 = vmul.f32 %v1886, %v1908
        %v1912 = vmul.f32 %v1889, %v1908
        %v1913 = vmul.f32 %v1892, %v1908
        %v1914 = vmul.f32 %v1895, %v1908
        %v1915 = vmul.f32 %v1898, %v1908
        %v1916 = vmul.f32 %v1901, %v1908
        %v1917 = vsub.f32 %v1870, %v1909
        %v1918 = vsub.f32 %v1871, %v1910
        %v1919 = vsub.f32 %v1872, %v1911
        %v1920 = vsub.f32 %v1873, %v1912
        %v1921 = vsub.f32 %v1874, %v1913
        %v1922 = vsub.f32 %v1875, %v1914
        %v1923 = vsub.f32 %v1876, %v1915
        %v1924 = vsub.f32 %v1877, %v1916
        %v1925 = vmul.f32 %v1917, %v1917
        %v1926 = vmul.f32 %v1918, %v1918
        %v1927 = vmul.f32 %v1919, %v1919
        %v1928 = vmul.f32 %v1920, %v1920
        %v1929 = vmul.f32 %v1921, %v1921
        %v1930 = vmul.f32 %v1922, %v1922
        %v1931 = vmul.f32 %v1923, %v1923
        %v1932 = vmul.f32 %v1924, %v1924
        %v1933 = vsel %vm1531, %v1925, 0.0
        %1934 = vadd.xlane.f32.xlu0 %v1933
        %v1935 = vpop.xlane.xlu0 %1934
        %v1936 = vsel %vm1531, %v1926, 0.0
        %1937 = vadd.xlane.f32.xlu0 %v1936
        %v1938 = vpop.xlane.xlu0 %1937
        %v1939 = vsel %vm1531, %v1927, 0.0
        %1940 = vadd.xlane.f32.xlu0 %v1939
        %v1941 = vpop.xlane.xlu0 %1940
        %v1942 = vsel %vm1531, %v1928, 0.0
        %1943 = vadd.xlane.f32.xlu0 %v1942
        %v1944 = vpop.xlane.xlu0 %1943
        %v1945 = vsel %vm1531, %v1929, 0.0
        %1946 = vadd.xlane.f32.xlu0 %v1945
        %v1947 = vpop.xlane.xlu0 %1946
        %v1948 = vsel %vm1531, %v1930, 0.0
        %1949 = vadd.xlane.f32.xlu0 %v1948
        %v1950 = vpop.xlane.xlu0 %1949
        %v1951 = vsel %vm1531, %v1931, 0.0
        %1952 = vadd.xlane.f32.xlu0 %v1951
        %v1953 = vpop.xlane.xlu0 %1952
        %v1954 = vsel %vm1531, %v1932, 0.0
        %1955 = vadd.xlane.f32.xlu0 %v1954
        %v1956 = vpop.xlane.xlu0 %1955
        %v1957 = vmul.f32 %v1935, %v1908
        %v1958 = vmul.f32 %v1938, %v1908
        %v1959 = vmul.f32 %v1941, %v1908
        %v1960 = vmul.f32 %v1944, %v1908
        %v1961 = vmul.f32 %v1947, %v1908
        %v1962 = vmul.f32 %v1950, %v1908
        %v1963 = vmul.f32 %v1953, %v1908
        %v1964 = vmul.f32 %v1956, %v1908
        %v1965 = vadd.f32 %v1957, 1e-05
        %v1966 = vadd.f32 %v1958, 1e-05
        %v1967 = vadd.f32 %v1959, 1e-05
        %v1968 = vadd.f32 %v1960, 1e-05
        %v1969 = vadd.f32 %v1961, 1e-05
        %v1970 = vadd.f32 %v1962, 1e-05
        %v1971 = vadd.f32 %v1963, 1e-05
        %v1972 = vadd.f32 %v1964, 1e-05
        %v1973 = vrsqrt.pop %v1965
        %v1974 = vmul.f32 %v1973, %v1965
        %v1975 = vmul.f32 %v1974, %v1973
        %v1976 = vmul.f32 0.5, %v1975
        %v1977 = vsub.f32 1.5, %v1976
        %v1978 = vmul.f32 %v1973, %v1977
        %vm1979 = vweird.f32 %v1965
        %vm1980 = vweird.f32 %v1973
        %vm1981 = vmor %vm1979, %vm1980
        %v1982 = vsel %vm1981, %v1973, %v1978
        %v1983 = vrsqrt.pop %v1966
        %v1984 = vmul.f32 %v1983, %v1966
        %v1985 = vmul.f32 %v1984, %v1983
        %v1986 = vmul.f32 0.5, %v1985
        %v1987 = vsub.f32 1.5, %v1986
        %v1988 = vmul.f32 %v1983, %v1987
        %vm1989 = vweird.f32 %v1966
        %vm1990 = vweird.f32 %v1983
        %vm1991 = vmor %vm1989, %vm1990
        %v1992 = vsel %vm1991, %v1983, %v1988
        %v1993 = vrsqrt.pop %v1967
        %v1994 = vmul.f32 %v1993, %v1967
        %v1995 = vmul.f32 %v1994, %v1993
        %v1996 = vmul.f32 0.5, %v1995
        %v1997 = vsub.f32 1.5, %v1996
        %v1998 = vmul.f32 %v1993, %v1997
        %vm1999 = vweird.f32 %v1967
        %vm2000 = vweird.f32 %v1993
        %vm2001 = vmor %vm1999, %vm2000
        %v2002 = vsel %vm2001, %v1993, %v1998
        %v2003 = vrsqrt.pop %v1968
        %v2004 = vmul.f32 %v2003, %v1968
        %v2005 = vmul.f32 %v2004, %v2003
        %v2006 = vmul.f32 0.5, %v2005
        %v2007 = vsub.f32 1.5, %v2006
        %v2008 = vmul.f32 %v2003, %v2007
        %vm2009 = vweird.f32 %v1968
        %vm2010 = vweird.f32 %v2003
        %vm2011 = vmor %vm2009, %vm2010
        %v2012 = vsel %vm2011, %v2003, %v2008
        %v2013 = vrsqrt.pop %v1969
        %v2014 = vmul.f32 %v2013, %v1969
        %v2015 = vmul.f32 %v2014, %v2013
        %v2016 = vmul.f32 0.5, %v2015
        %v2017 = vsub.f32 1.5, %v2016
        %v2018 = vmul.f32 %v2013, %v2017
        %vm2019 = vweird.f32 %v1969
        %vm2020 = vweird.f32 %v2013
        %vm2021 = vmor %vm2019, %vm2020
        %v2022 = vsel %vm2021, %v2013, %v2018
        %v2023 = vrsqrt.pop %v1970
        %v2024 = vmul.f32 %v2023, %v1970
        %v2025 = vmul.f32 %v2024, %v2023
        %v2026 = vmul.f32 0.5, %v2025
        %v2027 = vsub.f32 1.5, %v2026
        %v2028 = vmul.f32 %v2023, %v2027
        %vm2029 = vweird.f32 %v1970
        %vm2030 = vweird.f32 %v2023
        %vm2031 = vmor %vm2029, %vm2030
        %v2032 = vsel %vm2031, %v2023, %v2028
        %v2033 = vrsqrt.pop %v1971
        %v2034 = vmul.f32 %v2033, %v1971
        %v2035 = vmul.f32 %v2034, %v2033
        %v2036 = vmul.f32 0.5, %v2035
        %v2037 = vsub.f32 1.5, %v2036
        %v2038 = vmul.f32 %v2033, %v2037
        %vm2039 = vweird.f32 %v1971
        %vm2040 = vweird.f32 %v2033
        %vm2041 = vmor %vm2039, %vm2040
        %v2042 = vsel %vm2041, %v2033, %v2038
        %v2043 = vrsqrt.pop %v1972
        %v2044 = vmul.f32 %v2043, %v1972
        %v2045 = vmul.f32 %v2044, %v2043
        %v2046 = vmul.f32 0.5, %v2045
        %v2047 = vsub.f32 1.5, %v2046
        %v2048 = vmul.f32 %v2043, %v2047
        %vm2049 = vweird.f32 %v1972
        %vm2050 = vweird.f32 %v2043
        %vm2051 = vmor %vm2049, %vm2050
        %v2052 = vsel %vm2051, %v2043, %v2048
        %v2053 = vmul.f32 %v1917, %v1982
        %v2054 = vmul.f32 %v1918, %v1992
        %v2055 = vmul.f32 %v1919, %v2002
        %v2056 = vmul.f32 %v1920, %v2012
        %v2057 = vmul.f32 %v1921, %v2022
        %v2058 = vmul.f32 %v1922, %v2032
        %v2059 = vmul.f32 %v1923, %v2042
        %v2060 = vmul.f32 %v1924, %v2052
        %v2062 = vperm.slane %v1869, 0
        %v2064 = vmul.f32 %v2053, %v2062
        %v2065 = vmul.f32 %v2054, %v2062
        %v2066 = vmul.f32 %v2055, %v2062
        %v2067 = vmul.f32 %v2056, %v2062
        %v2068 = vmul.f32 %v2057, %v2062
        %v2069 = vmul.f32 %v2058, %v2062
        %v2070 = vmul.f32 %v2059, %v2062
        %v2071 = vmul.f32 %v2060, %v2062
        %2072 = vrot.lane.b32.xlu0 %v2062, 120
        %v2073 = vpop.permute.xlu0 %2072
        %v2075 = vadd.f32 %v2064, %v2073
        %v2076 = vadd.f32 %v2065, %v2073
        %v2077 = vadd.f32 %v2066, %v2073
        %v2078 = vadd.f32 %v2067, %v2073
        %v2079 = vadd.f32 %v2068, %v2073
        %v2080 = vadd.f32 %v2069, %v2073
        %v2081 = vadd.f32 %v2070, %v2073
        %v2082 = vadd.f32 %v2071, %v2073
        %v2083 = vld [vmem:[%s59] sm:$0xff]
        %v2084 = vld [vmem:[%s61] sm:$0x1]
        %v2086 = vperm.slane %v2084, 0
        %v2089 = vsel %vm1531, %v2075, 0
        %v2092 = vsel %vm1531, %v2076, 0
        %v2095 = vsel %vm1531, %v2077, 0
        %v2098 = vsel %vm1531, %v2078, 0
        %v2101 = vsel %vm1531, %v2079, 0
        %v2104 = vsel %vm1531, %v2080, 0
        %v2107 = vsel %vm1531, %v2081, 0
        %v2110 = vsel %vm1531, %v2082, 0
        %2112 = vmatpush.msra.mxu0 0.0
        %2113 = vmatpush.msra.mxu0 0.0
        %2114 = vmatpush.msra.mxu0 0.0
        %2115 = vmatpush.msra.mxu0 0.0
        %2116 = vmatpush.msra.mxu0 0.0
        %2117 = vmatpush.msra.mxu0 0.0
        %2118 = vmatpush.msra.mxu0 0.0
        %2119 = vmatpush.msra.mxu0 0.0
        %2120 = vmatpush.msra.mxu0 0.0
        %2121 = vmatpush.msra.mxu0 0.0
        %2122 = vmatpush.msra.mxu0 0.0
        %2123 = vmatpush.msra.mxu0 0.0
        %2124 = vmatpush.msra.mxu0 0.0
        %2125 = vmatpush.msra.mxu0 0.0
        %2126 = vmatpush.msra.mxu0 0.0
        %2127 = vmatpush.msra.mxu0 %v2083
        %2128 = vmatmul.f32.gmra.mxu0 %v2089
        %v2129 = vpop.f32.mrf.mxu0
        %v2130 = vadd.f32 %v2086, %v2129
        %2131 = vmatmul.f32.gmra.mxu0 %v2092
        %v2132 = vpop.f32.mrf.mxu0
        %v2133 = vadd.f32 %v2086, %v2132
        %2134 = vmatmul.f32.gmra.mxu0 %v2095
        %v2135 = vpop.f32.mrf.mxu0
        %v2136 = vadd.f32 %v2086, %v2135
        %2137 = vmatmul.f32.gmra.mxu0 %v2098
        %v2138 = vpop.f32.mrf.mxu0
        %v2139 = vadd.f32 %v2086, %v2138
        %2140 = vmatmul.f32.gmra.mxu0 %v2101
        %v2141 = vpop.f32.mrf.mxu0
        %v2142 = vadd.f32 %v2086, %v2141
        %2143 = vmatmul.f32.gmra.mxu0 %v2104
        %v2144 = vpop.f32.mrf.mxu0
        %v2145 = vadd.f32 %v2086, %v2144
        %2146 = vmatmul.f32.gmra.mxu0 %v2107
        %v2147 = vpop.f32.mrf.mxu0
        %v2148 = vadd.f32 %v2086, %v2147
        %2149 = vmatmul.f32.gmra.mxu0 %v2110
        %v2150 = vpop.f32.mrf.mxu0
        %v2151 = vadd.f32 %v2086, %v2150
        %2152 = vdwg.mxu0
        %v2153 = vmax.f32 %v2130, 0.0
        %v2154 = vmax.f32 %v2133, 0.0
        %v2155 = vmax.f32 %v2136, 0.0
        %v2156 = vmax.f32 %v2139, 0.0
        %v2157 = vmax.f32 %v2142, 0.0
        %v2158 = vmax.f32 %v2145, 0.0
        %v2159 = vmax.f32 %v2148, 0.0
        %v2160 = vmax.f32 %v2151, 0.0
        %v2161 = vld [vmem:[%s63] sm:$0xff]
        %v2162 = vld [vmem:[%s63 + $0x8] sm:$0xff]
        %v2163 = vld [vmem:[%s65] sm:$0x1]
        %v2165 = vperm.slane %v2163, 0
        %v2168 = vsel %vm1795, %v2153, 0
        %v2171 = vsel %vm1795, %v2154, 0
        %v2174 = vsel %vm1795, %v2155, 0
        %v2177 = vsel %vm1795, %v2156, 0
        %v2180 = vsel %vm1795, %v2157, 0
        %v2183 = vsel %vm1795, %v2158, 0
        %v2186 = vsel %vm1795, %v2159, 0
        %v2189 = vsel %vm1795, %v2160, 0
        %2191 = vmatpush.msra.mxu0 0.0
        %2192 = vmatpush.msra.mxu0 0.0
        %2193 = vmatpush.msra.mxu0 0.0
        %2194 = vmatpush.msra.mxu0 0.0
        %2195 = vmatpush.msra.mxu0 0.0
        %2196 = vmatpush.msra.mxu0 0.0
        %2197 = vmatpush.msra.mxu0 0.0
        %2198 = vmatpush.msra.mxu0 0.0
        %2199 = vmatpush.msra.mxu0 0.0
        %2200 = vmatpush.msra.mxu0 0.0
        %2201 = vmatpush.msra.mxu0 0.0
        %2202 = vmatpush.msra.mxu0 0.0
        %2203 = vmatpush.msra.mxu0 0.0
        %2204 = vmatpush.msra.mxu0 0.0
        %2205 = vmatpush.msra.mxu0 %v2162
        %2206 = vmatpush.msra.mxu0 %v2161
        %2207 = vmatmul.f32.gmra.mxu0 %v2168
        %v2208 = vpop.f32.mrf.mxu0
        %v2209 = vadd.f32 %v2165, %v2208
        %2210 = vmatmul.f32.gmra.mxu0 %v2171
        %v2211 = vpop.f32.mrf.mxu0
        %v2212 = vadd.f32 %v2165, %v2211
        %2213 = vmatmul.f32.gmra.mxu0 %v2174
        %v2214 = vpop.f32.mrf.mxu0
        %v2215 = vadd.f32 %v2165, %v2214
        %2216 = vmatmul.f32.gmra.mxu0 %v2177
        %v2217 = vpop.f32.mrf.mxu0
        %v2218 = vadd.f32 %v2165, %v2217
        %2219 = vmatmul.f32.gmra.mxu0 %v2180
        %v2220 = vpop.f32.mrf.mxu0
        %v2221 = vadd.f32 %v2165, %v2220
        %2222 = vmatmul.f32.gmra.mxu0 %v2183
        %v2223 = vpop.f32.mrf.mxu0
        %v2224 = vadd.f32 %v2165, %v2223
        %2225 = vmatmul.f32.gmra.mxu0 %v2186
        %v2226 = vpop.f32.mrf.mxu0
        %v2227 = vadd.f32 %v2165, %v2226
        %2228 = vmatmul.f32.gmra.mxu0 %v2189
        %v2229 = vpop.f32.mrf.mxu0
        %v2230 = vadd.f32 %v2165, %v2229
        %2231 = vdwg.mxu0
        %v2232 = vadd.f32 %v2075, %v2209
        %v2233 = vadd.f32 %v2076, %v2212
        %v2234 = vadd.f32 %v2077, %v2215
        %v2235 = vadd.f32 %v2078, %v2218
        %v2236 = vadd.f32 %v2079, %v2221
        %v2237 = vadd.f32 %v2080, %v2224
        %v2238 = vadd.f32 %v2081, %v2227
        %v2239 = vadd.f32 %v2082, %v2230
        %v2240 = vsel %vm1531, %v2232, 0.0
        %2241 = vadd.xlane.f32.xlu0 %v2240
        %v2242 = vpop.xlane.xlu0 %2241
        %v2243 = vsel %vm1531, %v2233, 0.0
        %2244 = vadd.xlane.f32.xlu0 %v2243
        %v2245 = vpop.xlane.xlu0 %2244
        %v2246 = vsel %vm1531, %v2234, 0.0
        %2247 = vadd.xlane.f32.xlu0 %v2246
        %v2248 = vpop.xlane.xlu0 %2247
        %v2249 = vsel %vm1531, %v2235, 0.0
        %2250 = vadd.xlane.f32.xlu0 %v2249
        %v2251 = vpop.xlane.xlu0 %2250
        %v2252 = vsel %vm1531, %v2236, 0.0
        %2253 = vadd.xlane.f32.xlu0 %v2252
        %v2254 = vpop.xlane.xlu0 %2253
        %v2255 = vsel %vm1531, %v2237, 0.0
        %2256 = vadd.xlane.f32.xlu0 %v2255
        %v2257 = vpop.xlane.xlu0 %2256
        %v2258 = vsel %vm1531, %v2238, 0.0
        %2259 = vadd.xlane.f32.xlu0 %v2258
        %v2260 = vpop.xlane.xlu0 %2259
        %v2261 = vsel %vm1531, %v2239, 0.0
        %2262 = vadd.xlane.f32.xlu0 %v2261
        %v2263 = vpop.xlane.xlu0 %2262
        %v2264 = vmul.f32 %v2242, %v1908
        %v2265 = vmul.f32 %v2245, %v1908
        %v2266 = vmul.f32 %v2248, %v1908
        %v2267 = vmul.f32 %v2251, %v1908
        %v2268 = vmul.f32 %v2254, %v1908
        %v2269 = vmul.f32 %v2257, %v1908
        %v2270 = vmul.f32 %v2260, %v1908
        %v2271 = vmul.f32 %v2263, %v1908
        %v2272 = vsub.f32 %v2232, %v2264
        %v2273 = vsub.f32 %v2233, %v2265
        %v2274 = vsub.f32 %v2234, %v2266
        %v2275 = vsub.f32 %v2235, %v2267
        %v2276 = vsub.f32 %v2236, %v2268
        %v2277 = vsub.f32 %v2237, %v2269
        %v2278 = vsub.f32 %v2238, %v2270
        %v2279 = vsub.f32 %v2239, %v2271
        %v2280 = vmul.f32 %v2272, %v2272
        %v2281 = vmul.f32 %v2273, %v2273
        %v2282 = vmul.f32 %v2274, %v2274
        %v2283 = vmul.f32 %v2275, %v2275
        %v2284 = vmul.f32 %v2276, %v2276
        %v2285 = vmul.f32 %v2277, %v2277
        %v2286 = vmul.f32 %v2278, %v2278
        %v2287 = vmul.f32 %v2279, %v2279
        %v2288 = vsel %vm1531, %v2280, 0.0
        %2289 = vadd.xlane.f32.xlu0 %v2288
        %v2290 = vpop.xlane.xlu0 %2289
        %v2291 = vsel %vm1531, %v2281, 0.0
        %2292 = vadd.xlane.f32.xlu0 %v2291
        %v2293 = vpop.xlane.xlu0 %2292
        %v2294 = vsel %vm1531, %v2282, 0.0
        %2295 = vadd.xlane.f32.xlu0 %v2294
        %v2296 = vpop.xlane.xlu0 %2295
        %v2297 = vsel %vm1531, %v2283, 0.0
        %2298 = vadd.xlane.f32.xlu0 %v2297
        %v2299 = vpop.xlane.xlu0 %2298
        %v2300 = vsel %vm1531, %v2284, 0.0
        %2301 = vadd.xlane.f32.xlu0 %v2300
        %v2302 = vpop.xlane.xlu0 %2301
        %v2303 = vsel %vm1531, %v2285, 0.0
        %2304 = vadd.xlane.f32.xlu0 %v2303
        %v2305 = vpop.xlane.xlu0 %2304
        %v2306 = vsel %vm1531, %v2286, 0.0
        %2307 = vadd.xlane.f32.xlu0 %v2306
        %v2308 = vpop.xlane.xlu0 %2307
        %v2309 = vsel %vm1531, %v2287, 0.0
        %2310 = vadd.xlane.f32.xlu0 %v2309
        %v2311 = vpop.xlane.xlu0 %2310
        %v2312 = vmul.f32 %v2290, %v1908
        %v2313 = vmul.f32 %v2293, %v1908
        %v2314 = vmul.f32 %v2296, %v1908
        %v2315 = vmul.f32 %v2299, %v1908
        %v2316 = vmul.f32 %v2302, %v1908
        %v2317 = vmul.f32 %v2305, %v1908
        %v2318 = vmul.f32 %v2308, %v1908
        %v2319 = vmul.f32 %v2311, %v1908
        %v2320 = vadd.f32 %v2312, 1e-05
        %v2321 = vadd.f32 %v2313, 1e-05
        %v2322 = vadd.f32 %v2314, 1e-05
        %v2323 = vadd.f32 %v2315, 1e-05
        %v2324 = vadd.f32 %v2316, 1e-05
        %v2325 = vadd.f32 %v2317, 1e-05
        %v2326 = vadd.f32 %v2318, 1e-05
        %v2327 = vadd.f32 %v2319, 1e-05
        %v2328 = vrsqrt.pop %v2320
        %v2329 = vmul.f32 %v2328, %v2320
        %v2330 = vmul.f32 %v2329, %v2328
        %v2331 = vmul.f32 0.5, %v2330
        %v2332 = vsub.f32 1.5, %v2331
        %v2333 = vmul.f32 %v2328, %v2332
        %vm2334 = vweird.f32 %v2320
        %vm2335 = vweird.f32 %v2328
        %vm2336 = vmor %vm2334, %vm2335
        %v2337 = vsel %vm2336, %v2328, %v2333
        %v2338 = vrsqrt.pop %v2321
        %v2339 = vmul.f32 %v2338, %v2321
        %v2340 = vmul.f32 %v2339, %v2338
        %v2341 = vmul.f32 0.5, %v2340
        %v2342 = vsub.f32 1.5, %v2341
        %v2343 = vmul.f32 %v2338, %v2342
        %vm2344 = vweird.f32 %v2321
        %vm2345 = vweird.f32 %v2338
        %vm2346 = vmor %vm2344, %vm2345
        %v2347 = vsel %vm2346, %v2338, %v2343
        %v2348 = vrsqrt.pop %v2322
        %v2349 = vmul.f32 %v2348, %v2322
        %v2350 = vmul.f32 %v2349, %v2348
        %v2351 = vmul.f32 0.5, %v2350
        %v2352 = vsub.f32 1.5, %v2351
        %v2353 = vmul.f32 %v2348, %v2352
        %vm2354 = vweird.f32 %v2322
        %vm2355 = vweird.f32 %v2348
        %vm2356 = vmor %vm2354, %vm2355
        %v2357 = vsel %vm2356, %v2348, %v2353
        %v2358 = vrsqrt.pop %v2323
        %v2359 = vmul.f32 %v2358, %v2323
        %v2360 = vmul.f32 %v2359, %v2358
        %v2361 = vmul.f32 0.5, %v2360
        %v2362 = vsub.f32 1.5, %v2361
        %v2363 = vmul.f32 %v2358, %v2362
        %vm2364 = vweird.f32 %v2323
        %vm2365 = vweird.f32 %v2358
        %vm2366 = vmor %vm2364, %vm2365
        %v2367 = vsel %vm2366, %v2358, %v2363
        %v2368 = vrsqrt.pop %v2324
        %v2369 = vmul.f32 %v2368, %v2324
        %v2370 = vmul.f32 %v2369, %v2368
        %v2371 = vmul.f32 0.5, %v2370
        %v2372 = vsub.f32 1.5, %v2371
        %v2373 = vmul.f32 %v2368, %v2372
        %vm2374 = vweird.f32 %v2324
        %vm2375 = vweird.f32 %v2368
        %vm2376 = vmor %vm2374, %vm2375
        %v2377 = vsel %vm2376, %v2368, %v2373
        %v2378 = vrsqrt.pop %v2325
        %v2379 = vmul.f32 %v2378, %v2325
        %v2380 = vmul.f32 %v2379, %v2378
        %v2381 = vmul.f32 0.5, %v2380
        %v2382 = vsub.f32 1.5, %v2381
        %v2383 = vmul.f32 %v2378, %v2382
        %vm2384 = vweird.f32 %v2325
        %vm2385 = vweird.f32 %v2378
        %vm2386 = vmor %vm2384, %vm2385
        %v2387 = vsel %vm2386, %v2378, %v2383
        %v2388 = vrsqrt.pop %v2326
        %v2389 = vmul.f32 %v2388, %v2326
        %v2390 = vmul.f32 %v2389, %v2388
        %v2391 = vmul.f32 0.5, %v2390
        %v2392 = vsub.f32 1.5, %v2391
        %v2393 = vmul.f32 %v2388, %v2392
        %vm2394 = vweird.f32 %v2326
        %vm2395 = vweird.f32 %v2388
        %vm2396 = vmor %vm2394, %vm2395
        %v2397 = vsel %vm2396, %v2388, %v2393
        %v2398 = vrsqrt.pop %v2327
        %v2399 = vmul.f32 %v2398, %v2327
        %v2400 = vmul.f32 %v2399, %v2398
        %v2401 = vmul.f32 0.5, %v2400
        %v2402 = vsub.f32 1.5, %v2401
        %v2403 = vmul.f32 %v2398, %v2402
        %vm2404 = vweird.f32 %v2327
        %vm2405 = vweird.f32 %v2398
        %vm2406 = vmor %vm2404, %vm2405
        %v2407 = vsel %vm2406, %v2398, %v2403
        %v2408 = vmul.f32 %v2272, %v2337
        %v2409 = vmul.f32 %v2273, %v2347
        %v2410 = vmul.f32 %v2274, %v2357
        %v2411 = vmul.f32 %v2275, %v2367
        %v2412 = vmul.f32 %v2276, %v2377
        %v2413 = vmul.f32 %v2277, %v2387
        %v2414 = vmul.f32 %v2278, %v2397
        %v2415 = vmul.f32 %v2279, %v2407
        %2416 = vrot.lane.b32.xlu0 %v2062, 112
        %v2417 = vpop.permute.xlu0 %2416
        %v2419 = vmul.f32 %v2408, %v2417
        %v2420 = vmul.f32 %v2409, %v2417
        %v2421 = vmul.f32 %v2410, %v2417
        %v2422 = vmul.f32 %v2411, %v2417
        %v2423 = vmul.f32 %v2412, %v2417
        %v2424 = vmul.f32 %v2413, %v2417
        %v2425 = vmul.f32 %v2414, %v2417
        %v2426 = vmul.f32 %v2415, %v2417
        %2427 = vrot.lane.b32.xlu0 %v2062, 104
        %v2428 = vpop.permute.xlu0 %2427
        %v2430 = vadd.f32 %v2419, %v2428
        %v2431 = vadd.f32 %v2420, %v2428
        %v2432 = vadd.f32 %v2421, %v2428
        %v2433 = vadd.f32 %v2422, %v2428
        %v2434 = vadd.f32 %v2423, %v2428
        %v2435 = vadd.f32 %v2424, %v2428
        %v2436 = vadd.f32 %v2425, %v2428
        %v2437 = vadd.f32 %v2426, %v2428
        %2438 = vst.msk [vmem:[%s1346] sm:$0xff] %vm1531, %v2430
        %2439 = vst.msk [vmem:[%s1346 + $0x8] sm:$0xff] %vm1531, %v2431
        %2440 = vst.msk [vmem:[%s1346 + $0x10] sm:$0xff] %vm1531, %v2432
        %2441 = vst.msk [vmem:[%s1346 + $0x18] sm:$0xff] %vm1531, %v2433
        %2442 = vst.msk [vmem:[%s1346 + $0x20] sm:$0xff] %vm1531, %v2434
        %2443 = vst.msk [vmem:[%s1346 + $0x28] sm:$0xff] %vm1531, %v2435
        %2444 = vst.msk [vmem:[%s1346 + $0x30] sm:$0xff] %vm1531, %v2436
        %2445 = vst.msk [vmem:[%s1346 + $0x38] sm:$0xff] %vm1531, %v2437
        %vm2446 = vcmp.gt.f32.partialorder %v1357, 0.0
        %v2447 = vsel %vm2446, 1, 0
        %2448 = vset.pattern.permute.xlu0 0
        %2449 = vperm.xlu0 %2448, %v2447
        %v2450 = vpop.permute.xlu0 %2449
        %vm2451 = vcmp.eq.s32.totalorder %v2450, 1
        %v2452 = vsel %vm2451, %v1693, -inf
        %v2453 = vsel %vm2451, %v1694, -inf
        %v2454 = vsel %vm2451, %v1695, -inf
        %v2455 = vsel %vm2451, %v1696, -inf
        %v2456 = vsel %vm2451, %v1697, -inf
        %v2457 = vsel %vm2451, %v1698, -inf
        %v2458 = vsel %vm2451, %v1699, -inf
        %v2459 = vsel %vm2451, %v1700, -inf
        %v2460 = vsel %vm1795, %v2452, -inf
        %v2461 = vrot.slane %v2460, 4
        %v2462 = vmax.f32 %v2460, %v2461
        %v2463 = vrot.slane %v2462, 2
        %v2464 = vmax.f32 %v2462, %v2463
        %v2465 = vrot.slane %v2464, 1
        %v2466 = vmax.f32 %v2464, %v2465
        %v2467 = vsel %vm1795, %v2453, -inf
        %v2468 = vrot.slane %v2467, 4
        %v2469 = vmax.f32 %v2467, %v2468
        %v2470 = vrot.slane %v2469, 2
        %v2471 = vmax.f32 %v2469, %v2470
        %v2472 = vrot.slane %v2471, 1
        %v2473 = vmax.f32 %v2471, %v2472
        %v2474 = vsel %vm1795, %v2454, -inf
        %v2475 = vrot.slane %v2474, 4
        %v2476 = vmax.f32 %v2474, %v2475
        %v2477 = vrot.slane %v2476, 2
        %v2478 = vmax.f32 %v2476, %v2477
        %v2479 = vrot.slane %v2478, 1
        %v2480 = vmax.f32 %v2478, %v2479
        %v2481 = vsel %vm1795, %v2455, -inf
        %v2482 = vrot.slane %v2481, 4
        %v2483 = vmax.f32 %v2481, %v2482
        %v2484 = vrot.slane %v2483, 2
        %v2485 = vmax.f32 %v2483, %v2484
        %v2486 = vrot.slane %v2485, 1
        %v2487 = vmax.f32 %v2485, %v2486
        %v2488 = vsel %vm1795, %v2456, -inf
        %v2489 = vrot.slane %v2488, 4
        %v2490 = vmax.f32 %v2488, %v2489
        %v2491 = vrot.slane %v2490, 2
        %v2492 = vmax.f32 %v2490, %v2491
        %v2493 = vrot.slane %v2492, 1
        %v2494 = vmax.f32 %v2492, %v2493
        %v2495 = vsel %vm1795, %v2457, -inf
        %v2496 = vrot.slane %v2495, 4
        %v2497 = vmax.f32 %v2495, %v2496
        %v2498 = vrot.slane %v2497, 2
        %v2499 = vmax.f32 %v2497, %v2498
        %v2500 = vrot.slane %v2499, 1
        %v2501 = vmax.f32 %v2499, %v2500
        %v2502 = vsel %vm1795, %v2458, -inf
        %v2503 = vrot.slane %v2502, 4
        %v2504 = vmax.f32 %v2502, %v2503
        %v2505 = vrot.slane %v2504, 2
        %v2506 = vmax.f32 %v2504, %v2505
        %v2507 = vrot.slane %v2506, 1
        %v2508 = vmax.f32 %v2506, %v2507
        %v2509 = vsel %vm1795, %v2459, -inf
        %v2510 = vrot.slane %v2509, 4
        %v2511 = vmax.f32 %v2509, %v2510
        %v2512 = vrot.slane %v2511, 2
        %v2513 = vmax.f32 %v2511, %v2512
        %v2514 = vrot.slane %v2513, 1
        %v2515 = vmax.f32 %v2513, %v2514
        %v2516 = vsub.f32 %v2452, %v2466
        %v2517 = vsub.f32 %v2453, %v2473
        %v2518 = vsub.f32 %v2454, %v2480
        %v2519 = vsub.f32 %v2455, %v2487
        %v2520 = vsub.f32 %v2456, %v2494
        %v2521 = vsub.f32 %v2457, %v2501
        %v2522 = vsub.f32 %v2458, %v2508
        %v2523 = vsub.f32 %v2459, %v2515
        %v2524 = vmul.f32 %v2516, 1.442695
        %v2525 = vpow.pop %v2524
        %v2526 = vmul.f32 %v2517, 1.442695
        %v2527 = vpow.pop %v2526
        %v2528 = vmul.f32 %v2518, 1.442695
        %v2529 = vpow.pop %v2528
        %v2530 = vmul.f32 %v2519, 1.442695
        %v2531 = vpow.pop %v2530
        %v2532 = vmul.f32 %v2520, 1.442695
        %v2533 = vpow.pop %v2532
        %v2534 = vmul.f32 %v2521, 1.442695
        %v2535 = vpow.pop %v2534
        %v2536 = vmul.f32 %v2522, 1.442695
        %v2537 = vpow.pop %v2536
        %v2538 = vmul.f32 %v2523, 1.442695
        %v2539 = vpow.pop %v2538
        %v2540 = vsel %vm1795, %v2525, 0.0
        %v2541 = vrot.slane %v2540, 4
        %v2542 = vadd.f32 %v2540, %v2541
        %v2543 = vrot.slane %v2542, 2
        %v2544 = vadd.f32 %v2542, %v2543
        %v2545 = vrot.slane %v2544, 1
        %v2546 = vadd.f32 %v2544, %v2545
        %v2547 = vsel %vm1795, %v2527, 0.0
        %v2548 = vrot.slane %v2547, 4
        %v2549 = vadd.f32 %v2547, %v2548
        %v2550 = vrot.slane %v2549, 2
        %v2551 = vadd.f32 %v2549, %v2550
        %v2552 = vrot.slane %v2551, 1
        %v2553 = vadd.f32 %v2551, %v2552
        %v2554 = vsel %vm1795, %v2529, 0.0
        %v2555 = vrot.slane %v2554, 4
        %v2556 = vadd.f32 %v2554, %v2555
        %v2557 = vrot.slane %v2556, 2
        %v2558 = vadd.f32 %v2556, %v2557
        %v2559 = vrot.slane %v2558, 1
        %v2560 = vadd.f32 %v2558, %v2559
        %v2561 = vsel %vm1795, %v2531, 0.0
        %v2562 = vrot.slane %v2561, 4
        %v2563 = vadd.f32 %v2561, %v2562
        %v2564 = vrot.slane %v2563, 2
        %v2565 = vadd.f32 %v2563, %v2564
        %v2566 = vrot.slane %v2565, 1
        %v2567 = vadd.f32 %v2565, %v2566
        %v2568 = vsel %vm1795, %v2533, 0.0
        %v2569 = vrot.slane %v2568, 4
        %v2570 = vadd.f32 %v2568, %v2569
        %v2571 = vrot.slane %v2570, 2
        %v2572 = vadd.f32 %v2570, %v2571
        %v2573 = vrot.slane %v2572, 1
        %v2574 = vadd.f32 %v2572, %v2573
        %v2575 = vsel %vm1795, %v2535, 0.0
        %v2576 = vrot.slane %v2575, 4
        %v2577 = vadd.f32 %v2575, %v2576
        %v2578 = vrot.slane %v2577, 2
        %v2579 = vadd.f32 %v2577, %v2578
        %v2580 = vrot.slane %v2579, 1
        %v2581 = vadd.f32 %v2579, %v2580
        %v2582 = vsel %vm1795, %v2537, 0.0
        %v2583 = vrot.slane %v2582, 4
        %v2584 = vadd.f32 %v2582, %v2583
        %v2585 = vrot.slane %v2584, 2
        %v2586 = vadd.f32 %v2584, %v2585
        %v2587 = vrot.slane %v2586, 1
        %v2588 = vadd.f32 %v2586, %v2587
        %v2589 = vsel %vm1795, %v2539, 0.0
        %v2590 = vrot.slane %v2589, 4
        %v2591 = vadd.f32 %v2589, %v2590
        %v2592 = vrot.slane %v2591, 2
        %v2593 = vadd.f32 %v2591, %v2592
        %v2594 = vrot.slane %v2593, 1
        %v2595 = vadd.f32 %v2593, %v2594
        %v2596 = vrcp.pop %v2546
        %v2597 = vrcp.pop %v2553
        %v2598 = vrcp.pop %v2560
        %v2599 = vrcp.pop %v2567
        %v2600 = vrcp.pop %v2574
        %v2601 = vrcp.pop %v2581
        %v2602 = vrcp.pop %v2588
        %v2603 = vrcp.pop %v2595
        %v2604 = vmul.f32 %v2525, %v2596
        %v2605 = vmul.f32 %v2527, %v2597
        %v2606 = vmul.f32 %v2529, %v2598
        %v2607 = vmul.f32 %v2531, %v2599
        %v2608 = vmul.f32 %v2533, %v2600
        %v2609 = vmul.f32 %v2535, %v2601
        %v2610 = vmul.f32 %v2537, %v2602
        %v2611 = vmul.f32 %v2539, %v2603
        %v2612 = vmul.f32 %v2604, %v1449
        %v2613 = vmul.f32 %v2605, %v1449
        %v2614 = vmul.f32 %v2606, %v1449
        %v2615 = vmul.f32 %v2607, %v1449
        %v2616 = vmul.f32 %v2608, %v1449
        %v2617 = vmul.f32 %v2609, %v1449
        %v2618 = vmul.f32 %v2610, %v1449
        %v2619 = vmul.f32 %v2611, %v1449
        %v2620 = vsel %vm1795, %v2612, 0.0
        %v2621 = vrot.slane %v2620, 4
        %v2622 = vadd.f32 %v2620, %v2621
        %v2623 = vrot.slane %v2622, 2
        %v2624 = vadd.f32 %v2622, %v2623
        %v2625 = vrot.slane %v2624, 1
        %v2626 = vadd.f32 %v2624, %v2625
        %v2627 = vsel %vm1795, %v2613, 0.0
        %v2628 = vrot.slane %v2627, 4
        %v2629 = vadd.f32 %v2627, %v2628
        %v2630 = vrot.slane %v2629, 2
        %v2631 = vadd.f32 %v2629, %v2630
        %v2632 = vrot.slane %v2631, 1
        %v2633 = vadd.f32 %v2631, %v2632
        %v2634 = vsel %vm1795, %v2614, 0.0
        %v2635 = vrot.slane %v2634, 4
        %v2636 = vadd.f32 %v2634, %v2635
        %v2637 = vrot.slane %v2636, 2
        %v2638 = vadd.f32 %v2636, %v2637
        %v2639 = vrot.slane %v2638, 1
        %v2640 = vadd.f32 %v2638, %v2639
        %v2641 = vsel %vm1795, %v2615, 0.0
        %v2642 = vrot.slane %v2641, 4
        %v2643 = vadd.f32 %v2641, %v2642
        %v2644 = vrot.slane %v2643, 2
        %v2645 = vadd.f32 %v2643, %v2644
        %v2646 = vrot.slane %v2645, 1
        %v2647 = vadd.f32 %v2645, %v2646
        %v2648 = vsel %vm1795, %v2616, 0.0
        %v2649 = vrot.slane %v2648, 4
        %v2650 = vadd.f32 %v2648, %v2649
        %v2651 = vrot.slane %v2650, 2
        %v2652 = vadd.f32 %v2650, %v2651
        %v2653 = vrot.slane %v2652, 1
        %v2654 = vadd.f32 %v2652, %v2653
        %v2655 = vsel %vm1795, %v2617, 0.0
        %v2656 = vrot.slane %v2655, 4
        %v2657 = vadd.f32 %v2655, %v2656
        %v2658 = vrot.slane %v2657, 2
        %v2659 = vadd.f32 %v2657, %v2658
        %v2660 = vrot.slane %v2659, 1
        %v2661 = vadd.f32 %v2659, %v2660
        %v2662 = vsel %vm1795, %v2618, 0.0
        %v2663 = vrot.slane %v2662, 4
        %v2664 = vadd.f32 %v2662, %v2663
        %v2665 = vrot.slane %v2664, 2
        %v2666 = vadd.f32 %v2664, %v2665
        %v2667 = vrot.slane %v2666, 1
        %v2668 = vadd.f32 %v2666, %v2667
        %v2669 = vsel %vm1795, %v2619, 0.0
        %v2670 = vrot.slane %v2669, 4
        %v2671 = vadd.f32 %v2669, %v2670
        %v2672 = vrot.slane %v2671, 2
        %v2673 = vadd.f32 %v2671, %v2672
        %v2674 = vrot.slane %v2673, 1
        %v2675 = vadd.f32 %v2673, %v2674
        %vm2684 = vcmask 1041409
        %v2685 = vsel %vm2684, %v2633, %v2626
        %vm2686 = vcmask 1042434
        %v2687 = vsel %vm2686, %v2640, %v2685
        %vm2688 = vcmask 1043459
        %v2689 = vsel %vm2688, %v2647, %v2687
        %vm2690 = vcmask 1044484
        %v2691 = vsel %vm2690, %v2654, %v2689
        %vm2692 = vcmask 1045509
        %v2693 = vsel %vm2692, %v2661, %v2691
        %vm2694 = vcmask 1046534
        %v2695 = vsel %vm2694, %v2668, %v2693
        %vm2696 = vcmask 1047559
        %v2697 = vsel %vm2696, %v2675, %v2695
        %2698 = vrot.lane.b32.xlu0 %v2697, 48
        %v2699 = vpop.permute.xlu0 %2698
        %v2701 = vmul.f32 %v1704, %v2699
        %2703 = vrot.lane.b32.xlu0 %v2701, 112
        %v2704 = vpop.permute.xlu0 %2703
        %v2706 = vadd.f32 %v1747, %v2704
        %v2707 = vld [vmem:[%s21] sm:$0xff]
        %v2708 = vld [vmem:[%s21 + $0x8] sm:$0xff]
        %v2709 = vld [vmem:[%s23] sm:$0x1]
        %v2711 = vperm.slane %v2709, 0
        %2714 = vrot.lane.b32.xlu0 %v2706, 96
        %v2715 = vpop.permute.xlu0 %2714
        %v2716 = vsel %vm1795, %v2715, 0
        %2718 = vmatpush.msra.mxu0 0.0
        %2719 = vmatpush.msra.mxu0 0.0
        %2720 = vmatpush.msra.mxu0 0.0
        %2721 = vmatpush.msra.mxu0 0.0
        %2722 = vmatpush.msra.mxu0 0.0
        %2723 = vmatpush.msra.mxu0 0.0
        %2724 = vmatpush.msra.mxu0 0.0
        %2725 = vmatpush.msra.mxu0 0.0
        %2726 = vmatpush.msra.mxu0 0.0
        %2727 = vmatpush.msra.mxu0 0.0
        %2728 = vmatpush.msra.mxu0 0.0
        %2729 = vmatpush.msra.mxu0 0.0
        %2730 = vmatpush.msra.mxu0 0.0
        %2731 = vmatpush.msra.mxu0 0.0
        %2732 = vmatpush.msra.mxu0 %v2708
        %2733 = vmatpush.msra.mxu0 %v2707
        %2734 = vmatmul.f32.gmra.mxu0 %v2716
        %v2735 = vpop.f32.mrf.mxu0
        %v2736 = vadd.f32 %v2711, %v2735
        %2737 = vdwg.mxu0
        %2738 = vset.pattern.permute.xlu0 0
        %2739 = vperm.xlu0 %2738, %v1453
        %v2740 = vpop.permute.xlu0 %2739
        %v2742 = vmul.f32 %v2736, %v2740
        %v2743 = vld [vmem:[%s57] sm:$0x1]
        %v2744 = vadd.f32 %v1451, %v2742
        %v2745 = vsel %vm1795, %v2744, 0.0
        %2746 = vadd.xlane.f32.xlu0 %v2745
        %v2747 = vpop.xlane.xlu0 %2746
        %v2748 = vrcp.pop 16.0
        %v2749 = vmul.f32 16.0, %v2748
        %v2750 = vsub.f32 1.0, %v2749
        %v2751 = vmul.f32 %v2748, %v2750
        %v2752 = vadd.f32 %v2748, %v2751
        %vm2753 = vweird.f32 %v2748
        %v2754 = vsel %vm2753, %v2748, %v2752
        %v2755 = vmul.f32 %v2747, %v2754
        %v2756 = vsub.f32 %v2744, %v2755
        %v2757 = vmul.f32 %v2756, %v2756
        %v2758 = vsel %vm1795, %v2757, 0.0
        %2759 = vadd.xlane.f32.xlu0 %v2758
        %v2760 = vpop.xlane.xlu0 %2759
        %v2761 = vmul.f32 %v2760, %v2754
        %v2762 = vadd.f32 %v2761, 1e-05
        %v2763 = vrsqrt.pop %v2762
        %v2764 = vmul.f32 %v2763, %v2762
        %v2765 = vmul.f32 %v2764, %v2763
        %v2766 = vmul.f32 0.5, %v2765
        %v2767 = vsub.f32 1.5, %v2766
        %v2768 = vmul.f32 %v2763, %v2767
        %vm2769 = vweird.f32 %v2762
        %vm2770 = vweird.f32 %v2763
        %vm2771 = vmor %vm2769, %vm2770
        %v2772 = vsel %vm2771, %v2763, %v2768
        %v2773 = vmul.f32 %v2756, %v2772
        %v2775 = vperm.slane %v2743, 0
        %v2777 = vmul.f32 %v2773, %v2775
        %2778 = vrot.lane.b32.xlu0 %v2775, 112
        %v2779 = vpop.permute.xlu0 %2778
        %v2781 = vadd.f32 %v2777, %v2779
        %v2782 = vld [vmem:[%s49] sm:$0xff]
        %v2783 = vld [vmem:[%s49 + $0x8] sm:$0xff]
        %v2784 = vld [vmem:[%s51] sm:$0x1]
        %v2786 = vperm.slane %v2784, 0
        %v2789 = vsel %vm1795, %v2781, 0
        %2791 = vmatpush.msra.mxu0 0.0
        %2792 = vmatpush.msra.mxu0 0.0
        %2793 = vmatpush.msra.mxu0 0.0
        %2794 = vmatpush.msra.mxu0 0.0
        %2795 = vmatpush.msra.mxu0 0.0
        %2796 = vmatpush.msra.mxu0 0.0
        %2797 = vmatpush.msra.mxu0 0.0
        %2798 = vmatpush.msra.mxu0 0.0
        %2799 = vmatpush.msra.mxu0 0.0
        %2800 = vmatpush.msra.mxu0 0.0
        %2801 = vmatpush.msra.mxu0 0.0
        %2802 = vmatpush.msra.mxu0 0.0
        %2803 = vmatpush.msra.mxu0 0.0
        %2804 = vmatpush.msra.mxu0 0.0
        %2805 = vmatpush.msra.mxu0 %v2783
        %2806 = vmatpush.msra.mxu0 %v2782
        %2807 = vmatmul.f32.gmra.mxu0 %v2789
        %v2808 = vpop.f32.mrf.mxu0
        %v2809 = vadd.f32 %v2786, %v2808
        %2810 = vdwg.mxu0
        %v2811 = vmax.f32 %v2809, 0.0
        %v2812 = vld [vmem:[%s53] sm:$0xff]
        %v2813 = vld [vmem:[%s53 + $0x8] sm:$0xff]
        %v2814 = vld [vmem:[%s53 + $0x10] sm:$0xff]
        %v2815 = vld [vmem:[%s53 + $0x18] sm:$0xff]
        %v2816 = vld [vmem:[%s55] sm:$0x1]
        %v2818 = vperm.slane %v2816, 0
        %vm2820 = vcmask 261120
        %v2822 = vsel %vm2820, %v2811, 0
        %2824 = vmatpush.msra.mxu0 0.0
        %2825 = vmatpush.msra.mxu0 0.0
        %2826 = vmatpush.msra.mxu0 0.0
        %2827 = vmatpush.msra.mxu0 0.0
        %2828 = vmatpush.msra.mxu0 0.0
        %2829 = vmatpush.msra.mxu0 0.0
        %2830 = vmatpush.msra.mxu0 0.0
        %2831 = vmatpush.msra.mxu0 0.0
        %2832 = vmatpush.msra.mxu0 0.0
        %2833 = vmatpush.msra.mxu0 0.0
        %2834 = vmatpush.msra.mxu0 0.0
        %2835 = vmatpush.msra.mxu0 0.0
        %2836 = vmatpush.msra.mxu0 %v2815
        %2837 = vmatpush.msra.mxu0 %v2814
        %2838 = vmatpush.msra.mxu0 %v2813
        %2839 = vmatpush.msra.mxu0 %v2812
        %2840 = vmatmul.f32.gmra.mxu0 %v2822
        %v2841 = vpop.f32.mrf.mxu0
        %v2842 = vadd.f32 %v2818, %v2841
        %2843 = vdwg.mxu0
        %v2844 = vadd.f32 %v2781, %v2842
        %v2845 = vsel %vm1795, %v2844, 0.0
        %2846 = vadd.xlane.f32.xlu0 %v2845
        %v2847 = vpop.xlane.xlu0 %2846
        %v2848 = vmul.f32 %v2847, %v2754
        %v2849 = vsub.f32 %v2844, %v2848
        %v2850 = vmul.f32 %v2849, %v2849
        %v2851 = vsel %vm1795, %v2850, 0.0
        %2852 = vadd.xlane.f32.xlu0 %v2851
        %v2853 = vpop.xlane.xlu0 %2852
        %v2854 = vmul.f32 %v2853, %v2754
        %v2855 = vadd.f32 %v2854, 1e-05
        %v2856 = vrsqrt.pop %v2855
        %v2857 = vmul.f32 %v2856, %v2855
        %v2858 = vmul.f32 %v2857, %v2856
        %v2859 = vmul.f32 0.5, %v2858
        %v2860 = vsub.f32 1.5, %v2859
        %v2861 = vmul.f32 %v2856, %v2860
        %vm2862 = vweird.f32 %v2855
        %vm2863 = vweird.f32 %v2856
        %vm2864 = vmor %vm2862, %vm2863
        %v2865 = vsel %vm2864, %v2856, %v2861
        %v2866 = vmul.f32 %v2849, %v2865
        %2867 = vrot.lane.b32.xlu0 %v2775, 96
        %v2868 = vpop.permute.xlu0 %2867
        %v2870 = vmul.f32 %v2866, %v2868
        %2871 = vrot.lane.b32.xlu0 %v2775, 80
        %v2872 = vpop.permute.xlu0 %2871
        %v2874 = vadd.f32 %v2870, %v2872
        %2875 = vst.msk [vmem:[%s1299] sm:$0xff] %vm1795, %v2874
        %v2876 = vmul.f32 %v1348, %v1600
        %v2877 = vmul.f32 %v1349, %v1605
        %v2878 = vmul.f32 %v1350, %v1610
        %v2879 = vmul.f32 %v1351, %v1615
        %v2880 = vmul.f32 %v1352, %v1620
        %v2881 = vmul.f32 %v1353, %v1625
        %v2882 = vmul.f32 %v1354, %v1630
        %v2883 = vmul.f32 %v1355, %v1635
        %v2884 = vld [vmem:[#allocation6] sm:$0x1]
        %v2885 = vsel %vm1531, %v2876, 0.0
        %v2886 = vsel %vm1531, %v2877, 0.0
        %v2887 = vadd.f32 %v2885, %v2886
        %v2888 = vsel %vm1531, %v2878, 0.0
        %v2889 = vadd.f32 %v2887, %v2888
        %v2890 = vsel %vm1531, %v2879, 0.0
        %v2891 = vadd.f32 %v2889, %v2890
        %v2892 = vsel %vm1531, %v2880, 0.0
        %v2893 = vadd.f32 %v2891, %v2892
        %v2894 = vsel %vm1531, %v2881, 0.0
        %v2895 = vadd.f32 %v2893, %v2894
        %v2896 = vsel %vm1531, %v2882, 0.0
        %v2897 = vadd.f32 %v2895, %v2896
        %v2898 = vsel %vm1531, %v2883, 0.0
        %v2899 = vadd.f32 %v2897, %v2898
        %v2900 = vrot.slane %v2899, 4
        %v2901 = vadd.f32 %v2899, %v2900
        %v2902 = vrot.slane %v2901, 2
        %v2903 = vadd.f32 %v2901, %v2902
        %v2904 = vrot.slane %v2903, 1
        %v2905 = vadd.f32 %v2903, %v2904
        %v2906 = vadd.f32 %v2884, %v2905
        %vm2907 = vcmask 57344
        %2908 = vst.msk [vmem:[#allocation6] sm:$0x1] %vm2907, %v2906
        %v2909 = vld [vmem:[#allocation7] sm:$0x1]
        %v2910 = vmul.f32 %v1348, %v2876
        %v2911 = vmul.f32 %v1349, %v2877
        %v2912 = vmul.f32 %v1350, %v2878
        %v2913 = vmul.f32 %v1351, %v2879
        %v2914 = vmul.f32 %v1352, %v2880
        %v2915 = vmul.f32 %v1353, %v2881
        %v2916 = vmul.f32 %v1354, %v2882
        %v2917 = vmul.f32 %v1355, %v2883
        %v2918 = vsel %vm1531, %v2910, 0.0
        %v2919 = vsel %vm1531, %v2911, 0.0
        %v2920 = vadd.f32 %v2918, %v2919
        %v2921 = vsel %vm1531, %v2912, 0.0
        %v2922 = vadd.f32 %v2920, %v2921
        %v2923 = vsel %vm1531, %v2913, 0.0
        %v2924 = vadd.f32 %v2922, %v2923
        %v2925 = vsel %vm1531, %v2914, 0.0
        %v2926 = vadd.f32 %v2924, %v2925
        %v2927 = vsel %vm1531, %v2915, 0.0
        %v2928 = vadd.f32 %v2926, %v2927
        %v2929 = vsel %vm1531, %v2916, 0.0
        %v2930 = vadd.f32 %v2928, %v2929
        %v2931 = vsel %vm1531, %v2917, 0.0
        %v2932 = vadd.f32 %v2930, %v2931
        %v2933 = vrot.slane %v2932, 4
        %v2934 = vadd.f32 %v2932, %v2933
        %v2935 = vrot.slane %v2934, 2
        %v2936 = vadd.f32 %v2934, %v2935
        %v2937 = vrot.slane %v2936, 1
        %v2938 = vadd.f32 %v2936, %v2937
        %v2939 = vadd.f32 %v2909, %v2938
        %2940 = vst.msk [vmem:[#allocation7] sm:$0x1] %vm2907, %v2939
        %v2941 = vld [vmem:[#allocation8] sm:$0x1]
        %v2942 = vmul.f32 %v1486, 100000.0
        %v2943 = vmul.f32 %v1487, 100000.0
        %v2944 = vmul.f32 %v1488, 100000.0
        %v2945 = vmul.f32 %v1489, 100000.0
        %v2946 = vmul.f32 %v1490, 100000.0
        %v2947 = vmul.f32 %v1491, 100000.0
        %v2948 = vmul.f32 %v1492, 100000.0
        %v2949 = vmul.f32 %v1493, 100000.0
        %2951 = vset.pattern.permute.xlu0 0
        %2952 = vperm.xlu0 %2951, %v2942
        %v2953 = vpop.permute.xlu0 %2952
        %2956 = vset.pattern.permute.xlu0 0
        %2957 = vperm.xlu0 %2956, %v2943
        %v2958 = vpop.permute.xlu0 %2957
        %2961 = vset.pattern.permute.xlu0 0
        %2962 = vperm.xlu0 %2961, %v2944
        %v2963 = vpop.permute.xlu0 %2962
        %2966 = vset.pattern.permute.xlu0 0
        %2967 = vperm.xlu0 %2966, %v2945
        %v2968 = vpop.permute.xlu0 %2967
        %2971 = vset.pattern.permute.xlu0 0
        %2972 = vperm.xlu0 %2971, %v2946
        %v2973 = vpop.permute.xlu0 %2972
        %2976 = vset.pattern.permute.xlu0 0
        %2977 = vperm.xlu0 %2976, %v2947
        %v2978 = vpop.permute.xlu0 %2977
        %2981 = vset.pattern.permute.xlu0 0
        %2982 = vperm.xlu0 %2981, %v2948
        %v2983 = vpop.permute.xlu0 %2982
        %2986 = vset.pattern.permute.xlu0 0
        %2987 = vperm.xlu0 %2986, %v2949
        %v2988 = vpop.permute.xlu0 %2987
        %v2990 = vadd.f32 %v1348, %v2953
        %v2991 = vadd.f32 %v1349, %v2958
        %v2992 = vadd.f32 %v1350, %v2963
        %v2993 = vadd.f32 %v1351, %v2968
        %v2994 = vadd.f32 %v1352, %v2973
        %v2995 = vadd.f32 %v1353, %v2978
        %v2996 = vadd.f32 %v1354, %v2983
        %v2997 = vadd.f32 %v1355, %v2988
        %v2998 = vsel %vm1531, %v2990, inf
        %v2999 = vsel %vm1531, %v2991, inf
        %v3000 = vsel %vm1531, %v2992, inf
        %v3001 = vsel %vm1531, %v2993, inf
        %v3002 = vsel %vm1531, %v2994, inf
        %v3003 = vmin.f32 %v2998, %v3002
        %v3004 = vsel %vm1531, %v2995, inf
        %v3005 = vmin.f32 %v2999, %v3004
        %v3006 = vsel %vm1531, %v2996, inf
        %v3007 = vmin.f32 %v3000, %v3006
        %v3008 = vsel %vm1531, %v2997, inf
        %v3009 = vmin.f32 %v3001, %v3008
        %v3010 = vmin.f32 %v3003, %v3005
        %v3011 = vmin.f32 %v3007, %v3009
        %v3012 = vmin.f32 %v3010, %v3011
        %v3013 = vrot.slane %v3012, 4
        %v3014 = vmin.f32 %v3012, %v3013
        %v3015 = vrot.slane %v3014, 2
        %v3016 = vmin.f32 %v3014, %v3015
        %v3017 = vrot.slane %v3016, 1
        %v3018 = vmin.f32 %v3016, %v3017
        %v3019 = vmin.f32 %v2941, %v3018
        %3020 = vst.msk [vmem:[#allocation8] sm:$0x1] %vm2907, %v3019
        %v3021 = vld [vmem:[#allocation9] sm:$0x1]
        %v3022 = vsub.f32 %v1348, %v2953
        %v3023 = vsub.f32 %v1349, %v2958
        %v3024 = vsub.f32 %v1350, %v2963
        %v3025 = vsub.f32 %v1351, %v2968
        %v3026 = vsub.f32 %v1352, %v2973
        %v3027 = vsub.f32 %v1353, %v2978
        %v3028 = vsub.f32 %v1354, %v2983
        %v3029 = vsub.f32 %v1355, %v2988
        %v3030 = vsel %vm1531, %v3022, -inf
        %v3031 = vsel %vm1531, %v3023, -inf
        %v3032 = vsel %vm1531, %v3024, -inf
        %v3033 = vsel %vm1531, %v3025, -inf
        %v3034 = vsel %vm1531, %v3026, -inf
        %v3035 = vmax.f32 %v3030, %v3034
        %v3036 = vsel %vm1531, %v3027, -inf
        %v3037 = vmax.f32 %v3031, %v3036
        %v3038 = vsel %vm1531, %v3028, -inf
        %v3039 = vmax.f32 %v3032, %v3038
        %v3040 = vsel %vm1531, %v3029, -inf
        %v3041 = vmax.f32 %v3033, %v3040
        %v3042 = vmax.f32 %v3035, %v3037
        %v3043 = vmax.f32 %v3039, %v3041
        %v3044 = vmax.f32 %v3042, %v3043
        %v3045 = vrot.slane %v3044, 4
        %v3046 = vmax.f32 %v3044, %v3045
        %v3047 = vrot.slane %v3046, 2
        %v3048 = vmax.f32 %v3046, %v3047
        %v3049 = vrot.slane %v3048, 1
        %v3050 = vmax.f32 %v3048, %v3049
        %v3051 = vmax.f32 %v3021, %v3050
        %3052 = vst.msk [vmem:[#allocation9] sm:$0x1] %vm2907, %v3051
        %v3053 = vld [vmem:[#allocation10] sm:$0x1]
        %vm3054 = vcmask 7168
        %v3055 = vsel %vm3054, %v1478, 0.0
        %v3056 = vsel %vm3054, %v1479, 0.0
        %v3057 = vadd.f32 %v3055, %v3056
        %v3058 = vsel %vm3054, %v1480, 0.0
        %v3059 = vadd.f32 %v3057, %v3058
        %v3060 = vsel %vm3054, %v1481, 0.0
        %v3061 = vadd.f32 %v3059, %v3060
        %v3062 = vsel %vm3054, %v1482, 0.0
        %v3063 = vadd.f32 %v3061, %v3062
        %v3064 = vsel %vm3054, %v1483, 0.0
        %v3065 = vadd.f32 %v3063, %v3064
        %v3066 = vsel %vm3054, %v1484, 0.0
        %v3067 = vadd.f32 %v3065, %v3066
        %v3068 = vsel %vm3054, %v1485, 0.0
        %v3069 = vadd.f32 %v3067, %v3068
        %3070 = vadd.xlane.f32.xlu0 %v3069
        %v3071 = vpop.xlane.xlu0 %3070
        %v3072 = vrot.slane %v3071, 4
        %v3073 = vadd.f32 %v3071, %v3072
        %v3074 = vrot.slane %v3073, 2
        %v3075 = vadd.f32 %v3073, %v3074
        %v3076 = vrot.slane %v3075, 1
        %v3077 = vadd.f32 %v3075, %v3076
        %s3078 = vtos %v3077
        %v3079 = vstv %s3078
        %v3080 = vadd.f32 %v3053, %v3079
        %vm3081 = vcmask 0
        %3082 = vst.msk [vmem:[#allocation10] sm:$0x1] %vm3081, %v3080
        // Predicated region
        $region181: #{tpu_custom_call.1} parent=175 // pred_check
          %p3083 = pneg %p1358
        $region182: #{tpu_custom_call.1} parent=175 // pred_check_branch
          %3085 = sbr.rel (%p3083) target = $region184
        $region183: #{tpu_custom_call.1} parent=175 // pred_region
          %v3086 = vld [vmem:[%s1320] sm:$0xff]
          %v3087 = vld [vmem:[%s29] sm:$0xff]
          %v3088 = vld [vmem:[%s31] sm:$0x1]
          %v3090 = vsel %vm1531, %v1356, 0
          %3092 = vmatpush.msra.mxu0 0.0
          %3093 = vmatpush.msra.mxu0 0.0
          %3094 = vmatpush.msra.mxu0 0.0
          %3095 = vmatpush.msra.mxu0 0.0
          %3096 = vmatpush.msra.mxu0 0.0
          %3097 = vmatpush.msra.mxu0 0.0
          %3098 = vmatpush.msra.mxu0 0.0
          %3099 = vmatpush.msra.mxu0 0.0
          %3100 = vmatpush.msra.mxu0 0.0
          %3101 = vmatpush.msra.mxu0 0.0
          %3102 = vmatpush.msra.mxu0 0.0
          %3103 = vmatpush.msra.mxu0 0.0
          %3104 = vmatpush.msra.mxu0 0.0
          %3105 = vmatpush.msra.mxu0 0.0
          %3106 = vmatpush.msra.mxu0 0.0
          %3107 = vmatpush.msra.mxu0 %v3087
          %3108 = vmatmul.f32.gmra.mxu0 %v3090
          %v3109 = vpop.f32.mrf.mxu0
          %v3110 = vadd.f32 %v3088, %v3109
          %3111 = vdwg.mxu0
          %v3112 = vsel %vm3054, %v1357, 0.0
          %v3113 = vrot.slane %v3112, 4
          %v3114 = vadd.f32 %v3112, %v3113
          %v3115 = vrot.slane %v3114, 2
          %v3116 = vadd.f32 %v3114, %v3115
          %v3117 = vrot.slane %v3116, 1
          %v3118 = vadd.f32 %v3116, %v3117
          %v3119 = vrcp.pop %v3118
          %v3120 = vmul.f32 %v3118, %v3119
          %v3121 = vsub.f32 1.0, %v3120
          %v3122 = vmul.f32 %v3119, %v3121
          %v3123 = vadd.f32 %v3119, %v3122
          %vm3124 = vweird.f32 %v3118
          %vm3125 = vweird.f32 %v3119
          %vm3126 = vmor %vm3124, %vm3125
          %v3127 = vsel %vm3126, %v3119, %v3123
          %v3128 = vand.u32 2147483647, %v3118
          %vm3129 = vcmp.eq.f32.partialorder %v3128, 8.507059e+37
          %v3130 = vand.u32 %v3118, 2147483648
          %v3131 = vor.u32 1.1754944e-38, %v3130
          %v3132 = vsel %vm3129, %v3131, %v3127
          %v3133 = vsub.f32 1.0, %v1357
          %3135 = vset.pattern.permute.xlu0 0
          %3136 = vperm.xlu0 %3135, %v1357
          %v3137 = vpop.permute.xlu0 %3136
          %v3139 = vmul.f32 %v3086, %v3137
          %v3140 = vsel %vm1795, %v3139, 0.0
          %v3141 = vrot.slane %v3140, 4
          %v3142 = vadd.f32 %v3140, %v3141
          %v3143 = vrot.slane %v3142, 2
          %v3144 = vadd.f32 %v3142, %v3143
          %v3145 = vrot.slane %v3144, 1
          %v3146 = vadd.f32 %v3144, %v3145
          %3148 = vset.pattern.permute.xlu0 0
          %3149 = vperm.xlu0 %3148, %v3132
          %v3150 = vpop.permute.xlu0 %3149
          %v3152 = vmul.f32 %v3146, %v3150
          %v3153 = vmul.f32 %v3133, 100000.0
          %3155 = vset.pattern.permute.xlu0 0
          %3156 = vperm.xlu0 %3155, %v3153
          %v3157 = vpop.permute.xlu0 %3156
          %v3159 = vadd.f32 %v3086, %v3157
          %v3160 = vsel %vm1795, %v3159, inf
          %v3161 = vrot.slane %v3160, 4
          %v3162 = vmin.f32 %v3160, %v3161
          %v3163 = vrot.slane %v3162, 2
          %v3164 = vmin.f32 %v3162, %v3163
          %v3165 = vrot.slane %v3164, 1
          %v3166 = vmin.f32 %v3164, %v3165
          %v3167 = vsub.f32 %v3086, %v3157
          %v3168 = vsel %vm1795, %v3167, -inf
          %v3169 = vrot.slane %v3168, 4
          %v3170 = vmax.f32 %v3168, %v3169
          %v3171 = vrot.slane %v3170, 2
          %v3172 = vmax.f32 %v3170, %v3171
          %v3173 = vrot.slane %v3172, 1
          %v3174 = vmax.f32 %v3172, %v3173
          %v3175 = vsub.f32 %v3086, %v3152
          %v3176 = vmul.f32 %v3175, %v3175
          %v3177 = vmul.f32 %v3176, %v3137
          %v3178 = vsel %vm1795, %v3177, 0.0
          %v3179 = vrot.slane %v3178, 4
          %v3180 = vadd.f32 %v3178, %v3179
          %v3181 = vrot.slane %v3180, 2
          %v3182 = vadd.f32 %v3180, %v3181
          %v3183 = vrot.slane %v3182, 1
          %v3184 = vadd.f32 %v3182, %v3183
          %v3185 = vmul.f32 %v3184, %v3150
          %3187 = vrot.lane.b32.xlu0 %v3166, 16
          %v3188 = vpop.permute.xlu0 %3187
          %3191 = vrot.lane.b32.xlu0 %v3174, 32
          %v3192 = vpop.permute.xlu0 %3191
          %3195 = vrot.lane.b32.xlu0 %v3185, 48
          %v3196 = vpop.permute.xlu0 %3195
          %v3198 = vsel %vm1795, %v3152, %v3188
          %v3199 = vsel %vm2820, %v3198, %v3192
          %vm3200 = vcmask 392192
          %v3201 = vsel %vm3200, %v3199, %v3196
          %v3202 = vld [vmem:[%s33] sm:$0xff]
          %v3203 = vld [vmem:[%s33 + $0x8] sm:$0xff]
          %v3204 = vld [vmem:[%s33 + $0x10] sm:$0xff]
          %v3205 = vld [vmem:[%s33 + $0x18] sm:$0xff]
          %v3206 = vld [vmem:[%s33 + $0x20] sm:$0xff]
          %v3207 = vld [vmem:[%s33 + $0x28] sm:$0xff]
          %v3208 = vld [vmem:[%s33 + $0x30] sm:$0xff]
          %v3209 = vld [vmem:[%s33 + $0x38] sm:$0xff]
          %v3210 = vld [vmem:[%s35] sm:$0x1]
          %vm3211 = vcmask 523264
          %v3213 = vsel %vm3211, %v3201, 0
          %3215 = vmatpush.msra.mxu0 0.0
          %3216 = vmatpush.msra.mxu0 0.0
          %3217 = vmatpush.msra.mxu0 0.0
          %3218 = vmatpush.msra.mxu0 0.0
          %3219 = vmatpush.msra.mxu0 0.0
          %3220 = vmatpush.msra.mxu0 0.0
          %3221 = vmatpush.msra.mxu0 0.0
          %3222 = vmatpush.msra.mxu0 0.0
          %3223 = vmatpush.msra.mxu0 %v3209
          %3224 = vmatpush.msra.mxu0 %v3208
          %3225 = vmatpush.msra.mxu0 %v3207
          %3226 = vmatpush.msra.mxu0 %v3206
          %3227 = vmatpush.msra.mxu0 %v3205
          %3228 = vmatpush.msra.mxu0 %v3204
          %3229 = vmatpush.msra.mxu0 %v3203
          %3230 = vmatpush.msra.mxu0 %v3202
          %3231 = vmatmul.f32.gmra.mxu0 %v3213
          %v3232 = vpop.f32.mrf.mxu0
          %v3233 = vadd.f32 %v3210, %v3232
          %3234 = vdwg.mxu0
          %v3235 = vld [vmem:[#allocation10] sm:$0x1]
          %v3236 = vrcp.pop %v3235
          %v3237 = vmul.f32 %v3235, %v3236
          %v3238 = vsub.f32 1.0, %v3237
          %v3239 = vmul.f32 %v3236, %v3238
          %v3240 = vadd.f32 %v3236, %v3239
          %vm3241 = vweird.f32 %v3235
          %vm3242 = vweird.f32 %v3236
          %vm3243 = vmor %vm3241, %vm3242
          %v3244 = vsel %vm3243, %v3236, %v3240
          %v3245 = vand.u32 2147483647, %v3235
          %vm3246 = vcmp.eq.f32.partialorder %v3245, 8.507059e+37
          %v3247 = vand.u32 %v3235, 2147483648
          %v3248 = vor.u32 1.1754944e-38, %v3247
          %v3249 = vsel %vm3246, %v3248, %v3244
          %v3250 = vld [vmem:[#allocation6] sm:$0x1]
          %3252 = vset.pattern.permute.xlu0 0
          %3253 = vperm.xlu0 %3252, %v3249
          %v3254 = vpop.permute.xlu0 %3253
          %v3256 = vperm.slane %v3254, 0
          %v3257 = vmul.f32 %v3250, %v3256
          %v3258 = vld [vmem:[#allocation7] sm:$0x1]
          %v3259 = vmul.f32 %v3257, 2.0
          %v3260 = vmul.f32 %v3259, %v3250
          %v3261 = vsub.f32 %v3258, %v3260
          %v3262 = vmul.f32 %v3261, %v3256
          %v3263 = vmul.f32 %v3257, %v3257
          %v3264 = vadd.f32 %v3262, %v3263
          %v3265 = vld [vmem:[#allocation8] sm:$0x1]
          %v3266 = vld [vmem:[#allocation9] sm:$0x1]
          %v3268 = vperm.slane %v3265, 0
          %3269 = vrot.lane.b32.xlu0 %v3268, 8
          %v3270 = vpop.permute.xlu0 %3269
          %v3273 = vperm.slane %v3266, 0
          %3274 = vrot.lane.b32.xlu0 %v3273, 16
          %v3275 = vpop.permute.xlu0 %3274
          %v3278 = vperm.slane %v3264, 0
          %3279 = vrot.lane.b32.xlu0 %v3278, 24
          %v3280 = vpop.permute.xlu0 %3279
          %v3282 = vsel %vm1531, %v3257, %v3270
          %v3283 = vsel %vm1795, %v3282, %v3275
          %vm3284 = vcmask 195584
          %v3285 = vsel %vm3284, %v3283, %v3280
          %v3286 = vld [vmem:[%s37] sm:$0xff]
          %v3287 = vld [vmem:[%s37 + $0x8] sm:$0xff]
          %v3288 = vld [vmem:[%s37 + $0x10] sm:$0xff]
          %v3289 = vld [vmem:[%s37 + $0x18] sm:$0xff]
          %v3290 = vld [vmem:[%s39] sm:$0x1]
          %v3292 = vsel %vm2820, %v3285, 0
          %3294 = vmatpush.msra.mxu0 0.0
          %3295 = vmatpush.msra.mxu0 0.0
          %3296 = vmatpush.msra.mxu0 0.0
          %3297 = vmatpush.msra.mxu0 0.0
          %3298 = vmatpush.msra.mxu0 0.0
          %3299 = vmatpush.msra.mxu0 0.0
          %3300 = vmatpush.msra.mxu0 0.0
          %3301 = vmatpush.msra.mxu0 0.0
          %3302 = vmatpush.msra.mxu0 0.0
          %3303 = vmatpush.msra.mxu0 0.0
          %3304 = vmatpush.msra.mxu0 0.0
          %3305 = vmatpush.msra.mxu0 0.0
          %3306 = vmatpush.msra.mxu0 %v3289
          %3307 = vmatpush.msra.mxu0 %v3288
          %3308 = vmatpush.msra.mxu0 %v3287
          %3309 = vmatpush.msra.mxu0 %v3286
          %3310 = vmatmul.f32.gmra.mxu0 %v3292
          %v3311 = vpop.f32.mrf.mxu0
          %v3312 = vadd.f32 %v3290, %v3311
          %3313 = vdwg.mxu0
          %v3314 = vadd.f32 %v3110, %v3233
          %v3315 = vadd.f32 %v3314, %v3312
          %v3316 = vld [vmem:[%s41] sm:$0xff]
          %v3317 = vld [vmem:[%s43] sm:$0x1]
          %v3319 = vsel %vm1531, %v3315, 0
          %3321 = vmatpush.msra.mxu0 0.0
          %3322 = vmatpush.msra.mxu0 0.0
          %3323 = vmatpush.msra.mxu0 0.0
          %3324 = vmatpush.msra.mxu0 0.0
          %3325 = vmatpush.msra.mxu0 0.0
          %3326 = vmatpush.msra.mxu0 0.0
          %3327 = vmatpush.msra.mxu0 0.0
          %3328 = vmatpush.msra.mxu0 0.0
          %3329 = vmatpush.msra.mxu0 0.0
          %3330 = vmatpush.msra.mxu0 0.0
          %3331 = vmatpush.msra.mxu0 0.0
          %3332 = vmatpush.msra.mxu0 0.0
          %3333 = vmatpush.msra.mxu0 0.0
          %3334 = vmatpush.msra.mxu0 0.0
          %3335 = vmatpush.msra.mxu0 0.0
          %3336 = vmatpush.msra.mxu0 %v3316
          %3337 = vmatmul.f32.gmra.mxu0 %v3319
          %v3338 = vpop.f32.mrf.mxu0
          %v3339 = vadd.f32 %v3317, %v3338
          %3340 = vdwg.mxu0
          %v3341 = vmax.f32 %v3339, 0.0
          %v3342 = vld [vmem:[%s45] sm:$0xff]
          %v3343 = vld [vmem:[%s47] sm:$0x1]
          %v3345 = vsel %vm1531, %v3341, 0
          %3347 = vmatpush.msra.mxu0 0.0
          %3348 = vmatpush.msra.mxu0 0.0
          %3349 = vmatpush.msra.mxu0 0.0
          %3350 = vmatpush.msra.mxu0 0.0
          %3351 = vmatpush.msra.mxu0 0.0
          %3352 = vmatpush.msra.mxu0 0.0
          %3353 = vmatpush.msra.mxu0 0.0
          %3354 = vmatpush.msra.mxu0 0.0
          %3355 = vmatpush.msra.mxu0 0.0
          %3356 = vmatpush.msra.mxu0 0.0
          %3357 = vmatpush.msra.mxu0 0.0
          %3358 = vmatpush.msra.mxu0 0.0
          %3359 = vmatpush.msra.mxu0 0.0
          %3360 = vmatpush.msra.mxu0 0.0
          %3361 = vmatpush.msra.mxu0 0.0
          %3362 = vmatpush.msra.mxu0 %v3342
          %3363 = vmatmul.f32.gmra.mxu0 %v3345
          %v3364 = vpop.f32.mrf.mxu0
          %v3365 = vadd.f32 %v3343, %v3364
          %3366 = vdwg.mxu0
          %v3367 = vld [vmem:[%s77] sm:$0x1]
          %v3368 = vadd.f32 %v1356, %v3365
          %v3369 = vsel %vm2907, %v3368, 0.0
          %3370 = vadd.xlane.f32.xlu0 %v3369
          %v3371 = vpop.xlane.xlu0 %3370
          %v3372 = vmul.f32 %v3371, %v1908
          %v3373 = vsub.f32 %v3368, %v3372
          %v3374 = vmul.f32 %v3373, %v3373
          %v3375 = vsel %vm2907, %v3374, 0.0
          %3376 = vadd.xlane.f32.xlu0 %v3375
          %v3377 = vpop.xlane.xlu0 %3376
          %v3378 = vmul.f32 %v3377, %v1908
          %v3379 = vadd.f32 %v3378, 1e-05
          %v3380 = vrsqrt.pop %v3379
          %v3381 = vmul.f32 %v3380, %v3379
          %v3382 = vmul.f32 %v3381, %v3380
          %v3383 = vmul.f32 0.5, %v3382
          %v3384 = vsub.f32 1.5, %v3383
          %v3385 = vmul.f32 %v3380, %v3384
          %vm3386 = vweird.f32 %v3379
          %vm3387 = vweird.f32 %v3380
          %vm3388 = vmor %vm3386, %vm3387
          %v3389 = vsel %vm3388, %v3380, %v3385
          %v3390 = vmul.f32 %v3373, %v3389
          %v3391 = vmul.f32 %v3390, %v3367
          %3393 = vrot.lane.b32.xlu0 %v3367, 120
          %v3394 = vpop.permute.xlu0 %3393
          %v3396 = vadd.f32 %v3391, %v3394
          %v3397 = vld [vmem:[%s69] sm:$0xff]
          %v3398 = vld [vmem:[%s71] sm:$0x1]
          %v3400 = vsel %vm1531, %v3396, 0
          %3402 = vmatpush.msra.mxu0 0.0
          %3403 = vmatpush.msra.mxu0 0.0
          %3404 = vmatpush.msra.mxu0 0.0
          %3405 = vmatpush.msra.mxu0 0.0
          %3406 = vmatpush.msra.mxu0 0.0
          %3407 = vmatpush.msra.mxu0 0.0
          %3408 = vmatpush.msra.mxu0 0.0
          %3409 = vmatpush.msra.mxu0 0.0
          %3410 = vmatpush.msra.mxu0 0.0
          %3411 = vmatpush.msra.mxu0 0.0
          %3412 = vmatpush.msra.mxu0 0.0
          %3413 = vmatpush.msra.mxu0 0.0
          %3414 = vmatpush.msra.mxu0 0.0
          %3415 = vmatpush.msra.mxu0 0.0
          %3416 = vmatpush.msra.mxu0 0.0
          %3417 = vmatpush.msra.mxu0 %v3397
          %3418 = vmatmul.f32.gmra.mxu0 %v3400
          %v3419 = vpop.f32.mrf.mxu0
          %v3420 = vadd.f32 %v3398, %v3419
          %3421 = vdwg.mxu0
          %v3422 = vmax.f32 %v3420, 0.0
          %v3423 = vld [vmem:[%s73] sm:$0xff]
          %v3424 = vld [vmem:[%s73 + $0x8] sm:$0xff]
          %v3425 = vld [vmem:[%s73 + $0x10] sm:$0xff]
          %v3426 = vld [vmem:[%s73 + $0x18] sm:$0xff]
          %v3427 = vld [vmem:[%s75] sm:$0x1]
          %v3429 = vsel %vm2820, %v3422, 0
          %3431 = vmatpush.msra.mxu0 0.0
          %3432 = vmatpush.msra.mxu0 0.0
          %3433 = vmatpush.msra.mxu0 0.0
          %3434 = vmatpush.msra.mxu0 0.0
          %3435 = vmatpush.msra.mxu0 0.0
          %3436 = vmatpush.msra.mxu0 0.0
          %3437 = vmatpush.msra.mxu0 0.0
          %3438 = vmatpush.msra.mxu0 0.0
          %3439 = vmatpush.msra.mxu0 0.0
          %3440 = vmatpush.msra.mxu0 0.0
          %3441 = vmatpush.msra.mxu0 0.0
          %3442 = vmatpush.msra.mxu0 0.0
          %3443 = vmatpush.msra.mxu0 %v3426
          %3444 = vmatpush.msra.mxu0 %v3425
          %3445 = vmatpush.msra.mxu0 %v3424
          %3446 = vmatpush.msra.mxu0 %v3423
          %3447 = vmatmul.f32.gmra.mxu0 %v3429
          %v3448 = vpop.f32.mrf.mxu0
          %v3449 = vadd.f32 %v3427, %v3448
          %3450 = vdwg.mxu0
          %v3451 = vadd.f32 %v3396, %v3449
          %v3452 = vsel %vm2907, %v3451, 0.0
          %3453 = vadd.xlane.f32.xlu0 %v3452
          %v3454 = vpop.xlane.xlu0 %3453
          %v3455 = vmul.f32 %v3454, %v1908
          %v3456 = vsub.f32 %v3451, %v3455
          %v3457 = vmul.f32 %v3456, %v3456
          %v3458 = vsel %vm2907, %v3457, 0.0
          %3459 = vadd.xlane.f32.xlu0 %v3458
          %v3460 = vpop.xlane.xlu0 %3459
          %v3461 = vmul.f32 %v3460, %v1908
          %v3462 = vadd.f32 %v3461, 1e-05
          %v3463 = vrsqrt.pop %v3462
          %v3464 = vmul.f32 %v3463, %v3462
          %v3465 = vmul.f32 %v3464, %v3463
          %v3466 = vmul.f32 0.5, %v3465
          %v3467 = vsub.f32 1.5, %v3466
          %v3468 = vmul.f32 %v3463, %v3467
          %vm3469 = vweird.f32 %v3462
          %vm3470 = vweird.f32 %v3463
          %vm3471 = vmor %vm3469, %vm3470
          %v3472 = vsel %vm3471, %v3463, %v3468
          %v3473 = vmul.f32 %v3456, %v3472
          %3474 = vrot.lane.b32.xlu0 %v3367, 112
          %v3475 = vpop.permute.xlu0 %3474
          %v3477 = vmul.f32 %v3473, %v3475
          %3478 = vrot.lane.b32.xlu0 %v3367, 104
          %v3479 = vpop.permute.xlu0 %3478
          %v3481 = vadd.f32 %v3477, %v3479
          %3482 = vst.msk [vmem:[%s1316] sm:$0x1] %vm2907, %v3481
        $region184: #{tpu_custom_call.1} parent=175 // pred_fallthru
          _
        %s3483 = sand.u32 %s964, 1
        %s3484 = scalar_lea.sflag [#allocation12], %s3483
        %s3485 = sand.u32 %s964, 1
        %s3486 = smul.addr %s3485, 8
        %s3487 = scalar_lea.vmem [#allocation11], %s3486
        %s3488 = smul.u32 8, %s106
        %p3489 = scmp.lt.s32.totalorder %s105, 1
        %s3490 = scalar_select %p3489, %s105, 1
        %p3491 = scmp.lt.s32.totalorder %s3488, 7
        %s3492 = scalar_select %p3491, %s3488, 7
        %s3493 = smul.addr %s3490, 8
        %s3494 = sadd.s32 %s3492, %s3493
        %s3495 = smul.addr %s3494, 8
        %s3496 = scalar_lea.vmem %s81, %s3495
        %s3497 = sand.u32 %s1018, 1
        %s3498 = scalar_lea.sflag [#allocation14], %s3497
        %s3499 = sand.u32 %s1018, 1
        %s3500 = scalar_lea.vmem [#allocation13], %s3499
        // Predicated region
        $region185: #{tpu_custom_call.1} parent=175 // pred_check
          %p3501 = pneg %p974
        $region186: #{tpu_custom_call.1} parent=175 // pred_check_branch
          %3503 = sbr.rel (%p3501) target = $region188
        $region187: #{tpu_custom_call.1} parent=175 // pred_region
          %3505 = vsyncadd %s3484, 0
          %s3506 = sadd.s32 %s106, %s105
          %s3507 = smul.addr %s3506, 8
          %s3508 = scalar_lea.hbm %s79, %s3507
          %s3510 = sshll.u32 %s3487, 4
          %s3511 = int_to_ptr.vmem [resolvable:$true] %s3510
          %s3512 = sshll.u32 %s3508, 4
          %s3513 = int_to_ptr.hbm [resolvable:$true] %s3512
          %3515 = dma.vmem_to_hbm [thread:$0]  %s3511, 128, %s3513, %s3484
        $region188: #{tpu_custom_call.1} parent=175 // pred_fallthru
          _
        // Predicated region
        $region189: #{tpu_custom_call.1} parent=175 // pred_check
          %p3516 = pneg %p1002
        $region190: #{tpu_custom_call.1} parent=175 // pred_check_branch
          %3518 = sbr.rel (%p3516) target = $region192
        $region191: #{tpu_custom_call.1} parent=175 // pred_region
          %s3519 = smul.u32 8, %s106
        $region192: #{tpu_custom_call.1} parent=175 // pred_fallthru
          _
        // Predicated region
        $region193: #{tpu_custom_call.1} parent=175 // pred_check
          %p3520 = pneg %p1028
        $region194: #{tpu_custom_call.1} parent=175 // pred_check_branch
          %3522 = sbr.rel (%p3520) target = $region196
        $region195: #{tpu_custom_call.1} parent=175 // pred_region
          %3524 = vsyncadd %s3498, 0
          %s3525 = scalar_lea.hbm %s83, %s105
          %s3527 = sshll.u32 %s3500, 4
          %s3528 = int_to_ptr.vmem [resolvable:$true] %s3527
          %s3529 = sshll.u32 %s3525, 4
          %s3530 = int_to_ptr.hbm [resolvable:$true] %s3529
          %3532 = dma.vmem_to_hbm [thread:$0]  %s3528, 16, %s3530, %s3498
        $region196: #{tpu_custom_call.1} parent=175 // pred_fallthru
          _
      $region176: #{tpu_custom_call.1} parent=5 // pred_fallthru
        _
      %p3533 = scmp.le.s32.totalorder 2, %s96
      // Predicated region
      $region197: #{tpu_custom_call.1} parent=5 // pred_check
        %p3534 = pneg %p3533
      $region198: #{tpu_custom_call.1} parent=5 // pred_check_branch
        %3536 = sbr.rel (%p3534) target = $region200
      $region199: #{tpu_custom_call.1} parent=5 // pred_region
        %s3537 = ssub.s32 %s96, 2
        // Predicated region
        $region201: #{tpu_custom_call.1} parent=199 // pred_check
          %p3538 = pneg %p980
        $region202: #{tpu_custom_call.1} parent=199 // pred_check_branch
          %3540 = sbr.rel (%p3538) target = $region204
        $region203: #{tpu_custom_call.1} parent=199 // pred_region
          %s3541 = sand.u32 %s965, 1
          %s3542 = scalar_lea.sflag [#allocation12], %s3541
          %s3543 = sand.u32 %s965, 1
          %s3544 = smul.addr %s3543, 8
          %s3545 = scalar_lea.vmem [#allocation11], %s3544
          %3547 = dma.done %s3542, 128
        $region204: #{tpu_custom_call.1} parent=199 // pred_fallthru
          _
        // Predicated region
        $region205: #{tpu_custom_call.1} parent=199 // pred_check
          %p3548 = pneg %p1008
        $region206: #{tpu_custom_call.1} parent=199 // pred_check_branch
          %3550 = sbr.rel (%p3548) target = $region208
        $region207: #{tpu_custom_call.1} parent=199 // pred_region
          %s3551 = smul.u32 8, %s108
          %p3552 = scmp.lt.s32.totalorder %s107, 1
          %s3553 = scalar_select %p3552, %s107, 1
          %p3554 = scmp.lt.s32.totalorder %s3551, 7
          %s3555 = scalar_select %p3554, %s3551, 7
          %s3556 = smul.addr %s3553, 8
          %s3557 = sadd.s32 %s3555, %s3556
          %s3558 = smul.addr %s3557, 8
          %s3559 = scalar_lea.vmem %s81, %s3558
        $region208: #{tpu_custom_call.1} parent=199 // pred_fallthru
          _
        // Predicated region
        $region209: #{tpu_custom_call.1} parent=199 // pred_check
          %p3560 = pneg %p1034
        $region210: #{tpu_custom_call.1} parent=199 // pred_check_branch
          %3562 = sbr.rel (%p3560) target = $region212
        $region211: #{tpu_custom_call.1} parent=199 // pred_region
          %s3563 = sand.u32 %s1019, 1
          %s3564 = scalar_lea.sflag [#allocation14], %s3563
          %s3565 = sand.u32 %s1019, 1
          %s3566 = scalar_lea.vmem [#allocation13], %s3565
          %3568 = dma.done %s3564, 16
        $region212: #{tpu_custom_call.1} parent=199 // pred_fallthru
          _
      $region200: #{tpu_custom_call.1} parent=5 // pred_fallthru
        _
    $region6: #{tpu_custom_call.1} parent=1 // loop_footer
      %s100 = sadd.s32 1, %s96
    $region7: #{tpu_custom_call.1} parent=1 // loop_footer_branch
      %95 = sbr.rel target = $region3
    $region8: #{tpu_custom_call.1} parent=1 // loop_exit
      _
    %3569 = vsyncpa [#allocation12], 1
    %s3570 = scalar_lea.sflag [#allocation12], 1
    %3571 = vsyncpa %s3570, 1
    %3572 = vsyncpa [#allocation14], 1
    %s3573 = scalar_lea.sflag [#allocation14], 1
    %3574 = vsyncpa %s3573, 1

</llo_original>
